<compile_context>
chip_gen: v7x
topology: tpu7x:2x2x1
jax: 0.10.0
libtpu: 0.0.40
codegen_flags: <defaults>
</compile_context>

<pallas_src>
import functools

import numpy as np
import jax
import jax.numpy as jnp
from jax import lax
from jax.experimental import pallas as pl
from jax.experimental.pallas import tpu as pltpu

TEMPERATURE = 0.07
# TODO(synk): the original module never defines self.base_temperature (its
# forward would raise AttributeError); 0.07 is the canonical SupCon value.
BASE_TEMPERATURE = 0.07
IGNORE_LABEL = -1
MAX_SAMPLES = 1024
MAX_VIEWS = 100


# ----------------------- Pallas kernel: _contrastive -----------------------
def _contrastive_kernel(row_lab_ref, row_w_ref, all_feat_ref, all_lab_ref,
                        out_ref, *, m_true):
    """One row-tile of the contrastive loss.

    row_lab_ref  : (tm, 1)   f32   labels of this tile's anchor rows
    row_w_ref    : (tm, 1)   f32   -(T/bT)/(M*n_pos) per row; 0 on padded rows
    all_feat_ref : (Mp, Dp)  bf16  full features * 1/sqrt(T), VMEM-resident
    all_lab_ref  : (1, Mp)   f32   full label row, VMEM-resident
    out_ref      : (1, 8, 128) f32 per-tile partial loss (broadcast scalar)
    """
    tm = row_lab_ref.shape[0]
    mp = all_feat_ref.shape[0]
    row0 = pl.multiple_of(pl.program_id(0) * tm, tm)

    # Anchor rows are a slice of the resident matrix (single feature stream).
    # Both MXU operands already carry 1/sqrt(T), so F F^T == logits / T.
    f_rows = all_feat_ref[pl.ds(row0, tm), :]                        # (tm, Dp)
    logits = lax.dot_general(
        f_rows, all_feat_ref[...], (((1,), (1,)), ((), ())),
        preferred_element_type=jnp.float32)                          # (tm, mp)

    row_lab = row_lab_ref[...]                                       # (tm, 1)
    col_lab = all_lab_ref[...]                                       # (1, mp)
    same = row_lab == col_lab                                        # (tm, mp)

    col_idx = lax.broadcasted_iota(jnp.int32, (1, mp), 1)            # (1, mp)
    row_idx = lax.broadcasted_iota(jnp.int32, (tm, 1), 0) + row0     # (tm, 1)
    col_valid = col_idx < m_true                                     # (1, mp)

    # Row max needs no column mask: each real row's diagonal (||f||^2/T >= 0)
    # is a valid column, and padded zero-feature columns contribute exactly 0
    # <= that diagonal; padded rows get weight 0 anyway.  (detach() is a no-op.)
    row_max = jnp.max(logits, axis=1, keepdims=True)                 # (tm, 1)
    shifted = logits - row_max
    exp_shifted = jnp.exp(shifted)

    # Negatives: different label AND a real column (padded columns would add
    # spurious exp(-row_max) mass otherwise).
    neg = jnp.logical_and(jnp.logical_not(same), col_valid)
    neg_sum = jnp.sum(jnp.where(neg, exp_shifted, 0.0),
                      axis=1, keepdims=True)                         # (tm, 1)

    log_prob = shifted - jnp.log(exp_shifted + neg_sum)              # (tm, mp)

    # Positives: same label, off-diagonal.  Padded rows/cols carry distinct
    # label sentinels (-2 / -1) so they never match anything -> no extra
    # column-validity mask needed here.
    pos = jnp.logical_and(same, row_idx != col_idx)
    pos_sum = jnp.sum(jnp.where(pos, log_prob, 0.0),
                      axis=1, keepdims=True)                         # (tm, 1)

    # row_w folds -(T/base_T) / (M * n_pos) (with the zero-positive guard) and
    # is exactly 0 for padded rows: no division or row mask in the kernel.
    tile_sum = jnp.sum(pos_sum * row_w_ref[...])
    out_ref[...] = jnp.broadcast_to(tile_sum, out_ref.shape)


def _round_up(x, m):
    return ((x + m - 1) // m) * m


def _pick_tm(mp):
    """Largest row tile <= 512 dividing Mp while keeping >= 2 grid steps (so a
    megacore chip can split the grid); single tile only when Mp == 128."""
    for tm in (512, 256, 128):
        if mp % tm == 0 and mp // tm >= 2:
            return tm
    return 128


def contrastive_pallas(anchor_feature, labels_vec):
    """anchor_feature: (M, D) f32, labels_vec: (M,) f32 -> scalar loss."""
    M, D = anchor_feature.shape
    Dp = _round_up(max(D, 1), 128)           # lane-dense contraction dim
    Mp = _round_up(max(M, 1), 128)           # lane-dense logits row length
    tm = _pick_tm(Mp)
    num_tiles = Mp // tm

    # Single bf16 cast here (not per grid step); 1/temperature folded in as
    # 1/sqrt(T) on both MXU operands, so the kernel never scales the logits.
    scaled = anchor_feature * np.float32(1.0 / np.sqrt(TEMPERATURE))
    feats_p = (jnp.zeros((Mp, Dp), jnp.bfloat16)
               .at[:M, :D].set(scaled.astype(jnp.bfloat16)))

    # Distinct pad sentinels for rows (-2) vs columns (-1): padded entries can
    # never label-match anything (real labels are >= 0 after the +1 shift).
    lab_col = jnp.full((Mp, 1), -2.0, jnp.float32).at[:M, 0].set(labels_vec)
    lab_row = jnp.full((1, Mp), -1.0, jnp.float32).at[0, :M].set(labels_vec)

    # Per-row positive count (same label, excluding self) from labels alone,
    # folded with -(T/base_T) and the final 1/M mean into one weight.  Rows
    # with zero positives contribute 0 (the torch original would produce NaN).
    pos_cnt = jnp.sum(labels_vec[:, None] == labels_vec[None, :],
                      axis=1).astype(jnp.float32) - 1.0
    w = (-(TEMPERATURE / BASE_TEMPERATURE) / M) / jnp.maximum(pos_cnt, 1.0)
    w_col = jnp.zeros((Mp, 1), jnp.float32).at[:M, 0].set(w)

    kernel = functools.partial(_contrastive_kernel, m_true=M)
    partials = pl.pallas_call(
        kernel,
        out_shape=jax.ShapeDtypeStruct((num_tiles, 8, 128), jnp.float32),
        grid=(num_tiles,),
        in_specs=[
            pl.BlockSpec((tm, 1), lambda i: (i, 0)),          # row labels
            pl.BlockSpec((tm, 1), lambda i: (i, 0)),          # row weights
            pl.BlockSpec((Mp, Dp), lambda i: (0, 0),          # full F, resident
                         pipeline_mode=pl.Buffered(1)),
            pl.BlockSpec((1, Mp), lambda i: (0, 0),           # full labels, resident
                         pipeline_mode=pl.Buffered(1)),
        ],
        out_specs=pl.BlockSpec((1, 8, 128), lambda i: (i, 0, 0)),
        compiler_params=pltpu.CompilerParams(
            dimension_semantics=("parallel",),
            vmem_limit_bytes=48 * 1024 * 1024),
    )(lab_col, w_col, feats_p, lab_row)

    # Everything (-(T/bT), 1/n_pos, 1/M) is folded into the weights already.
    return jnp.sum(partials[:, 0, 0])


def contrastive_reference(anchor_feature, labels_vec):
    """Pure-JAX f32 port of torch _contrastive (for a tolerance check)."""
    M = anchor_feature.shape[0]
    logits = jnp.matmul(anchor_feature, anchor_feature.T) / TEMPERATURE
    logits = logits - jnp.max(logits, axis=1, keepdims=True)
    same = labels_vec[:, None] == labels_vec[None, :]
    pos = same & ~jnp.eye(M, dtype=bool)
    exp_l = jnp.exp(logits)
    neg_sum = jnp.sum(jnp.where(~same, exp_l, 0.0), axis=1, keepdims=True)
    log_prob = logits - jnp.log(exp_l + neg_sum)
    mean_pos = (jnp.sum(jnp.where(pos, log_prob, 0.0), axis=1)
                / jnp.maximum(jnp.sum(pos, axis=1), 1))
    return jnp.mean(-(TEMPERATURE / BASE_TEMPERATURE) * mean_pos)


# ------------------------------- host glue ---------------------------------
def nearest_interp_1d(x, out_size):
    """F.interpolate(x, out_size, mode='nearest') for 3D (B, C, L) input."""
    L = x.shape[-1]
    idx = (jnp.arange(out_size) * L // out_size).astype(jnp.int32)
    return x[..., idx]


def hard_anchor_sampling_np(X, y_hat, y, rng):
    """NumPy port of _hard_anchor_sampling.
    X: (B, N, D), y_hat: labels (B, N), y: predictions (B, N).
    Data-dependent shapes + randperm -> host glue (no clean Pallas equivalent).
    """
    B, N, D = X.shape
    classes, total = [], 0
    for ii in range(B):
        this_y = y_hat[ii]
        # Mirrors the original: the ignore filter compares the (already +1
        # shifted) labels against -1, exactly like the torch forward does.
        cls = [c for c in np.unique(this_y)
               if c != IGNORE_LABEL and (this_y == c).sum() > MAX_VIEWS]
        classes.append(cls)
        total += len(cls)
    if total == 0:
        return None, None
    n_view = min(MAX_SAMPLES // total, MAX_VIEWS)
    if n_view == 0:
        # TODO(synk): original would build an empty (total, 0, D) tensor and NaN.
        return None, None
    X_ = np.zeros((total, n_view, D), np.float32)
    y_ = np.zeros((total,), np.float32)
    ptr = 0
    for ii in range(B):
        for cls_id in classes[ii]:
            hard = np.nonzero((y_hat[ii] == cls_id) & (y[ii] != cls_id))[0]
            easy = np.nonzero((y_hat[ii] == cls_id) & (y[ii] == cls_id))[0]
            nh, ne = len(hard), len(easy)
            if nh >= n_view / 2 and ne >= n_view / 2:
                nhk = n_view // 2
                nek = n_view - nhk
            elif nh >= n_view / 2:
                nek = ne
                nhk = n_view - nek
            elif ne >= n_view / 2:
                nhk = nh
                nek = n_view - nhk
            else:
                # Unreachable: (nh + ne) > max_views >= n_view.  Kept to avoid
                # the original's UnboundLocalError-style crash.
                nhk = min(nh, n_view // 2)
                nek = min(ne, n_view - nhk)
            hard_sel = hard[rng.permutation(nh)[:nhk]]
            easy_sel = easy[rng.permutation(ne)[:nek]]
            idx = np.concatenate([hard_sel, easy_sel])
            X_[ptr, :len(idx)] = X[ii, idx, :]
            y_[ptr] = cls_id
            ptr += 1
    return X_, y_


def sample_anchors(feats, labels, predict, rng):
    """forward() pre-processing + _hard_anchor_sampling + the unbind/cat
    flatten.  Returns NumPy (anchor_feature (M, D), labels (M,)) or (None, None)."""
    N = feats.shape[2]
    labels = nearest_interp_1d(labels, N) + 1.0
    predict = nearest_interp_1d(predict, N) + 1.0
    feats_bnd = jnp.transpose(feats, (0, 2, 1))                  # (B, N, D)
    labels_flat = labels.reshape(labels.shape[0], -1)
    predict_flat = predict.reshape(predict.shape[0], -1)

    X_, y_ = hard_anchor_sampling_np(np.asarray(feats_bnd),
                                     np.asarray(labels_flat),
                                     np.asarray(predict_flat), rng)
    if X_ is None:
        return None, None
    A, V, D = X_.shape
    # torch.cat(torch.unbind(X_, dim=1), dim=0): row v*A + a == X_[a, v, :]
    anchor_feature = np.transpose(X_, (1, 0, 2)).reshape(A * V, D)
    labels_expanded = np.tile(y_, V)                              # (A*V,)
    return anchor_feature.astype(np.float32), labels_expanded.astype(np.float32)


def contrast_loss_forward(feats, labels, predict, rng):
    """feats: (B, D, N), labels/predict: (B, 1, L)."""
    anchor_feature, labels_vec = sample_anchors(feats, labels, predict, rng)
    if anchor_feature is None:
        return jnp.float32(0.0)
    return contrastive_pallas(jnp.asarray(anchor_feature),
                              jnp.asarray(labels_vec))


# --------------------------------- main -------------------------------------
if __name__ == "__main__":
    B, D, N = 2, 32, 256
    key = jax.random.PRNGKey(0)
    feats = jax.random.normal(key, (B, D, N), dtype=jnp.float32)
    # L2-normalize along the channel dim: the module consumes normalized
    # projection embeddings; raw gaussians make every off-diagonal exp()
    # underflow -> inf loss (in the torch original as well).
    feats = feats / (jnp.linalg.norm(feats, axis=1, keepdims=True) + 1e-12)

    # Deterministic labels: two classes, 128 pixels each per image (> max_views).
    half = N // 2
    labels_1d = jnp.concatenate([jnp.zeros(half), jnp.ones(half)]).astype(jnp.float32)
    labels = jnp.broadcast_to(labels_1d, (B, 1, N))
    # Predictions: 64 "hard" (disagreeing) pixels per class per image.
    pred_1d = jnp.concatenate([
        jnp.ones(64), jnp.zeros(64),          # first class block: half flipped
        jnp.zeros(64), jnp.ones(64),          # second class block: half flipped
    ]).astype(jnp.float32)
    predict = jnp.broadcast_to(pred_1d, (B, 1, N))

    rng = np.random.default_rng(0)            # replaces torch.randperm (stochastic op)
    loss = contrast_loss_forward(feats, labels, predict, rng)
    loss = jax.block_until_ready(loss)
    loss_np = float(np.asarray(loss))
    assert np.isfinite(loss_np), "loss not finite"

    # Tolerance check against a pure-JAX f32 reference on identically sampled
    # anchors (bf16 MXU + folded 1/sqrt(T) scale change numerics slightly).
    anchor_np, labels_np = sample_anchors(feats, labels, predict,
                                          np.random.default_rng(0))
    ref = float(np.asarray(contrastive_reference(jnp.asarray(anchor_np),
                                                 jnp.asarray(labels_np))))
    assert abs(loss_np - ref) <= 0.05 * abs(ref) + 1e-3, (loss_np, ref)
    print("KERNEL_OK")
</pallas_src>

<mosaic_0001>
module attributes {stable_mosaic.version = 11 : i64} {
  func.func @_contrastive_kernel(%arg0: i32, %arg1: memref<256x1xf32, #tpu.memory_space<vmem>>, %arg2: memref<256x1xf32, #tpu.memory_space<vmem>>, %arg3: memref<512x128xbf16, #tpu.memory_space<vmem>>, %arg4: memref<1x512xf32, #tpu.memory_space<vmem>>, %arg5: memref<1x8x128xf32, #tpu.memory_space<vmem>>) attributes {dimension_semantics = [#tpu.dimension_semantics<parallel>], iteration_bounds = array<i64: 2>, scalar_prefetch = 0 : i64, scratch_operands = 0 : i64, tpu.core_type = #tpu.core_type<tc>, window_params = [{transform_indices = @transform_0, window_bounds = array<i64: 256, 1>}, {transform_indices = @transform_1, window_bounds = array<i64: 256, 1>}, {pipeline_mode = #tpu.pipeline_mode<synchronous>, transform_indices = @transform_2, window_bounds = array<i64: 512, 128>}, {pipeline_mode = #tpu.pipeline_mode<synchronous>, transform_indices = @transform_3, window_bounds = array<i64: 1, 512>}, {transform_indices = @transform_4, window_bounds = array<i64: 1, 8, 128>}]} {
    %c256_i32 = arith.constant 256 : i32
    %0 = arith.muli %arg0, %c256_i32 : i32
    %1 = tpu.assume_multiple %0, 256 : i32
    %2 = arith.index_cast %1 : i32 to index
    %c0 = arith.constant 0 : index
    %3 = vector.load %arg3[%2, %c0] : memref<512x128xbf16, #tpu.memory_space<vmem>>, vector<256x128xbf16>
    %c0_0 = arith.constant 0 : index
    %c0_1 = arith.constant 0 : index
    %4 = vector.load %arg3[%c0_0, %c0_1] : memref<512x128xbf16, #tpu.memory_space<vmem>>, vector<512x128xbf16>
    %cst = arith.constant dense<0.000000e+00> : vector<256x512xf32>
    %5 = tpu.matmul %3, %4, %cst {dimension_numbers = #tpu.dot_dimension_numbers<[1], [1], [0], [0], [0, 0, 1, 0], [], []>} : vector<256x128xbf16>, vector<512x128xbf16>, vector<256x512xf32> -> vector<256x512xf32>
    %c0_2 = arith.constant 0 : index
    %c0_3 = arith.constant 0 : index
    %6 = vector.load %arg1[%c0_2, %c0_3] : memref<256x1xf32, #tpu.memory_space<vmem>>, vector<256x1xf32>
    %c0_4 = arith.constant 0 : index
    %c0_5 = arith.constant 0 : index
    %7 = vector.load %arg4[%c0_4, %c0_5] : memref<1x512xf32, #tpu.memory_space<vmem>>, vector<1x512xf32>
    %8 = vector.broadcast %6 : vector<256x1xf32> to vector<256x512xf32>
    %9 = vector.broadcast %7 : vector<1x512xf32> to vector<256x512xf32>
    %10 = arith.cmpf oeq, %8, %9 : vector<256x512xf32>
    %11 = tpu.iota {dimensions = array<i32: 1>} : vector<1x512xi32>
    %12 = tpu.iota {dimensions = array<i32: 0>} : vector<256x1xi32>
    %13 = vector.broadcast %1 : i32 to vector<256x1xi32>
    %14 = arith.addi %12, %13 : vector<256x1xi32>
    %c400_i32 = arith.constant 400 : i32
    %15 = vector.broadcast %c400_i32 : i32 to vector<1x512xi32>
    %16 = arith.cmpi slt, %11, %15 : vector<1x512xi32>
    %cst_6 = arith.constant dense<0xFF800000> : vector<256xf32>
    %17 = vector.multi_reduction <maximumf>, %5, %cst_6 [1] : vector<256x512xf32> to vector<256xf32>
    %18 = vector.shape_cast %17 : vector<256xf32> to vector<256x1xf32>
    %19 = vector.broadcast %18 : vector<256x1xf32> to vector<256x512xf32>
    %20 = arith.subf %5, %19 : vector<256x512xf32>
    %21 = math.exp %20 : vector<256x512xf32>
    %cst_7 = arith.constant dense<true> : vector<256x512xi1>
    %22 = arith.xori %10, %cst_7 : vector<256x512xi1>
    %23 = vector.broadcast %16 : vector<1x512xi1> to vector<256x512xi1>
    %24 = arith.andi %22, %23 : vector<256x512xi1>
    %cst_8 = arith.constant 0.000000e+00 : f32
    %25 = vector.broadcast %cst_8 : f32 to vector<256x512xf32>
    %26 = arith.select %24, %21, %25 : vector<256x512xi1>, vector<256x512xf32>
    %cst_9 = arith.constant dense<0.000000e+00> : vector<256xf32>
    %27 = vector.multi_reduction <add>, %26, %cst_9 [1] : vector<256x512xf32> to vector<256xf32>
    %28 = vector.shape_cast %27 : vector<256xf32> to vector<256x1xf32>
    %29 = vector.broadcast %28 : vector<256x1xf32> to vector<256x512xf32>
    %30 = arith.addf %21, %29 : vector<256x512xf32>
    %31 = math.log %30 : vector<256x512xf32>
    %32 = arith.subf %20, %31 : vector<256x512xf32>
    %33 = vector.broadcast %14 : vector<256x1xi32> to vector<256x512xi32>
    %34 = vector.broadcast %11 : vector<1x512xi32> to vector<256x512xi32>
    %35 = arith.cmpi ne, %33, %34 : vector<256x512xi32>
    %36 = arith.andi %10, %35 : vector<256x512xi1>
    %cst_10 = arith.constant 0.000000e+00 : f32
    %37 = vector.broadcast %cst_10 : f32 to vector<256x512xf32>
    %38 = arith.select %36, %32, %37 : vector<256x512xi1>, vector<256x512xf32>
    %cst_11 = arith.constant dense<0.000000e+00> : vector<256xf32>
    %39 = vector.multi_reduction <add>, %38, %cst_11 [1] : vector<256x512xf32> to vector<256xf32>
    %40 = vector.shape_cast %39 : vector<256xf32> to vector<256x1xf32>
    %c0_12 = arith.constant 0 : index
    %c0_13 = arith.constant 0 : index
    %41 = vector.load %arg2[%c0_12, %c0_13] : memref<256x1xf32, #tpu.memory_space<vmem>>, vector<256x1xf32>
    %42 = arith.mulf %40, %41 : vector<256x1xf32>
    %43 = vector.shape_cast %42 : vector<256x1xf32> to vector<1x256x1xf32>
    %cst_14 = arith.constant dense<0.000000e+00> : vector<1xf32>
    %44 = vector.multi_reduction <add>, %43, %cst_14 [1, 2] : vector<1x256x1xf32> to vector<1xf32>
    %45 = vector.shape_cast %44 : vector<1xf32> to vector<1x1x1xf32>
    %46 = vector.extract %45[0, 0, 0] : f32 from vector<1x1x1xf32>
    %47 = vector.broadcast %46 : f32 to vector<1x8x128xf32>
    %c0_15 = arith.constant 0 : index
    %c0_16 = arith.constant 0 : index
    %c0_17 = arith.constant 0 : index
    %48 = vector.load %arg5[%c0_15, %c0_16, %c0_17] : memref<1x8x128xf32, #tpu.memory_space<vmem>>, vector<1x8x128xf32>
    tpu.vector_store %arg5[%c0_15, %c0_16, %c0_17], %47 {strides = array<i32>} : memref<1x8x128xf32, #tpu.memory_space<vmem>>, vector<1x8x128xf32>,
    return
  }
  func.func @transform_0(%arg0: i32) -> (i32, i32) {
    %c0_i32 = arith.constant 0 : i32
    %c0_i32_0 = arith.constant 0 : i32
    return %arg0, %c0_i32 : i32, i32
  }
  func.func @transform_1(%arg0: i32) -> (i32, i32) {
    %c0_i32 = arith.constant 0 : i32
    %c0_i32_0 = arith.constant 0 : i32
    return %arg0, %c0_i32 : i32, i32
  }
  func.func @transform_2(%arg0: i32) -> (i32, i32) {
    %c0_i32 = arith.constant 0 : i32
    %c0_i32_0 = arith.constant 0 : i32
    %c0_i32_1 = arith.constant 0 : i32
    return %c0_i32, %c0_i32_0 : i32, i32
  }
  func.func @transform_3(%arg0: i32) -> (i32, i32) {
    %c0_i32 = arith.constant 0 : i32
    %c0_i32_0 = arith.constant 0 : i32
    %c0_i32_1 = arith.constant 0 : i32
    return %c0_i32, %c0_i32_0 : i32, i32
  }
  func.func @transform_4(%arg0: i32) -> (i32, i32, i32) {
    %c0_i32 = arith.constant 0 : i32
    %c0_i32_0 = arith.constant 0 : i32
    %c0_i32_1 = arith.constant 0 : i32
    return %arg0, %c0_i32, %c0_i32_0 : i32, i32, i32
  }
}

</mosaic_0001>

<llo_original>
// kernel: tpu_custom_call.1
$region0: #{tpu_custom_call.1}
  #allocation0 [shape = 'u32[]', space=smem, size = 0x4, offset = 0x4, fixed_abs, tag = 'smem constant byte address 0x4 - core index']
  #allocation1 [shape = 'u32[144,128]{1,0:T(1,128)}', space=vmem, size = 0x12000, scoped, tag = 'internal scratch']
  %s0 = inlined_call_operand.vmem [shape: f32[512,1], index: 0, kind: input, shape index: {}]
  %s1 = inlined_call_operand.vmem [shape: f32[512,1], index: 1, kind: input, shape index: {}]
  %s2 = inlined_call_operand.vmem [shape: bf16[512,128], index: 2, kind: input, shape index: {}]
  %s3 = inlined_call_operand.vmem [shape: f32[1,512], index: 3, kind: input, shape index: {}]
  %s4 = inlined_call_operand.hbm [shape: f32[2,8,128], index: 4, kind: output, shape index: {}]
  %s5 = sld [smem:[#allocation0]]
  $region49: #{tpu_custom_call.1} parent=0
    _
  %s7 = ssub.s32 1, %s5
  %s8 = scalar_select 0, %s7, %s5
  $region1: #{tpu_custom_call.1} parent=0
    #allocation2 [shape = 'u8[8192]{0}', space=vmem, size = 0x2000, scoped, tag = 'output window, operand 0']
    #allocation3 [shape = 's32[2]{0}', space=sflag, size = 0x8, scoped, tag = 'scoped memory for tpu_custom_call.1']
    %9 = vsyncpa [#allocation3], 0
    %s10 = scalar_lea.sflag [#allocation3], 1
    %11 = vsyncpa %s10, 0
    loop: start=0, step=1, limit=4
    $region2: #{tpu_custom_call.1} parent=1 // loop_pre_header
      _
    $region3: #{tpu_custom_call.1} parent=1 // loop_header
      %s13 = sphi 0, %s17
      %p14 = scmp.ge.s32.totalorder %s13, 4
      %s23 = sphi 0, %s25
      %s26 = sphi 0, %s23
      %s27 = sphi 0, %s26
      %s43 = sphi 0, %s27
      %s49 = sphi 0, %s51
      %s52 = sphi 0, %s49
      %s53 = sphi 0, %s52
      %s69 = sphi 0, %s53
      %s73 = sphi 0, %s73
      %s75 = sphi 0, %s73
      %s76 = sphi 0, %s75
      %s90 = sphi 0, %s76
      %s94 = sphi 0, %s94
      %s96 = sphi 0, %s94
      %s97 = sphi 0, %s96
      %s111 = sphi 0, %s97
      %s117 = sphi 0, %s119
      %s120 = sphi 0, %s117
      %s121 = sphi 0, %s120
      %s137 = sphi 0, %s121
    $region4: #{tpu_custom_call.1} parent=1 // loop_header_branch
      %16 = sbr.rel (%p14) target = $region8
    $region5: #{tpu_custom_call.1} parent=1 // loop_body
      %s18 = ssub.s32 %s13, 1
      %s19 = ssub.s32 %s13, 2
      %s20 = sadd.s32 %s13, 1
      %s21 = ssub.s32 %s13, %s20
      %p22 = scmp.eq.s32.totalorder %s21, 0
      %s24 = sadd.s32 %s23, 1
      %s25 = scalar_select %p22, %s23, %s24
      %p28 = pneg %p22
      %p29 = scmp.eq.s32.totalorder %s13, 1
      %p30 = por %p28, %p29
      %p31 = scmp.ne.s32.totalorder %s23, %s26
      %p32 = scmp.eq.s32.totalorder %s13, 0
      %p33 = por %p31, %p32
      %p34 = scmp.ne.s32.totalorder %s23, %s26
      %p35 = scmp.eq.s32.totalorder %s18, 1
      %p36 = por %p34, %p35
      %p37 = scmp.ne.s32.totalorder %s26, %s27
      %p38 = scmp.eq.s32.totalorder %s18, 0
      %p39 = por %p37, %p38
      %p40 = scmp.ne.s32.totalorder %s26, %s27
      %p41 = scmp.eq.s32.totalorder %s19, 1
      %p42 = por %p40, %p41
      %p44 = scmp.ne.s32.totalorder %s27, %s43
      %p45 = scmp.eq.s32.totalorder %s19, 0
      %p46 = por %p44, %p45
      %s47 = ssub.s32 %s13, %s20
      %p48 = scmp.eq.s32.totalorder %s47, 0
      %s50 = sadd.s32 %s49, 1
      %s51 = scalar_select %p48, %s49, %s50
      %p54 = pneg %p48
      %p55 = scmp.eq.s32.totalorder %s13, 1
      %p56 = por %p54, %p55
      %p57 = scmp.ne.s32.totalorder %s49, %s52
      %p58 = scmp.eq.s32.totalorder %s13, 0
      %p59 = por %p57, %p58
      %p60 = scmp.ne.s32.totalorder %s49, %s52
      %p61 = scmp.eq.s32.totalorder %s18, 1
      %p62 = por %p60, %p61
      %p63 = scmp.ne.s32.totalorder %s52, %s53
      %p64 = scmp.eq.s32.totalorder %s18, 0
      %p65 = por %p63, %p64
      %p66 = scmp.ne.s32.totalorder %s52, %s53
      %p67 = scmp.eq.s32.totalorder %s19, 1
      %p68 = por %p66, %p67
      %p70 = scmp.ne.s32.totalorder %s53, %s69
      %p71 = scmp.eq.s32.totalorder %s19, 0
      %p72 = por %p70, %p71
      %s74 = sadd.s32 %s73, 1
      %p77 = scmp.eq.s32.totalorder %s13, 1
      %p78 = scmp.ne.s32.totalorder %s73, %s75
      %p79 = scmp.eq.s32.totalorder %s13, 0
      %p80 = por %p78, %p79
      %p81 = scmp.ne.s32.totalorder %s73, %s75
      %p82 = scmp.eq.s32.totalorder %s18, 1
      %p83 = por %p81, %p82
      %p84 = scmp.ne.s32.totalorder %s75, %s76
      %p85 = scmp.eq.s32.totalorder %s18, 0
      %p86 = por %p84, %p85
      %p87 = scmp.ne.s32.totalorder %s75, %s76
      %p88 = scmp.eq.s32.totalorder %s19, 1
      %p89 = por %p87, %p88
      %p91 = scmp.ne.s32.totalorder %s76, %s90
      %p92 = scmp.eq.s32.totalorder %s19, 0
      %p93 = por %p91, %p92
      %s95 = sadd.s32 %s94, 1
      %p98 = scmp.eq.s32.totalorder %s13, 1
      %p99 = scmp.ne.s32.totalorder %s94, %s96
      %p100 = scmp.eq.s32.totalorder %s13, 0
      %p101 = por %p99, %p100
      %p102 = scmp.ne.s32.totalorder %s94, %s96
      %p103 = scmp.eq.s32.totalorder %s18, 1
      %p104 = por %p102, %p103
      %p105 = scmp.ne.s32.totalorder %s96, %s97
      %p106 = scmp.eq.s32.totalorder %s18, 0
      %p107 = por %p105, %p106
      %p108 = scmp.ne.s32.totalorder %s96, %s97
      %p109 = scmp.eq.s32.totalorder %s19, 1
      %p110 = por %p108, %p109
      %p112 = scmp.ne.s32.totalorder %s97, %s111
      %p113 = scmp.eq.s32.totalorder %s19, 0
      %p114 = por %p112, %p113
      %s115 = ssub.s32 %s13, %s20
      %p116 = scmp.eq.s32.totalorder %s115, 0
      %s118 = sadd.s32 %s117, 1
      %s119 = scalar_select %p116, %s117, %s118
      %p122 = pneg %p116
      %p123 = scmp.eq.s32.totalorder %s13, 1
      %p124 = por %p122, %p123
      %p125 = scmp.ne.s32.totalorder %s117, %s120
      %p126 = scmp.eq.s32.totalorder %s13, 0
      %p127 = por %p125, %p126
      %p128 = scmp.ne.s32.totalorder %s117, %s120
      %p129 = scmp.eq.s32.totalorder %s18, 1
      %p130 = por %p128, %p129
      %p131 = scmp.ne.s32.totalorder %s120, %s121
      %p132 = scmp.eq.s32.totalorder %s18, 0
      %p133 = por %p131, %p132
      %p134 = scmp.ne.s32.totalorder %s120, %s121
      %p135 = scmp.eq.s32.totalorder %s19, 1
      %p136 = por %p134, %p135
      %p138 = scmp.ne.s32.totalorder %s121, %s137
      %p139 = scmp.eq.s32.totalorder %s19, 0
      %p140 = por %p138, %p139
      %p141 = scmp.le.s32.totalorder 1, %s13
      %p142 = scmp.lt.s32.totalorder %s13, 3
      %p143 = pnand %p141, %p142
      %p144 = pneg %p143
      // Predicated region
      $region9: #{tpu_custom_call.1} parent=5 // pred_check
        _
      $region10: #{tpu_custom_call.1} parent=5 // pred_check_branch
        %146 = sbr.rel (%p143) target = $region12
      $region11: #{tpu_custom_call.1} parent=5 // pred_region
        %s147 = ssub.s32 %s13, 1
        // Predicated region
        $region13: #{tpu_custom_call.1} parent=11 // pred_check
          %p148 = pneg %p86
        $region14: #{tpu_custom_call.1} parent=11 // pred_check_branch
          %150 = sbr.rel (%p148) target = $region16
        $region15: #{tpu_custom_call.1} parent=11 // pred_region
          _
        $region16: #{tpu_custom_call.1} parent=11 // pred_fallthru
          _
        // Predicated region
        $region17: #{tpu_custom_call.1} parent=11 // pred_check
          %p151 = pneg %p107
        $region18: #{tpu_custom_call.1} parent=11 // pred_check_branch
          %153 = sbr.rel (%p151) target = $region20
        $region19: #{tpu_custom_call.1} parent=11 // pred_region
          _
        $region20: #{tpu_custom_call.1} parent=11 // pred_fallthru
          _
      $region12: #{tpu_custom_call.1} parent=5 // pred_fallthru
        _
      %p154 = scmp.lt.s32.totalorder %s13, 2
      // Predicated region
      $region21: #{tpu_custom_call.1} parent=5 // pred_check
        %p155 = pneg %p154
      $region22: #{tpu_custom_call.1} parent=5 // pred_check_branch
        %157 = sbr.rel (%p155) target = $region24
      $region23: #{tpu_custom_call.1} parent=5 // pred_region
        // Predicated region
        $region25: #{tpu_custom_call.1} parent=23 // pred_check
          %p158 = pneg %p33
        $region26: #{tpu_custom_call.1} parent=23 // pred_check_branch
          %160 = sbr.rel (%p158) target = $region28
        $region27: #{tpu_custom_call.1} parent=23 // pred_region
          %s161 = smul.u32 32, %s13
          %p162 = scmp.lt.s32.totalorder %s161, 63
          %s163 = scalar_select %p162, %s161, 63
          %s164 = smul.addr %s163, 8
          %s165 = scalar_lea.vmem %s0, %s164
          %s166 = smul.u32 32, %s13
        $region28: #{tpu_custom_call.1} parent=23 // pred_fallthru
          _
        // Predicated region
        $region29: #{tpu_custom_call.1} parent=23 // pred_check
          %p167 = pneg %p59
        $region30: #{tpu_custom_call.1} parent=23 // pred_check_branch
          %169 = sbr.rel (%p167) target = $region32
        $region31: #{tpu_custom_call.1} parent=23 // pred_region
          %s170 = smul.u32 32, %s13
          %p171 = scmp.lt.s32.totalorder %s170, 63
          %s172 = scalar_select %p171, %s170, 63
          %s173 = smul.addr %s172, 8
          %s174 = scalar_lea.vmem %s1, %s173
          %s175 = smul.u32 32, %s13
        $region32: #{tpu_custom_call.1} parent=23 // pred_fallthru
          _
      $region24: #{tpu_custom_call.1} parent=5 // pred_fallthru
        _
      %p176 = scmp.le.s32.totalorder 1, %s13
      %p177 = scmp.lt.s32.totalorder %s13, 3
      %p178 = pnand %p176, %p177
      %p179 = pneg %p178
      // Predicated region
      $region33: #{tpu_custom_call.1} parent=5 // pred_check
        _
      $region34: #{tpu_custom_call.1} parent=5 // pred_check_branch
        %181 = sbr.rel (%p178) target = $region36
      $region35: #{tpu_custom_call.1} parent=5 // pred_region
        %s182 = ssub.s32 %s13, 1
        %s183 = smul.u32 32, %s18
        %p184 = scmp.lt.s32.totalorder %s183, 63
        %s185 = scalar_select %p184, %s183, 63
        %s186 = smul.addr %s185, 8
        %s187 = scalar_lea.vmem %s0, %s186
        %p188 = pneg %p39
        %p189 = pneg %p36
        %s190 = smul.u32 32, %s18
        %p191 = scmp.lt.s32.totalorder %s190, 63
        %s192 = scalar_select %p191, %s190, 63
        %s193 = smul.addr %s192, 8
        %s194 = scalar_lea.vmem %s1, %s193
        %p195 = pneg %p65
        %p196 = pneg %p62
        %p197 = pneg %p86
        %p198 = pneg %p83
        %p199 = pneg %p107
        %p200 = pneg %p104
        %p201 = pneg %p133
        %p202 = pneg %p130
        %s203 = sand.u32 %s120, 1
        %s204 = scalar_lea.sflag [#allocation3], %s203
        %s205 = sand.u32 %s120, 1
        %s206 = smul.addr %s205, 8
        %s207 = scalar_lea.vmem [#allocation2], %s206
        %s208 = smul.u32 32, %s18
        %p209 = scmp.lt.s32.totalorder %s208, 63
        %s210 = scalar_select %p209, %s208, 63
        %s211 = smul.addr %s210, 8
        %s212 = scalar_lea.vmem %s0, %s211
        %s213 = smul.u32 32, %s18
        %s214 = smul.u32 32, %s18
        %p215 = scmp.lt.s32.totalorder %s214, 63
        %s216 = scalar_select %p215, %s214, 63
        %s217 = smul.addr %s216, 8
        %s218 = scalar_lea.vmem %s1, %s217
        %s219 = smul.u32 32, %s18
        %s221 = smul.u32 %s18, 256
        %s222 = sshra.s32 %s221, 3
        %s223 = sand.u32 %s221, 7
        %s224 = smul.addr %s222, 4
        %s225 = scalar_lea.vmem %s2, %s224
        %v226 = vld [vmem:[%s225] sm:$0xf]
        %v227 = vld [vmem:[%s225 + $0x4] sm:$0xf]
        %v228 = vld [vmem:[%s225 + $0x8] sm:$0xf]
        %v229 = vld [vmem:[%s225 + $0xc] sm:$0xf]
        %v230 = vld [vmem:[%s225 + $0x10] sm:$0xf]
        %v231 = vld [vmem:[%s225 + $0x14] sm:$0xf]
        %v232 = vld [vmem:[%s225 + $0x18] sm:$0xf]
        %v233 = vld [vmem:[%s225 + $0x1c] sm:$0xf]
        %v234 = vld [vmem:[%s225 + $0x20] sm:$0xf]
        %v235 = vld [vmem:[%s225 + $0x24] sm:$0xf]
        %v236 = vld [vmem:[%s225 + $0x28] sm:$0xf]
        %v237 = vld [vmem:[%s225 + $0x2c] sm:$0xf]
        %v238 = vld [vmem:[%s225 + $0x30] sm:$0xf]
        %v239 = vld [vmem:[%s225 + $0x34] sm:$0xf]
        %v240 = vld [vmem:[%s225 + $0x38] sm:$0xf]
        %v241 = vld [vmem:[%s225 + $0x3c] sm:$0xf]
        %v242 = vld [vmem:[%s225 + $0x40] sm:$0xf]
        %v243 = vld [vmem:[%s225 + $0x44] sm:$0xf]
        %v244 = vld [vmem:[%s225 + $0x48] sm:$0xf]
        %v245 = vld [vmem:[%s225 + $0x4c] sm:$0xf]
        %v246 = vld [vmem:[%s225 + $0x50] sm:$0xf]
        %v247 = vld [vmem:[%s225 + $0x54] sm:$0xf]
        %v248 = vld [vmem:[%s225 + $0x58] sm:$0xf]
        %v249 = vld [vmem:[%s225 + $0x5c] sm:$0xf]
        %v250 = vld [vmem:[%s225 + $0x60] sm:$0xf]
        %v251 = vld [vmem:[%s225 + $0x64] sm:$0xf]
        %v252 = vld [vmem:[%s225 + $0x68] sm:$0xf]
        %v253 = vld [vmem:[%s225 + $0x6c] sm:$0xf]
        %v254 = vld [vmem:[%s225 + $0x70] sm:$0xf]
        %v255 = vld [vmem:[%s225 + $0x74] sm:$0xf]
        %v256 = vld [vmem:[%s225 + $0x78] sm:$0xf]
        %v257 = vld [vmem:[%s225 + $0x7c] sm:$0xf]
        %v258 = vld [vmem:[%s2] sm:$0xf]
        %v259 = vld [vmem:[%s2 + $0x4] sm:$0xf]
        %v260 = vld [vmem:[%s2 + $0x8] sm:$0xf]
        %v261 = vld [vmem:[%s2 + $0xc] sm:$0xf]
        %v262 = vld [vmem:[%s2 + $0x10] sm:$0xf]
        %v263 = vld [vmem:[%s2 + $0x14] sm:$0xf]
        %v264 = vld [vmem:[%s2 + $0x18] sm:$0xf]
        %v265 = vld [vmem:[%s2 + $0x1c] sm:$0xf]
        %v266 = vld [vmem:[%s2 + $0x20] sm:$0xf]
        %v267 = vld [vmem:[%s2 + $0x24] sm:$0xf]
        %v268 = vld [vmem:[%s2 + $0x28] sm:$0xf]
        %v269 = vld [vmem:[%s2 + $0x2c] sm:$0xf]
        %v270 = vld [vmem:[%s2 + $0x30] sm:$0xf]
        %v271 = vld [vmem:[%s2 + $0x34] sm:$0xf]
        %v272 = vld [vmem:[%s2 + $0x38] sm:$0xf]
        %v273 = vld [vmem:[%s2 + $0x3c] sm:$0xf]
        %v274 = vld [vmem:[%s2 + $0x40] sm:$0xf]
        %v275 = vld [vmem:[%s2 + $0x44] sm:$0xf]
        %v276 = vld [vmem:[%s2 + $0x48] sm:$0xf]
        %v277 = vld [vmem:[%s2 + $0x4c] sm:$0xf]
        %v278 = vld [vmem:[%s2 + $0x50] sm:$0xf]
        %v279 = vld [vmem:[%s2 + $0x54] sm:$0xf]
        %v280 = vld [vmem:[%s2 + $0x58] sm:$0xf]
        %v281 = vld [vmem:[%s2 + $0x5c] sm:$0xf]
        %v282 = vld [vmem:[%s2 + $0x60] sm:$0xf]
        %v283 = vld [vmem:[%s2 + $0x64] sm:$0xf]
        %v284 = vld [vmem:[%s2 + $0x68] sm:$0xf]
        %v285 = vld [vmem:[%s2 + $0x6c] sm:$0xf]
        %v286 = vld [vmem:[%s2 + $0x70] sm:$0xf]
        %v287 = vld [vmem:[%s2 + $0x74] sm:$0xf]
        %v288 = vld [vmem:[%s2 + $0x78] sm:$0xf]
        %v289 = vld [vmem:[%s2 + $0x7c] sm:$0xf]
        %v290 = vld [vmem:[%s2 + $0x80] sm:$0xf]
        %v291 = vld [vmem:[%s2 + $0x84] sm:$0xf]
        %v292 = vld [vmem:[%s2 + $0x88] sm:$0xf]
        %v293 = vld [vmem:[%s2 + $0x8c] sm:$0xf]
        %v294 = vld [vmem:[%s2 + $0x90] sm:$0xf]
        %v295 = vld [vmem:[%s2 + $0x94] sm:$0xf]
        %v296 = vld [vmem:[%s2 + $0x98] sm:$0xf]
        %v297 = vld [vmem:[%s2 + $0x9c] sm:$0xf]
        %v298 = vld [vmem:[%s2 + $0xa0] sm:$0xf]
        %v299 = vld [vmem:[%s2 + $0xa4] sm:$0xf]
        %v300 = vld [vmem:[%s2 + $0xa8] sm:$0xf]
        %v301 = vld [vmem:[%s2 + $0xac] sm:$0xf]
        %v302 = vld [vmem:[%s2 + $0xb0] sm:$0xf]
        %v303 = vld [vmem:[%s2 + $0xb4] sm:$0xf]
        %v304 = vld [vmem:[%s2 + $0xb8] sm:$0xf]
        %v305 = vld [vmem:[%s2 + $0xbc] sm:$0xf]
        %v306 = vld [vmem:[%s2 + $0xc0] sm:$0xf]
        %v307 = vld [vmem:[%s2 + $0xc4] sm:$0xf]
        %v308 = vld [vmem:[%s2 + $0xc8] sm:$0xf]
        %v309 = vld [vmem:[%s2 + $0xcc] sm:$0xf]
        %v310 = vld [vmem:[%s2 + $0xd0] sm:$0xf]
        %v311 = vld [vmem:[%s2 + $0xd4] sm:$0xf]
        %v312 = vld [vmem:[%s2 + $0xd8] sm:$0xf]
        %v313 = vld [vmem:[%s2 + $0xdc] sm:$0xf]
        %v314 = vld [vmem:[%s2 + $0xe0] sm:$0xf]
        %v315 = vld [vmem:[%s2 + $0xe4] sm:$0xf]
        %v316 = vld [vmem:[%s2 + $0xe8] sm:$0xf]
        %v317 = vld [vmem:[%s2 + $0xec] sm:$0xf]
        %v318 = vld [vmem:[%s2 + $0xf0] sm:$0xf]
        %v319 = vld [vmem:[%s2 + $0xf4] sm:$0xf]
        %v320 = vld [vmem:[%s2 + $0xf8] sm:$0xf]
        %v321 = vld [vmem:[%s2 + $0xfc] sm:$0xf]
        %v354 = vunpack.c.l.b16 %v226
        %v355 = vunpack.c.l.b16 %v227
        %v356 = vunpack.c.l.b16 %v228
        %v357 = vunpack.c.l.b16 %v229
        %v358 = vunpack.c.l.b16 %v230
        %v359 = vunpack.c.l.b16 %v231
        %v360 = vunpack.c.l.b16 %v232
        %v361 = vunpack.c.l.b16 %v233
        %v362 = vunpack.c.l.b16 %v234
        %v363 = vunpack.c.l.b16 %v235
        %v364 = vunpack.c.l.b16 %v236
        %v365 = vunpack.c.l.b16 %v237
        %v366 = vunpack.c.l.b16 %v238
        %v367 = vunpack.c.l.b16 %v239
        %v368 = vunpack.c.l.b16 %v240
        %v369 = vunpack.c.l.b16 %v241
        %v370 = vunpack.c.l.b16 %v242
        %v371 = vunpack.c.l.b16 %v243
        %v372 = vunpack.c.l.b16 %v244
        %v373 = vunpack.c.l.b16 %v245
        %v374 = vunpack.c.l.b16 %v246
        %v375 = vunpack.c.l.b16 %v247
        %v376 = vunpack.c.l.b16 %v248
        %v377 = vunpack.c.l.b16 %v249
        %v378 = vunpack.c.l.b16 %v250
        %v379 = vunpack.c.l.b16 %v251
        %v380 = vunpack.c.l.b16 %v252
        %v381 = vunpack.c.l.b16 %v253
        %v382 = vunpack.c.l.b16 %v254
        %v383 = vunpack.c.l.b16 %v255
        %v384 = vunpack.c.l.b16 %v256
        %v385 = vunpack.c.l.b16 %v257
        %v386 = vpack.c.b16 %v355, %v354
        %v387 = vpack.c.b16 %v357, %v356
        %v388 = vpack.c.b16 %v359, %v358
        %v389 = vpack.c.b16 %v361, %v360
        %v390 = vpack.c.b16 %v363, %v362
        %v391 = vpack.c.b16 %v365, %v364
        %v392 = vpack.c.b16 %v367, %v366
        %v393 = vpack.c.b16 %v369, %v368
        %v394 = vpack.c.b16 %v371, %v370
        %v395 = vpack.c.b16 %v373, %v372
        %v396 = vpack.c.b16 %v375, %v374
        %v397 = vpack.c.b16 %v377, %v376
        %v398 = vpack.c.b16 %v379, %v378
        %v399 = vpack.c.b16 %v381, %v380
        %v400 = vpack.c.b16 %v383, %v382
        %v401 = vpack.c.b16 %v385, %v384
        %v482 = vunpack.c.l.b16 %v258
        %v483 = vunpack.c.l.b16 %v259
        %v484 = vunpack.c.l.b16 %v260
        %v485 = vunpack.c.l.b16 %v261
        %v486 = vunpack.c.l.b16 %v262
        %v487 = vunpack.c.l.b16 %v263
        %v488 = vunpack.c.l.b16 %v264
        %v489 = vunpack.c.l.b16 %v265
        %v490 = vunpack.c.l.b16 %v266
        %v491 = vunpack.c.l.b16 %v267
        %v492 = vunpack.c.l.b16 %v268
        %v493 = vunpack.c.l.b16 %v269
        %v494 = vunpack.c.l.b16 %v270
        %v495 = vunpack.c.l.b16 %v271
        %v496 = vunpack.c.l.b16 %v272
        %v497 = vunpack.c.l.b16 %v273
        %v498 = vunpack.c.l.b16 %v274
        %v499 = vunpack.c.l.b16 %v275
        %v500 = vunpack.c.l.b16 %v276
        %v501 = vunpack.c.l.b16 %v277
        %v502 = vunpack.c.l.b16 %v278
        %v503 = vunpack.c.l.b16 %v279
        %v504 = vunpack.c.l.b16 %v280
        %v505 = vunpack.c.l.b16 %v281
        %v506 = vunpack.c.l.b16 %v282
        %v507 = vunpack.c.l.b16 %v283
        %v508 = vunpack.c.l.b16 %v284
        %v509 = vunpack.c.l.b16 %v285
        %v510 = vunpack.c.l.b16 %v286
        %v511 = vunpack.c.l.b16 %v287
        %v512 = vunpack.c.l.b16 %v288
        %v513 = vunpack.c.l.b16 %v289
        %v514 = vunpack.c.l.b16 %v290
        %v515 = vunpack.c.l.b16 %v291
        %v516 = vunpack.c.l.b16 %v292
        %v517 = vunpack.c.l.b16 %v293
        %v518 = vunpack.c.l.b16 %v294
        %v519 = vunpack.c.l.b16 %v295
        %v520 = vunpack.c.l.b16 %v296
        %v521 = vunpack.c.l.b16 %v297
        %v522 = vunpack.c.l.b16 %v298
        %v523 = vunpack.c.l.b16 %v299
        %v524 = vunpack.c.l.b16 %v300
        %v525 = vunpack.c.l.b16 %v301
        %v526 = vunpack.c.l.b16 %v302
        %v527 = vunpack.c.l.b16 %v303
        %v528 = vunpack.c.l.b16 %v304
        %v529 = vunpack.c.l.b16 %v305
        %v530 = vunpack.c.l.b16 %v306
        %v531 = vunpack.c.l.b16 %v307
        %v532 = vunpack.c.l.b16 %v308
        %v533 = vunpack.c.l.b16 %v309
        %v534 = vunpack.c.l.b16 %v310
        %v535 = vunpack.c.l.b16 %v311
        %v536 = vunpack.c.l.b16 %v312
        %v537 = vunpack.c.l.b16 %v313
        %v538 = vunpack.c.l.b16 %v314
        %v539 = vunpack.c.l.b16 %v315
        %v540 = vunpack.c.l.b16 %v316
        %v541 = vunpack.c.l.b16 %v317
        %v542 = vunpack.c.l.b16 %v318
        %v543 = vunpack.c.l.b16 %v319
        %v544 = vunpack.c.l.b16 %v320
        %v545 = vunpack.c.l.b16 %v321
        %v546 = vpack.c.b16 %v483, %v482
        %v547 = vpack.c.b16 %v485, %v484
        %v548 = vpack.c.b16 %v487, %v486
        %v549 = vpack.c.b16 %v489, %v488
        %v550 = vpack.c.b16 %v491, %v490
        %v551 = vpack.c.b16 %v493, %v492
        %v552 = vpack.c.b16 %v495, %v494
        %v553 = vpack.c.b16 %v497, %v496
        %v554 = vpack.c.b16 %v499, %v498
        %v555 = vpack.c.b16 %v501, %v500
        %v556 = vpack.c.b16 %v503, %v502
        %v557 = vpack.c.b16 %v505, %v504
        %v558 = vpack.c.b16 %v507, %v506
        %v559 = vpack.c.b16 %v509, %v508
        %v560 = vpack.c.b16 %v511, %v510
        %v561 = vpack.c.b16 %v513, %v512
        %v562 = vpack.c.b16 %v515, %v514
        %v563 = vpack.c.b16 %v517, %v516
        %v564 = vpack.c.b16 %v519, %v518
        %v565 = vpack.c.b16 %v521, %v520
        %v566 = vpack.c.b16 %v523, %v522
        %v567 = vpack.c.b16 %v525, %v524
        %v568 = vpack.c.b16 %v527, %v526
        %v569 = vpack.c.b16 %v529, %v528
        %v570 = vpack.c.b16 %v531, %v530
        %v571 = vpack.c.b16 %v533, %v532
        %v572 = vpack.c.b16 %v535, %v534
        %v573 = vpack.c.b16 %v537, %v536
        %v574 = vpack.c.b16 %v539, %v538
        %v575 = vpack.c.b16 %v541, %v540
        %v576 = vpack.c.b16 %v543, %v542
        %v577 = vpack.c.b16 %v545, %v544
        %610 = vmatprep.subr.bf16.mxu0 0
        %611 = vmatpush1.bf16.xpose.msra.mxu0 %v546
        %612 = vmatprep.subr.bf16.mxu0 0
        %613 = vmatpush1.bf16.xpose.msra.mxu0 %v547
        %614 = vmatprep.subr.bf16.mxu0 0
        %615 = vmatpush1.bf16.xpose.msra.mxu0 %v548
        %616 = vmatprep.subr.bf16.mxu0 0
        %617 = vmatpush1.bf16.xpose.msra.mxu0 %v549
        %618 = vmatprep.subr.bf16.mxu0 0
        %619 = vmatpush1.bf16.xpose.msra.mxu0 %v550
        %620 = vmatprep.subr.bf16.mxu0 0
        %621 = vmatpush1.bf16.xpose.msra.mxu0 %v551
        %622 = vmatprep.subr.bf16.mxu0 0
        %623 = vmatpush1.bf16.xpose.msra.mxu0 %v552
        %624 = vmatprep.subr.bf16.mxu0 0
        %625 = vmatpush1.bf16.xpose.msra.mxu0 %v553
        %626 = vmatprep.subr.bf16.mxu0 0
        %627 = vmatpush1.bf16.xpose.msra.mxu0 %v554
        %628 = vmatprep.subr.bf16.mxu0 0
        %629 = vmatpush1.bf16.xpose.msra.mxu0 %v555
        %630 = vmatprep.subr.bf16.mxu0 0
        %631 = vmatpush1.bf16.xpose.msra.mxu0 %v556
        %632 = vmatprep.subr.bf16.mxu0 0
        %633 = vmatpush1.bf16.xpose.msra.mxu0 %v557
        %634 = vmatprep.subr.bf16.mxu0 0
        %635 = vmatpush1.bf16.xpose.msra.mxu0 %v558
        %636 = vmatprep.subr.bf16.mxu0 0
        %637 = vmatpush1.bf16.xpose.msra.mxu0 %v559
        %638 = vmatprep.subr.bf16.mxu0 0
        %639 = vmatpush1.bf16.xpose.msra.mxu0 %v560
        %640 = vmatprep.subr.bf16.mxu0 0
        %641 = vmatpush1.bf16.xpose.msra.mxu0 %v561
        %642 = vmatprep.mubr.bf16.mxu0 0
        %643 = vmatmul.mubr.bf16.gmra.mrb[0].mxu0 %v386
        %v644 = vpop.f32.mrb[0].mxu0
        %v645 = vadd.f32 0.0, %v644
        %v646 = vpop.f32.mrb[0].mxu0
        %v647 = vadd.f32 0.0, %v646
        %v648 = vpop.f32.mrb[0].mxu0
        %v649 = vadd.f32 0.0, %v648
        %v650 = vpop.f32.mrb[0].mxu0
        %v651 = vadd.f32 0.0, %v650
        %652 = vmatprep.mubr.bf16.mxu0 0
        %653 = vmatmul.mubr.bf16.gmra.mrb[0].mxu0 %v387
        %v654 = vpop.f32.mrb[0].mxu0
        %v655 = vadd.f32 0.0, %v654
        %v656 = vpop.f32.mrb[0].mxu0
        %v657 = vadd.f32 0.0, %v656
        %v658 = vpop.f32.mrb[0].mxu0
        %v659 = vadd.f32 0.0, %v658
        %v660 = vpop.f32.mrb[0].mxu0
        %v661 = vadd.f32 0.0, %v660
        %662 = vmatprep.mubr.bf16.mxu0 0
        %663 = vmatmul.mubr.bf16.gmra.mrb[0].mxu0 %v388
        %v664 = vpop.f32.mrb[0].mxu0
        %v665 = vadd.f32 0.0, %v664
        %v666 = vpop.f32.mrb[0].mxu0
        %v667 = vadd.f32 0.0, %v666
        %v668 = vpop.f32.mrb[0].mxu0
        %v669 = vadd.f32 0.0, %v668
        %v670 = vpop.f32.mrb[0].mxu0
        %v671 = vadd.f32 0.0, %v670
        %672 = vmatprep.mubr.bf16.mxu0 0
        %673 = vmatmul.mubr.bf16.gmra.mrb[0].mxu0 %v389
        %v674 = vpop.f32.mrb[0].mxu0
        %v675 = vadd.f32 0.0, %v674
        %v676 = vpop.f32.mrb[0].mxu0
        %v677 = vadd.f32 0.0, %v676
        %v678 = vpop.f32.mrb[0].mxu0
        %v679 = vadd.f32 0.0, %v678
        %v680 = vpop.f32.mrb[0].mxu0
        %v681 = vadd.f32 0.0, %v680
        %682 = vmatprep.mubr.bf16.mxu0 0
        %683 = vmatmul.mubr.bf16.gmra.mrb[0].mxu0 %v390
        %v684 = vpop.f32.mrb[0].mxu0
        %v685 = vadd.f32 0.0, %v684
        %v686 = vpop.f32.mrb[0].mxu0
        %v687 = vadd.f32 0.0, %v686
        %v688 = vpop.f32.mrb[0].mxu0
        %v689 = vadd.f32 0.0, %v688
        %v690 = vpop.f32.mrb[0].mxu0
        %v691 = vadd.f32 0.0, %v690
        %692 = vmatprep.mubr.bf16.mxu0 0
        %693 = vmatmul.mubr.bf16.gmra.mrb[0].mxu0 %v391
        %v694 = vpop.f32.mrb[0].mxu0
        %v695 = vadd.f32 0.0, %v694
        %v696 = vpop.f32.mrb[0].mxu0
        %v697 = vadd.f32 0.0, %v696
        %v698 = vpop.f32.mrb[0].mxu0
        %v699 = vadd.f32 0.0, %v698
        %v700 = vpop.f32.mrb[0].mxu0
        %v701 = vadd.f32 0.0, %v700
        %702 = vmatprep.mubr.bf16.mxu0 0
        %703 = vmatmul.mubr.bf16.gmra.mrb[0].mxu0 %v392
        %v704 = vpop.f32.mrb[0].mxu0
        %v705 = vadd.f32 0.0, %v704
        %v706 = vpop.f32.mrb[0].mxu0
        %v707 = vadd.f32 0.0, %v706
        %v708 = vpop.f32.mrb[0].mxu0
        %v709 = vadd.f32 0.0, %v708
        %v710 = vpop.f32.mrb[0].mxu0
        %v711 = vadd.f32 0.0, %v710
        %712 = vmatprep.mubr.bf16.mxu0 0
        %713 = vmatmul.mubr.bf16.gmra.mrb[0].mxu0 %v393
        %v714 = vpop.f32.mrb[0].mxu0
        %v715 = vadd.f32 0.0, %v714
        %v716 = vpop.f32.mrb[0].mxu0
        %v717 = vadd.f32 0.0, %v716
        %v718 = vpop.f32.mrb[0].mxu0
        %v719 = vadd.f32 0.0, %v718
        %v720 = vpop.f32.mrb[0].mxu0
        %v721 = vadd.f32 0.0, %v720
        %722 = vmatprep.mubr.bf16.mxu0 0
        %723 = vmatmul.mubr.bf16.gmra.mrb[0].mxu0 %v394
        %v724 = vpop.f32.mrb[0].mxu0
        %v725 = vadd.f32 0.0, %v724
        %v726 = vpop.f32.mrb[0].mxu0
        %v727 = vadd.f32 0.0, %v726
        %v728 = vpop.f32.mrb[0].mxu0
        %v729 = vadd.f32 0.0, %v728
        %v730 = vpop.f32.mrb[0].mxu0
        %v731 = vadd.f32 0.0, %v730
        %732 = vmatprep.mubr.bf16.mxu0 0
        %733 = vmatmul.mubr.bf16.gmra.mrb[0].mxu0 %v395
        %v734 = vpop.f32.mrb[0].mxu0
        %v735 = vadd.f32 0.0, %v734
        %v736 = vpop.f32.mrb[0].mxu0
        %v737 = vadd.f32 0.0, %v736
        %v738 = vpop.f32.mrb[0].mxu0
        %v739 = vadd.f32 0.0, %v738
        %v740 = vpop.f32.mrb[0].mxu0
        %v741 = vadd.f32 0.0, %v740
        %742 = vmatprep.mubr.bf16.mxu0 0
        %743 = vmatmul.mubr.bf16.gmra.mrb[0].mxu0 %v396
        %v744 = vpop.f32.mrb[0].mxu0
        %v745 = vadd.f32 0.0, %v744
        %v746 = vpop.f32.mrb[0].mxu0
        %v747 = vadd.f32 0.0, %v746
        %v748 = vpop.f32.mrb[0].mxu0
        %v749 = vadd.f32 0.0, %v748
        %v750 = vpop.f32.mrb[0].mxu0
        %v751 = vadd.f32 0.0, %v750
        %752 = vmatprep.mubr.bf16.mxu0 0
        %753 = vmatmul.mubr.bf16.gmra.mrb[0].mxu0 %v397
        %v754 = vpop.f32.mrb[0].mxu0
        %v755 = vadd.f32 0.0, %v754
        %v756 = vpop.f32.mrb[0].mxu0
        %v757 = vadd.f32 0.0, %v756
        %v758 = vpop.f32.mrb[0].mxu0
        %v759 = vadd.f32 0.0, %v758
        %v760 = vpop.f32.mrb[0].mxu0
        %v761 = vadd.f32 0.0, %v760
        %762 = vmatprep.mubr.bf16.mxu0 0
        %763 = vmatmul.mubr.bf16.gmra.mrb[0].mxu0 %v398
        %v764 = vpop.f32.mrb[0].mxu0
        %v765 = vadd.f32 0.0, %v764
        %v766 = vpop.f32.mrb[0].mxu0
        %v767 = vadd.f32 0.0, %v766
        %v768 = vpop.f32.mrb[0].mxu0
        %v769 = vadd.f32 0.0, %v768
        %v770 = vpop.f32.mrb[0].mxu0
        %v771 = vadd.f32 0.0, %v770
        %772 = vmatprep.mubr.bf16.mxu0 0
        %773 = vmatmul.mubr.bf16.gmra.mrb[0].mxu0 %v399
        %v774 = vpop.f32.mrb[0].mxu0
        %v775 = vadd.f32 0.0, %v774
        %v776 = vpop.f32.mrb[0].mxu0
        %v777 = vadd.f32 0.0, %v776
        %v778 = vpop.f32.mrb[0].mxu0
        %v779 = vadd.f32 0.0, %v778
        %v780 = vpop.f32.mrb[0].mxu0
        %v781 = vadd.f32 0.0, %v780
        %782 = vmatprep.mubr.bf16.mxu0 0
        %783 = vmatmul.mubr.bf16.gmra.mrb[0].mxu0 %v400
        %v784 = vpop.f32.mrb[0].mxu0
        %v785 = vadd.f32 0.0, %v784
        %v786 = vpop.f32.mrb[0].mxu0
        %v787 = vadd.f32 0.0, %v786
        %v788 = vpop.f32.mrb[0].mxu0
        %v789 = vadd.f32 0.0, %v788
        %v790 = vpop.f32.mrb[0].mxu0
        %v791 = vadd.f32 0.0, %v790
        %792 = vmatprep.mubr.bf16.mxu0 0
        %793 = vmatmul.mubr.bf16.gmra.mrb[0].mxu0 %v401
        %v794 = vpop.f32.mrb[0].mxu0
        %v795 = vadd.f32 0.0, %v794
        %v796 = vpop.f32.mrb[0].mxu0
        %v797 = vadd.f32 0.0, %v796
        %v798 = vpop.f32.mrb[0].mxu0
        %v799 = vadd.f32 0.0, %v798
        %v800 = vpop.f32.mrb[0].mxu0
        %v801 = vadd.f32 0.0, %v800
        %802 = vdwg.mxu0
        %803 = vmatprep.subr.bf16.mxu0 0
        %804 = vmatpush1.bf16.xpose.msra.mxu0 %v562
        %805 = vmatprep.subr.bf16.mxu0 0
        %806 = vmatpush1.bf16.xpose.msra.mxu0 %v563
        %807 = vmatprep.subr.bf16.mxu0 0
        %808 = vmatpush1.bf16.xpose.msra.mxu0 %v564
        %809 = vmatprep.subr.bf16.mxu0 0
        %810 = vmatpush1.bf16.xpose.msra.mxu0 %v565
        %811 = vmatprep.subr.bf16.mxu0 0
        %812 = vmatpush1.bf16.xpose.msra.mxu0 %v566
        %813 = vmatprep.subr.bf16.mxu0 0
        %814 = vmatpush1.bf16.xpose.msra.mxu0 %v567
        %815 = vmatprep.subr.bf16.mxu0 0
        %816 = vmatpush1.bf16.xpose.msra.mxu0 %v568
        %817 = vmatprep.subr.bf16.mxu0 0
        %818 = vmatpush1.bf16.xpose.msra.mxu0 %v569
        %819 = vmatprep.subr.bf16.mxu0 0
        %820 = vmatpush1.bf16.xpose.msra.mxu0 %v570
        %821 = vmatprep.subr.bf16.mxu0 0
        %822 = vmatpush1.bf16.xpose.msra.mxu0 %v571
        %823 = vmatprep.subr.bf16.mxu0 0
        %824 = vmatpush1.bf16.xpose.msra.mxu0 %v572
        %825 = vmatprep.subr.bf16.mxu0 0
        %826 = vmatpush1.bf16.xpose.msra.mxu0 %v573
        %827 = vmatprep.subr.bf16.mxu0 0
        %828 = vmatpush1.bf16.xpose.msra.mxu0 %v574
        %829 = vmatprep.subr.bf16.mxu0 0
        %830 = vmatpush1.bf16.xpose.msra.mxu0 %v575
        %831 = vmatprep.subr.bf16.mxu0 0
        %832 = vmatpush1.bf16.xpose.msra.mxu0 %v576
        %833 = vmatprep.subr.bf16.mxu0 0
        %834 = vmatpush1.bf16.xpose.msra.mxu0 %v577
        %835 = vmatprep.mubr.bf16.mxu0 0
        %836 = vmatmul.mubr.bf16.gmra.mrb[0].mxu0 %v386
        %v837 = vpop.f32.mrb[0].mxu0
        %v838 = vadd.f32 0.0, %v837
        %v839 = vpop.f32.mrb[0].mxu0
        %v840 = vadd.f32 0.0, %v839
        %v841 = vpop.f32.mrb[0].mxu0
        %v842 = vadd.f32 0.0, %v841
        %v843 = vpop.f32.mrb[0].mxu0
        %v844 = vadd.f32 0.0, %v843
        %845 = vmatprep.mubr.bf16.mxu0 0
        %846 = vmatmul.mubr.bf16.gmra.mrb[0].mxu0 %v387
        %v847 = vpop.f32.mrb[0].mxu0
        %v848 = vadd.f32 0.0, %v847
        %v849 = vpop.f32.mrb[0].mxu0
        %v850 = vadd.f32 0.0, %v849
        %v851 = vpop.f32.mrb[0].mxu0
        %v852 = vadd.f32 0.0, %v851
        %v853 = vpop.f32.mrb[0].mxu0
        %v854 = vadd.f32 0.0, %v853
        %855 = vmatprep.mubr.bf16.mxu0 0
        %856 = vmatmul.mubr.bf16.gmra.mrb[0].mxu0 %v388
        %v857 = vpop.f32.mrb[0].mxu0
        %v858 = vadd.f32 0.0, %v857
        %v859 = vpop.f32.mrb[0].mxu0
        %v860 = vadd.f32 0.0, %v859
        %v861 = vpop.f32.mrb[0].mxu0
        %v862 = vadd.f32 0.0, %v861
        %v863 = vpop.f32.mrb[0].mxu0
        %v864 = vadd.f32 0.0, %v863
        %865 = vmatprep.mubr.bf16.mxu0 0
        %866 = vmatmul.mubr.bf16.gmra.mrb[0].mxu0 %v389
        %v867 = vpop.f32.mrb[0].mxu0
        %v868 = vadd.f32 0.0, %v867
        %v869 = vpop.f32.mrb[0].mxu0
        %v870 = vadd.f32 0.0, %v869
        %v871 = vpop.f32.mrb[0].mxu0
        %v872 = vadd.f32 0.0, %v871
        %v873 = vpop.f32.mrb[0].mxu0
        %v874 = vadd.f32 0.0, %v873
        %875 = vmatprep.mubr.bf16.mxu0 0
        %876 = vmatmul.mubr.bf16.gmra.mrb[0].mxu0 %v390
        %v877 = vpop.f32.mrb[0].mxu0
        %v878 = vadd.f32 0.0, %v877
        %v879 = vpop.f32.mrb[0].mxu0
        %v880 = vadd.f32 0.0, %v879
        %v881 = vpop.f32.mrb[0].mxu0
        %v882 = vadd.f32 0.0, %v881
        %v883 = vpop.f32.mrb[0].mxu0
        %v884 = vadd.f32 0.0, %v883
        %885 = vmatprep.mubr.bf16.mxu0 0
        %886 = vmatmul.mubr.bf16.gmra.mrb[0].mxu0 %v391
        %v887 = vpop.f32.mrb[0].mxu0
        %v888 = vadd.f32 0.0, %v887
        %v889 = vpop.f32.mrb[0].mxu0
        %v890 = vadd.f32 0.0, %v889
        %v891 = vpop.f32.mrb[0].mxu0
        %v892 = vadd.f32 0.0, %v891
        %v893 = vpop.f32.mrb[0].mxu0
        %v894 = vadd.f32 0.0, %v893
        %895 = vmatprep.mubr.bf16.mxu0 0
        %896 = vmatmul.mubr.bf16.gmra.mrb[0].mxu0 %v392
        %v897 = vpop.f32.mrb[0].mxu0
        %v898 = vadd.f32 0.0, %v897
        %v899 = vpop.f32.mrb[0].mxu0
        %v900 = vadd.f32 0.0, %v899
        %v901 = vpop.f32.mrb[0].mxu0
        %v902 = vadd.f32 0.0, %v901
        %v903 = vpop.f32.mrb[0].mxu0
        %v904 = vadd.f32 0.0, %v903
        %905 = vmatprep.mubr.bf16.mxu0 0
        %906 = vmatmul.mubr.bf16.gmra.mrb[0].mxu0 %v393
        %v907 = vpop.f32.mrb[0].mxu0
        %v908 = vadd.f32 0.0, %v907
        %v909 = vpop.f32.mrb[0].mxu0
        %v910 = vadd.f32 0.0, %v909
        %v911 = vpop.f32.mrb[0].mxu0
        %v912 = vadd.f32 0.0, %v911
        %v913 = vpop.f32.mrb[0].mxu0
        %v914 = vadd.f32 0.0, %v913
        %915 = vmatprep.mubr.bf16.mxu0 0
        %916 = vmatmul.mubr.bf16.gmra.mrb[0].mxu0 %v394
        %v917 = vpop.f32.mrb[0].mxu0
        %v918 = vadd.f32 0.0, %v917
        %v919 = vpop.f32.mrb[0].mxu0
        %v920 = vadd.f32 0.0, %v919
        %v921 = vpop.f32.mrb[0].mxu0
        %v922 = vadd.f32 0.0, %v921
        %v923 = vpop.f32.mrb[0].mxu0
        %v924 = vadd.f32 0.0, %v923
        %925 = vmatprep.mubr.bf16.mxu0 0
        %926 = vmatmul.mubr.bf16.gmra.mrb[0].mxu0 %v395
        %v927 = vpop.f32.mrb[0].mxu0
        %v928 = vadd.f32 0.0, %v927
        %v929 = vpop.f32.mrb[0].mxu0
        %v930 = vadd.f32 0.0, %v929
        %v931 = vpop.f32.mrb[0].mxu0
        %v932 = vadd.f32 0.0, %v931
        %v933 = vpop.f32.mrb[0].mxu0
        %v934 = vadd.f32 0.0, %v933
        %935 = vmatprep.mubr.bf16.mxu0 0
        %936 = vmatmul.mubr.bf16.gmra.mrb[0].mxu0 %v396
        %v937 = vpop.f32.mrb[0].mxu0
        %v938 = vadd.f32 0.0, %v937
        %v939 = vpop.f32.mrb[0].mxu0
        %v940 = vadd.f32 0.0, %v939
        %v941 = vpop.f32.mrb[0].mxu0
        %v942 = vadd.f32 0.0, %v941
        %v943 = vpop.f32.mrb[0].mxu0
        %v944 = vadd.f32 0.0, %v943
        %945 = vmatprep.mubr.bf16.mxu0 0
        %946 = vmatmul.mubr.bf16.gmra.mrb[0].mxu0 %v397
        %v947 = vpop.f32.mrb[0].mxu0
        %v948 = vadd.f32 0.0, %v947
        %v949 = vpop.f32.mrb[0].mxu0
        %v950 = vadd.f32 0.0, %v949
        %v951 = vpop.f32.mrb[0].mxu0
        %v952 = vadd.f32 0.0, %v951
        %v953 = vpop.f32.mrb[0].mxu0
        %v954 = vadd.f32 0.0, %v953
        %955 = vmatprep.mubr.bf16.mxu0 0
        %956 = vmatmul.mubr.bf16.gmra.mrb[0].mxu0 %v398
        %v957 = vpop.f32.mrb[0].mxu0
        %v958 = vadd.f32 0.0, %v957
        %v959 = vpop.f32.mrb[0].mxu0
        %v960 = vadd.f32 0.0, %v959
        %v961 = vpop.f32.mrb[0].mxu0
        %v962 = vadd.f32 0.0, %v961
        %v963 = vpop.f32.mrb[0].mxu0
        %v964 = vadd.f32 0.0, %v963
        %965 = vmatprep.mubr.bf16.mxu0 0
        %966 = vmatmul.mubr.bf16.gmra.mrb[0].mxu0 %v399
        %v967 = vpop.f32.mrb[0].mxu0
        %v968 = vadd.f32 0.0, %v967
        %v969 = vpop.f32.mrb[0].mxu0
        %v970 = vadd.f32 0.0, %v969
        %v971 = vpop.f32.mrb[0].mxu0
        %v972 = vadd.f32 0.0, %v971
        %v973 = vpop.f32.mrb[0].mxu0
        %v974 = vadd.f32 0.0, %v973
        %975 = vmatprep.mubr.bf16.mxu0 0
        %976 = vmatmul.mubr.bf16.gmra.mrb[0].mxu0 %v400
        %v977 = vpop.f32.mrb[0].mxu0
        %v978 = vadd.f32 0.0, %v977
        %v979 = vpop.f32.mrb[0].mxu0
        %v980 = vadd.f32 0.0, %v979
        %v981 = vpop.f32.mrb[0].mxu0
        %v982 = vadd.f32 0.0, %v981
        %v983 = vpop.f32.mrb[0].mxu0
        %v984 = vadd.f32 0.0, %v983
        %985 = vmatprep.mubr.bf16.mxu0 0
        %986 = vmatmul.mubr.bf16.gmra.mrb[0].mxu0 %v401
        %v987 = vpop.f32.mrb[0].mxu0
        %v988 = vadd.f32 0.0, %v987
        %v989 = vpop.f32.mrb[0].mxu0
        %v990 = vadd.f32 0.0, %v989
        %v991 = vpop.f32.mrb[0].mxu0
        %v992 = vadd.f32 0.0, %v991
        %v993 = vpop.f32.mrb[0].mxu0
        %v994 = vadd.f32 0.0, %v993
        %995 = vdwg.mxu0
        %v996 = vld [vmem:[%s212] sm:$0xff]
        %v997 = vld [vmem:[%s212 + $0x8] sm:$0xff]
        %v998 = vld [vmem:[%s212 + $0x10] sm:$0xff]
        %v999 = vld [vmem:[%s212 + $0x18] sm:$0xff]
        %v1000 = vld [vmem:[%s212 + $0x20] sm:$0xff]
        %v1001 = vld [vmem:[%s212 + $0x28] sm:$0xff]
        %v1002 = vld [vmem:[%s212 + $0x30] sm:$0xff]
        %v1003 = vld [vmem:[%s212 + $0x38] sm:$0xff]
        %v1004 = vld [vmem:[%s212 + $0x40] sm:$0xff]
        %v1005 = vld [vmem:[%s212 + $0x48] sm:$0xff]
        %v1006 = vld [vmem:[%s212 + $0x50] sm:$0xff]
        %v1007 = vld [vmem:[%s212 + $0x58] sm:$0xff]
        %v1008 = vld [vmem:[%s212 + $0x60] sm:$0xff]
        %v1009 = vld [vmem:[%s212 + $0x68] sm:$0xff]
        %v1010 = vld [vmem:[%s212 + $0x70] sm:$0xff]
        %v1011 = vld [vmem:[%s212 + $0x78] sm:$0xff]
        %v1012 = vld [vmem:[%s212 + $0x80] sm:$0xff]
        %v1013 = vld [vmem:[%s212 + $0x88] sm:$0xff]
        %v1014 = vld [vmem:[%s212 + $0x90] sm:$0xff]
        %v1015 = vld [vmem:[%s212 + $0x98] sm:$0xff]
        %v1016 = vld [vmem:[%s212 + $0xa0] sm:$0xff]
        %v1017 = vld [vmem:[%s212 + $0xa8] sm:$0xff]
        %v1018 = vld [vmem:[%s212 + $0xb0] sm:$0xff]
        %v1019 = vld [vmem:[%s212 + $0xb8] sm:$0xff]
        %v1020 = vld [vmem:[%s212 + $0xc0] sm:$0xff]
        %v1021 = vld [vmem:[%s212 + $0xc8] sm:$0xff]
        %v1022 = vld [vmem:[%s212 + $0xd0] sm:$0xff]
        %v1023 = vld [vmem:[%s212 + $0xd8] sm:$0xff]
        %v1024 = vld [vmem:[%s212 + $0xe0] sm:$0xff]
        %v1025 = vld [vmem:[%s212 + $0xe8] sm:$0xff]
        %v1026 = vld [vmem:[%s212 + $0xf0] sm:$0xff]
        %v1027 = vld [vmem:[%s212 + $0xf8] sm:$0xff]
        %v1028 = vld [vmem:[%s3] sm:$0xf]
        %1030 = vset.pattern.permute.xlu0 0
        %1031 = vperm.xlu0 %1030, %v996
        %v1032 = vpop.permute.xlu0 %1031
        %1035 = vset.pattern.permute.xlu0 0
        %1036 = vperm.xlu0 %1035, %v997
        %v1037 = vpop.permute.xlu0 %1036
        %1040 = vset.pattern.permute.xlu0 0
        %1041 = vperm.xlu0 %1040, %v998
        %v1042 = vpop.permute.xlu0 %1041
        %1045 = vset.pattern.permute.xlu0 0
        %1046 = vperm.xlu0 %1045, %v999
        %v1047 = vpop.permute.xlu0 %1046
        %1050 = vset.pattern.permute.xlu0 0
        %1051 = vperm.xlu0 %1050, %v1000
        %v1052 = vpop.permute.xlu0 %1051
        %1055 = vset.pattern.permute.xlu0 0
        %1056 = vperm.xlu0 %1055, %v1001
        %v1057 = vpop.permute.xlu0 %1056
        %1060 = vset.pattern.permute.xlu0 0
        %1061 = vperm.xlu0 %1060, %v1002
        %v1062 = vpop.permute.xlu0 %1061
        %1065 = vset.pattern.permute.xlu0 0
        %1066 = vperm.xlu0 %1065, %v1003
        %v1067 = vpop.permute.xlu0 %1066
        %1070 = vset.pattern.permute.xlu0 0
        %1071 = vperm.xlu0 %1070, %v1004
        %v1072 = vpop.permute.xlu0 %1071
        %1075 = vset.pattern.permute.xlu0 0
        %1076 = vperm.xlu0 %1075, %v1005
        %v1077 = vpop.permute.xlu0 %1076
        %1080 = vset.pattern.permute.xlu0 0
        %1081 = vperm.xlu0 %1080, %v1006
        %v1082 = vpop.permute.xlu0 %1081
        %1085 = vset.pattern.permute.xlu0 0
        %1086 = vperm.xlu0 %1085, %v1007
        %v1087 = vpop.permute.xlu0 %1086
        %1090 = vset.pattern.permute.xlu0 0
        %1091 = vperm.xlu0 %1090, %v1008
        %v1092 = vpop.permute.xlu0 %1091
        %1095 = vset.pattern.permute.xlu0 0
        %1096 = vperm.xlu0 %1095, %v1009
        %v1097 = vpop.permute.xlu0 %1096
        %1100 = vset.pattern.permute.xlu0 0
        %1101 = vperm.xlu0 %1100, %v1010
        %v1102 = vpop.permute.xlu0 %1101
        %1105 = vset.pattern.permute.xlu0 0
        %1106 = vperm.xlu0 %1105, %v1011
        %v1107 = vpop.permute.xlu0 %1106
        %1110 = vset.pattern.permute.xlu0 0
        %1111 = vperm.xlu0 %1110, %v1012
        %v1112 = vpop.permute.xlu0 %1111
        %1115 = vset.pattern.permute.xlu0 0
        %1116 = vperm.xlu0 %1115, %v1013
        %v1117 = vpop.permute.xlu0 %1116
        %1120 = vset.pattern.permute.xlu0 0
        %1121 = vperm.xlu0 %1120, %v1014
        %v1122 = vpop.permute.xlu0 %1121
        %1125 = vset.pattern.permute.xlu0 0
        %1126 = vperm.xlu0 %1125, %v1015
        %v1127 = vpop.permute.xlu0 %1126
        %1130 = vset.pattern.permute.xlu0 0
        %1131 = vperm.xlu0 %1130, %v1016
        %v1132 = vpop.permute.xlu0 %1131
        %1135 = vset.pattern.permute.xlu0 0
        %1136 = vperm.xlu0 %1135, %v1017
        %v1137 = vpop.permute.xlu0 %1136
        %1140 = vset.pattern.permute.xlu0 0
        %1141 = vperm.xlu0 %1140, %v1018
        %v1142 = vpop.permute.xlu0 %1141
        %1145 = vset.pattern.permute.xlu0 0
        %1146 = vperm.xlu0 %1145, %v1019
        %v1147 = vpop.permute.xlu0 %1146
        %1150 = vset.pattern.permute.xlu0 0
        %1151 = vperm.xlu0 %1150, %v1020
        %v1152 = vpop.permute.xlu0 %1151
        %1155 = vset.pattern.permute.xlu0 0
        %1156 = vperm.xlu0 %1155, %v1021
        %v1157 = vpop.permute.xlu0 %1156
        %1160 = vset.pattern.permute.xlu0 0
        %1161 = vperm.xlu0 %1160, %v1022
        %v1162 = vpop.permute.xlu0 %1161
        %1165 = vset.pattern.permute.xlu0 0
        %1166 = vperm.xlu0 %1165, %v1023
        %v1167 = vpop.permute.xlu0 %1166
        %1170 = vset.pattern.permute.xlu0 0
        %1171 = vperm.xlu0 %1170, %v1024
        %v1172 = vpop.permute.xlu0 %1171
        %1175 = vset.pattern.permute.xlu0 0
        %1176 = vperm.xlu0 %1175, %v1025
        %v1177 = vpop.permute.xlu0 %1176
        %1180 = vset.pattern.permute.xlu0 0
        %1181 = vperm.xlu0 %1180, %v1026
        %v1182 = vpop.permute.xlu0 %1181
        %1185 = vset.pattern.permute.xlu0 0
        %1186 = vperm.xlu0 %1185, %v1027
        %v1187 = vpop.permute.xlu0 %1186
        %v1190 = vlaneseq
        %v1191 = vshrl.u32 %v1190, 7
        %v1192 = vsub.s32 0, %v1191
        %v1193 = vrot.slane %v1028, %v1192
        %v1194 = vlaneseq
        %v1195 = vshrl.u32 %v1194, 7
        %v1196 = vsub.s32 1, %v1195
        %v1197 = vrot.slane %v1028, %v1196
        %v1198 = vlaneseq
        %v1199 = vshrl.u32 %v1198, 7
        %v1200 = vsub.s32 2, %v1199
        %v1201 = vrot.slane %v1028, %v1200
        %v1202 = vlaneseq
        %v1203 = vshrl.u32 %v1202, 7
        %v1204 = vsub.s32 3, %v1203
        %v1205 = vrot.slane %v1028, %v1204
        %vm1210 = vcmp.eq.f32.partialorder %v1032, %v1193
        %vm1211 = vcmp.eq.f32.partialorder %v1032, %v1197
        %vm1212 = vcmp.eq.f32.partialorder %v1032, %v1201
        %vm1213 = vcmp.eq.f32.partialorder %v1032, %v1205
        %vm1214 = vcmp.eq.f32.partialorder %v1037, %v1193
        %vm1215 = vcmp.eq.f32.partialorder %v1037, %v1197
        %vm1216 = vcmp.eq.f32.partialorder %v1037, %v1201
        %vm1217 = vcmp.eq.f32.partialorder %v1037, %v1205
        %vm1218 = vcmp.eq.f32.partialorder %v1042, %v1193
        %vm1219 = vcmp.eq.f32.partialorder %v1042, %v1197
        %vm1220 = vcmp.eq.f32.partialorder %v1042, %v1201
        %vm1221 = vcmp.eq.f32.partialorder %v1042, %v1205
        %vm1222 = vcmp.eq.f32.partialorder %v1047, %v1193
        %vm1223 = vcmp.eq.f32.partialorder %v1047, %v1197
        %vm1224 = vcmp.eq.f32.partialorder %v1047, %v1201
        %vm1225 = vcmp.eq.f32.partialorder %v1047, %v1205
        %vm1226 = vcmp.eq.f32.partialorder %v1052, %v1193
        %vm1227 = vcmp.eq.f32.partialorder %v1052, %v1197
        %vm1228 = vcmp.eq.f32.partialorder %v1052, %v1201
        %vm1229 = vcmp.eq.f32.partialorder %v1052, %v1205
        %vm1230 = vcmp.eq.f32.partialorder %v1057, %v1193
        %vm1231 = vcmp.eq.f32.partialorder %v1057, %v1197
        %vm1232 = vcmp.eq.f32.partialorder %v1057, %v1201
        %vm1233 = vcmp.eq.f32.partialorder %v1057, %v1205
        %vm1234 = vcmp.eq.f32.partialorder %v1062, %v1193
        %vm1235 = vcmp.eq.f32.partialorder %v1062, %v1197
        %vm1236 = vcmp.eq.f32.partialorder %v1062, %v1201
        %vm1237 = vcmp.eq.f32.partialorder %v1062, %v1205
        %vm1238 = vcmp.eq.f32.partialorder %v1067, %v1193
        %vm1239 = vcmp.eq.f32.partialorder %v1067, %v1197
        %vm1240 = vcmp.eq.f32.partialorder %v1067, %v1201
        %vm1241 = vcmp.eq.f32.partialorder %v1067, %v1205
        %vm1242 = vcmp.eq.f32.partialorder %v1072, %v1193
        %vm1243 = vcmp.eq.f32.partialorder %v1072, %v1197
        %vm1244 = vcmp.eq.f32.partialorder %v1072, %v1201
        %vm1245 = vcmp.eq.f32.partialorder %v1072, %v1205
        %vm1246 = vcmp.eq.f32.partialorder %v1077, %v1193
        %vm1247 = vcmp.eq.f32.partialorder %v1077, %v1197
        %vm1248 = vcmp.eq.f32.partialorder %v1077, %v1201
        %vm1249 = vcmp.eq.f32.partialorder %v1077, %v1205
        %vm1250 = vcmp.eq.f32.partialorder %v1082, %v1193
        %vm1251 = vcmp.eq.f32.partialorder %v1082, %v1197
        %vm1252 = vcmp.eq.f32.partialorder %v1082, %v1201
        %vm1253 = vcmp.eq.f32.partialorder %v1082, %v1205
        %vm1254 = vcmp.eq.f32.partialorder %v1087, %v1193
        %vm1255 = vcmp.eq.f32.partialorder %v1087, %v1197
        %vm1256 = vcmp.eq.f32.partialorder %v1087, %v1201
        %vm1257 = vcmp.eq.f32.partialorder %v1087, %v1205
        %vm1258 = vcmp.eq.f32.partialorder %v1092, %v1193
        %vm1259 = vcmp.eq.f32.partialorder %v1092, %v1197
        %vm1260 = vcmp.eq.f32.partialorder %v1092, %v1201
        %vm1261 = vcmp.eq.f32.partialorder %v1092, %v1205
        %vm1262 = vcmp.eq.f32.partialorder %v1097, %v1193
        %vm1263 = vcmp.eq.f32.partialorder %v1097, %v1197
        %vm1264 = vcmp.eq.f32.partialorder %v1097, %v1201
        %vm1265 = vcmp.eq.f32.partialorder %v1097, %v1205
        %vm1266 = vcmp.eq.f32.partialorder %v1102, %v1193
        %vm1267 = vcmp.eq.f32.partialorder %v1102, %v1197
        %vm1268 = vcmp.eq.f32.partialorder %v1102, %v1201
        %vm1269 = vcmp.eq.f32.partialorder %v1102, %v1205
        %vm1270 = vcmp.eq.f32.partialorder %v1107, %v1193
        %vm1271 = vcmp.eq.f32.partialorder %v1107, %v1197
        %vm1272 = vcmp.eq.f32.partialorder %v1107, %v1201
        %vm1273 = vcmp.eq.f32.partialorder %v1107, %v1205
        %vm1274 = vcmp.eq.f32.partialorder %v1112, %v1193
        %vm1275 = vcmp.eq.f32.partialorder %v1112, %v1197
        %vm1276 = vcmp.eq.f32.partialorder %v1112, %v1201
        %vm1277 = vcmp.eq.f32.partialorder %v1112, %v1205
        %vm1278 = vcmp.eq.f32.partialorder %v1117, %v1193
        %vm1279 = vcmp.eq.f32.partialorder %v1117, %v1197
        %vm1280 = vcmp.eq.f32.partialorder %v1117, %v1201
        %vm1281 = vcmp.eq.f32.partialorder %v1117, %v1205
        %vm1282 = vcmp.eq.f32.partialorder %v1122, %v1193
        %vm1283 = vcmp.eq.f32.partialorder %v1122, %v1197
        %vm1284 = vcmp.eq.f32.partialorder %v1122, %v1201
        %vm1285 = vcmp.eq.f32.partialorder %v1122, %v1205
        %vm1286 = vcmp.eq.f32.partialorder %v1127, %v1193
        %vm1287 = vcmp.eq.f32.partialorder %v1127, %v1197
        %vm1288 = vcmp.eq.f32.partialorder %v1127, %v1201
        %vm1289 = vcmp.eq.f32.partialorder %v1127, %v1205
        %vm1290 = vcmp.eq.f32.partialorder %v1132, %v1193
        %vm1291 = vcmp.eq.f32.partialorder %v1132, %v1197
        %vm1292 = vcmp.eq.f32.partialorder %v1132, %v1201
        %vm1293 = vcmp.eq.f32.partialorder %v1132, %v1205
        %vm1294 = vcmp.eq.f32.partialorder %v1137, %v1193
        %vm1295 = vcmp.eq.f32.partialorder %v1137, %v1197
        %vm1296 = vcmp.eq.f32.partialorder %v1137, %v1201
        %vm1297 = vcmp.eq.f32.partialorder %v1137, %v1205
        %vm1298 = vcmp.eq.f32.partialorder %v1142, %v1193
        %vm1299 = vcmp.eq.f32.partialorder %v1142, %v1197
        %vm1300 = vcmp.eq.f32.partialorder %v1142, %v1201
        %vm1301 = vcmp.eq.f32.partialorder %v1142, %v1205
        %vm1302 = vcmp.eq.f32.partialorder %v1147, %v1193
        %vm1303 = vcmp.eq.f32.partialorder %v1147, %v1197
        %vm1304 = vcmp.eq.f32.partialorder %v1147, %v1201
        %vm1305 = vcmp.eq.f32.partialorder %v1147, %v1205
        %vm1306 = vcmp.eq.f32.partialorder %v1152, %v1193
        %vm1307 = vcmp.eq.f32.partialorder %v1152, %v1197
        %vm1308 = vcmp.eq.f32.partialorder %v1152, %v1201
        %vm1309 = vcmp.eq.f32.partialorder %v1152, %v1205
        %vm1310 = vcmp.eq.f32.partialorder %v1157, %v1193
        %vm1311 = vcmp.eq.f32.partialorder %v1157, %v1197
        %vm1312 = vcmp.eq.f32.partialorder %v1157, %v1201
        %vm1313 = vcmp.eq.f32.partialorder %v1157, %v1205
        %vm1314 = vcmp.eq.f32.partialorder %v1162, %v1193
        %vm1315 = vcmp.eq.f32.partialorder %v1162, %v1197
        %vm1316 = vcmp.eq.f32.partialorder %v1162, %v1201
        %vm1317 = vcmp.eq.f32.partialorder %v1162, %v1205
        %vm1318 = vcmp.eq.f32.partialorder %v1167, %v1193
        %vm1319 = vcmp.eq.f32.partialorder %v1167, %v1197
        %vm1320 = vcmp.eq.f32.partialorder %v1167, %v1201
        %vm1321 = vcmp.eq.f32.partialorder %v1167, %v1205
        %vm1322 = vcmp.eq.f32.partialorder %v1172, %v1193
        %vm1323 = vcmp.eq.f32.partialorder %v1172, %v1197
        %vm1324 = vcmp.eq.f32.partialorder %v1172, %v1201
        %vm1325 = vcmp.eq.f32.partialorder %v1172, %v1205
        %vm1326 = vcmp.eq.f32.partialorder %v1177, %v1193
        %vm1327 = vcmp.eq.f32.partialorder %v1177, %v1197
        %vm1328 = vcmp.eq.f32.partialorder %v1177, %v1201
        %vm1329 = vcmp.eq.f32.partialorder %v1177, %v1205
        %vm1330 = vcmp.eq.f32.partialorder %v1182, %v1193
        %vm1331 = vcmp.eq.f32.partialorder %v1182, %v1197
        %vm1332 = vcmp.eq.f32.partialorder %v1182, %v1201
        %vm1333 = vcmp.eq.f32.partialorder %v1182, %v1205
        %vm1334 = vcmp.eq.f32.partialorder %v1187, %v1193
        %vm1335 = vcmp.eq.f32.partialorder %v1187, %v1197
        %vm1336 = vcmp.eq.f32.partialorder %v1187, %v1201
        %vm1337 = vcmp.eq.f32.partialorder %v1187, %v1205
        %v1338 = vlaneseq
        %v1339 = vand.u32 %v1338, 127
        %v1340 = vadd.s32 %v1339, 128
        %v1341 = vadd.s32 %v1339, 256
        %v1342 = vadd.s32 %v1339, 384
        %v1343 = vlaneseq
        %v1344 = vshrl.u32 %v1343, 7
        %v1345 = vadd.s32 %v1344, 8
        %v1346 = vadd.s32 %v1344, 16
        %v1347 = vadd.s32 %v1344, 24
        %v1348 = vadd.s32 %v1344, 32
        %v1349 = vadd.s32 %v1344, 40
        %v1350 = vadd.s32 %v1344, 48
        %v1351 = vadd.s32 %v1344, 56
        %v1352 = vadd.s32 %v1344, 64
        %v1353 = vadd.s32 %v1344, 72
        %v1354 = vadd.s32 %v1344, 80
        %v1355 = vadd.s32 %v1344, 88
        %v1356 = vadd.s32 %v1344, 96
        %v1357 = vadd.s32 %v1344, 104
        %v1358 = vadd.s32 %v1344, 112
        %v1359 = vadd.s32 %v1344, 120
        %v1360 = vadd.s32 %v1344, 128
        %v1361 = vadd.s32 %v1344, 136
        %v1362 = vadd.s32 %v1344, 144
        %v1363 = vadd.s32 %v1344, 152
        %v1364 = vadd.s32 %v1344, 160
        %v1365 = vadd.s32 %v1344, 168
        %v1366 = vadd.s32 %v1344, 176
        %v1367 = vadd.s32 %v1344, 184
        %v1368 = vadd.s32 %v1344, 192
        %v1369 = vadd.s32 %v1344, 200
        %v1370 = vadd.s32 %v1344, 208
        %v1371 = vadd.s32 %v1344, 216
        %v1372 = vadd.s32 %v1344, 224
        %v1373 = vadd.s32 %v1344, 232
        %v1374 = vadd.s32 %v1344, 240
        %v1375 = vadd.s32 %v1344, 248
        %v1376 = vstv %s221
        %v1377 = vadd.s32 %v1344, %v1376
        %v1378 = vadd.s32 %v1345, %v1376
        %v1379 = vadd.s32 %v1346, %v1376
        %v1380 = vadd.s32 %v1347, %v1376
        %v1381 = vadd.s32 %v1348, %v1376
        %v1382 = vadd.s32 %v1349, %v1376
        %v1383 = vadd.s32 %v1350, %v1376
        %v1384 = vadd.s32 %v1351, %v1376
        %v1385 = vadd.s32 %v1352, %v1376
        %v1386 = vadd.s32 %v1353, %v1376
        %v1387 = vadd.s32 %v1354, %v1376
        %v1388 = vadd.s32 %v1355, %v1376
        %v1389 = vadd.s32 %v1356, %v1376
        %v1390 = vadd.s32 %v1357, %v1376
        %v1391 = vadd.s32 %v1358, %v1376
        %v1392 = vadd.s32 %v1359, %v1376
        %v1393 = vadd.s32 %v1360, %v1376
        %v1394 = vadd.s32 %v1361, %v1376
        %v1395 = vadd.s32 %v1362, %v1376
        %v1396 = vadd.s32 %v1363, %v1376
        %v1397 = vadd.s32 %v1364, %v1376
        %v1398 = vadd.s32 %v1365, %v1376
        %v1399 = vadd.s32 %v1366, %v1376
        %v1400 = vadd.s32 %v1367, %v1376
        %v1401 = vadd.s32 %v1368, %v1376
        %v1402 = vadd.s32 %v1369, %v1376
        %v1403 = vadd.s32 %v1370, %v1376
        %v1404 = vadd.s32 %v1371, %v1376
        %v1405 = vadd.s32 %v1372, %v1376
        %v1406 = vadd.s32 %v1373, %v1376
        %v1407 = vadd.s32 %v1374, %v1376
        %v1408 = vadd.s32 %v1375, %v1376
        %vm1409 = vcmp.lt.s32.totalorder %v1339, 400
        %vm1410 = vcmp.lt.s32.totalorder %v1340, 400
        %vm1411 = vcmp.lt.s32.totalorder %v1341, 400
        %vm1412 = vcmp.lt.s32.totalorder %v1342, 400
        %v1413 = vmax.f32 %v645, %v647
        %v1414 = vmax.f32 %v1413, %v838
        %v1415 = vmax.f32 %v1414, %v840
        %1416 = vmax.xlane.f32.xlu0 %v1415
        %v1417 = vpop.xlane.xlu0 %1416
        %v1418 = vmax.f32 %v649, %v651
        %v1419 = vmax.f32 %v1418, %v842
        %v1420 = vmax.f32 %v1419, %v844
        %1421 = vmax.xlane.f32.xlu0 %v1420
        %v1422 = vpop.xlane.xlu0 %1421
        %v1423 = vmax.f32 %v655, %v657
        %v1424 = vmax.f32 %v1423, %v848
        %v1425 = vmax.f32 %v1424, %v850
        %1426 = vmax.xlane.f32.xlu0 %v1425
        %v1427 = vpop.xlane.xlu0 %1426
        %v1428 = vmax.f32 %v659, %v661
        %v1429 = vmax.f32 %v1428, %v852
        %v1430 = vmax.f32 %v1429, %v854
        %1431 = vmax.xlane.f32.xlu0 %v1430
        %v1432 = vpop.xlane.xlu0 %1431
        %v1433 = vmax.f32 %v665, %v667
        %v1434 = vmax.f32 %v1433, %v858
        %v1435 = vmax.f32 %v1434, %v860
        %1436 = vmax.xlane.f32.xlu0 %v1435
        %v1437 = vpop.xlane.xlu0 %1436
        %v1438 = vmax.f32 %v669, %v671
        %v1439 = vmax.f32 %v1438, %v862
        %v1440 = vmax.f32 %v1439, %v864
        %1441 = vmax.xlane.f32.xlu0 %v1440
        %v1442 = vpop.xlane.xlu0 %1441
        %v1443 = vmax.f32 %v675, %v677
        %v1444 = vmax.f32 %v1443, %v868
        %v1445 = vmax.f32 %v1444, %v870
        %1446 = vmax.xlane.f32.xlu0 %v1445
        %v1447 = vpop.xlane.xlu0 %1446
        %v1448 = vmax.f32 %v679, %v681
        %v1449 = vmax.f32 %v1448, %v872
        %v1450 = vmax.f32 %v1449, %v874
        %1451 = vmax.xlane.f32.xlu0 %v1450
        %v1452 = vpop.xlane.xlu0 %1451
        %v1453 = vmax.f32 %v685, %v687
        %v1454 = vmax.f32 %v1453, %v878
        %v1455 = vmax.f32 %v1454, %v880
        %1456 = vmax.xlane.f32.xlu0 %v1455
        %v1457 = vpop.xlane.xlu0 %1456
        %v1458 = vmax.f32 %v689, %v691
        %v1459 = vmax.f32 %v1458, %v882
        %v1460 = vmax.f32 %v1459, %v884
        %1461 = vmax.xlane.f32.xlu0 %v1460
        %v1462 = vpop.xlane.xlu0 %1461
        %v1463 = vmax.f32 %v695, %v697
        %v1464 = vmax.f32 %v1463, %v888
        %v1465 = vmax.f32 %v1464, %v890
        %1466 = vmax.xlane.f32.xlu0 %v1465
        %v1467 = vpop.xlane.xlu0 %1466
        %v1468 = vmax.f32 %v699, %v701
        %v1469 = vmax.f32 %v1468, %v892
        %v1470 = vmax.f32 %v1469, %v894
        %1471 = vmax.xlane.f32.xlu0 %v1470
        %v1472 = vpop.xlane.xlu0 %1471
        %v1473 = vmax.f32 %v705, %v707
        %v1474 = vmax.f32 %v1473, %v898
        %v1475 = vmax.f32 %v1474, %v900
        %1476 = vmax.xlane.f32.xlu0 %v1475
        %v1477 = vpop.xlane.xlu0 %1476
        %v1478 = vmax.f32 %v709, %v711
        %v1479 = vmax.f32 %v1478, %v902
        %v1480 = vmax.f32 %v1479, %v904
        %1481 = vmax.xlane.f32.xlu0 %v1480
        %v1482 = vpop.xlane.xlu0 %1481
        %v1483 = vmax.f32 %v715, %v717
        %v1484 = vmax.f32 %v1483, %v908
        %v1485 = vmax.f32 %v1484, %v910
        %1486 = vmax.xlane.f32.xlu0 %v1485
        %v1487 = vpop.xlane.xlu0 %1486
        %v1488 = vmax.f32 %v719, %v721
        %v1489 = vmax.f32 %v1488, %v912
        %v1490 = vmax.f32 %v1489, %v914
        %1491 = vmax.xlane.f32.xlu0 %v1490
        %v1492 = vpop.xlane.xlu0 %1491
        %v1493 = vmax.f32 %v725, %v727
        %v1494 = vmax.f32 %v1493, %v918
        %v1495 = vmax.f32 %v1494, %v920
        %1496 = vmax.xlane.f32.xlu0 %v1495
        %v1497 = vpop.xlane.xlu0 %1496
        %v1498 = vmax.f32 %v729, %v731
        %v1499 = vmax.f32 %v1498, %v922
        %v1500 = vmax.f32 %v1499, %v924
        %1501 = vmax.xlane.f32.xlu0 %v1500
        %v1502 = vpop.xlane.xlu0 %1501
        %v1503 = vmax.f32 %v735, %v737
        %v1504 = vmax.f32 %v1503, %v928
        %v1505 = vmax.f32 %v1504, %v930
        %1506 = vmax.xlane.f32.xlu0 %v1505
        %v1507 = vpop.xlane.xlu0 %1506
        %v1508 = vmax.f32 %v739, %v741
        %v1509 = vmax.f32 %v1508, %v932
        %v1510 = vmax.f32 %v1509, %v934
        %1511 = vmax.xlane.f32.xlu0 %v1510
        %v1512 = vpop.xlane.xlu0 %1511
        %v1513 = vmax.f32 %v745, %v747
        %v1514 = vmax.f32 %v1513, %v938
        %v1515 = vmax.f32 %v1514, %v940
        %1516 = vmax.xlane.f32.xlu0 %v1515
        %v1517 = vpop.xlane.xlu0 %1516
        %v1518 = vmax.f32 %v749, %v751
        %v1519 = vmax.f32 %v1518, %v942
        %v1520 = vmax.f32 %v1519, %v944
        %1521 = vmax.xlane.f32.xlu0 %v1520
        %v1522 = vpop.xlane.xlu0 %1521
        %v1523 = vmax.f32 %v755, %v757
        %v1524 = vmax.f32 %v1523, %v948
        %v1525 = vmax.f32 %v1524, %v950
        %1526 = vmax.xlane.f32.xlu0 %v1525
        %v1527 = vpop.xlane.xlu0 %1526
        %v1528 = vmax.f32 %v759, %v761
        %v1529 = vmax.f32 %v1528, %v952
        %v1530 = vmax.f32 %v1529, %v954
        %1531 = vmax.xlane.f32.xlu0 %v1530
        %v1532 = vpop.xlane.xlu0 %1531
        %v1533 = vmax.f32 %v765, %v767
        %v1534 = vmax.f32 %v1533, %v958
        %v1535 = vmax.f32 %v1534, %v960
        %1536 = vmax.xlane.f32.xlu0 %v1535
        %v1537 = vpop.xlane.xlu0 %1536
        %v1538 = vmax.f32 %v769, %v771
        %v1539 = vmax.f32 %v1538, %v962
        %v1540 = vmax.f32 %v1539, %v964
        %1541 = vmax.xlane.f32.xlu0 %v1540
        %v1542 = vpop.xlane.xlu0 %1541
        %v1543 = vmax.f32 %v775, %v777
        %v1544 = vmax.f32 %v1543, %v968
        %v1545 = vmax.f32 %v1544, %v970
        %1546 = vmax.xlane.f32.xlu0 %v1545
        %v1547 = vpop.xlane.xlu0 %1546
        %v1548 = vmax.f32 %v779, %v781
        %v1549 = vmax.f32 %v1548, %v972
        %v1550 = vmax.f32 %v1549, %v974
        %1551 = vmax.xlane.f32.xlu0 %v1550
        %v1552 = vpop.xlane.xlu0 %1551
        %v1553 = vmax.f32 %v785, %v787
        %v1554 = vmax.f32 %v1553, %v978
        %v1555 = vmax.f32 %v1554, %v980
        %1556 = vmax.xlane.f32.xlu0 %v1555
        %v1557 = vpop.xlane.xlu0 %1556
        %v1558 = vmax.f32 %v789, %v791
        %v1559 = vmax.f32 %v1558, %v982
        %v1560 = vmax.f32 %v1559, %v984
        %1561 = vmax.xlane.f32.xlu0 %v1560
        %v1562 = vpop.xlane.xlu0 %1561
        %v1563 = vmax.f32 %v795, %v797
        %v1564 = vmax.f32 %v1563, %v988
        %v1565 = vmax.f32 %v1564, %v990
        %1566 = vmax.xlane.f32.xlu0 %v1565
        %v1567 = vpop.xlane.xlu0 %1566
        %v1568 = vmax.f32 %v799, %v801
        %v1569 = vmax.f32 %v1568, %v992
        %v1570 = vmax.f32 %v1569, %v994
        %1571 = vmax.xlane.f32.xlu0 %v1570
        %v1572 = vpop.xlane.xlu0 %1571
        %v1573 = vsub.f32 %v645, %v1417
        %v1574 = vsub.f32 %v647, %v1417
        %v1575 = vsub.f32 %v838, %v1417
        %v1576 = vsub.f32 %v840, %v1417
        %v1577 = vsub.f32 %v649, %v1422
        %v1578 = vsub.f32 %v651, %v1422
        %v1579 = vsub.f32 %v842, %v1422
        %v1580 = vsub.f32 %v844, %v1422
        %v1581 = vsub.f32 %v655, %v1427
        %v1582 = vsub.f32 %v657, %v1427
        %v1583 = vsub.f32 %v848, %v1427
        %v1584 = vsub.f32 %v850, %v1427
        %v1585 = vsub.f32 %v659, %v1432
        %v1586 = vsub.f32 %v661, %v1432
        %v1587 = vsub.f32 %v852, %v1432
        %v1588 = vsub.f32 %v854, %v1432
        %v1589 = vsub.f32 %v665, %v1437
        %v1590 = vsub.f32 %v667, %v1437
        %v1591 = vsub.f32 %v858, %v1437
        %v1592 = vsub.f32 %v860, %v1437
        %v1593 = vsub.f32 %v669, %v1442
        %v1594 = vsub.f32 %v671, %v1442
        %v1595 = vsub.f32 %v862, %v1442
        %v1596 = vsub.f32 %v864, %v1442
        %v1597 = vsub.f32 %v675, %v1447
        %v1598 = vsub.f32 %v677, %v1447
        %v1599 = vsub.f32 %v868, %v1447
        %v1600 = vsub.f32 %v870, %v1447
        %v1601 = vsub.f32 %v679, %v1452
        %v1602 = vsub.f32 %v681, %v1452
        %v1603 = vsub.f32 %v872, %v1452
        %v1604 = vsub.f32 %v874, %v1452
        %v1605 = vsub.f32 %v685, %v1457
        %v1606 = vsub.f32 %v687, %v1457
        %v1607 = vsub.f32 %v878, %v1457
        %v1608 = vsub.f32 %v880, %v1457
        %v1609 = vsub.f32 %v689, %v1462
        %v1610 = vsub.f32 %v691, %v1462
        %v1611 = vsub.f32 %v882, %v1462
        %v1612 = vsub.f32 %v884, %v1462
        %v1613 = vsub.f32 %v695, %v1467
        %v1614 = vsub.f32 %v697, %v1467
        %v1615 = vsub.f32 %v888, %v1467
        %v1616 = vsub.f32 %v890, %v1467
        %v1617 = vsub.f32 %v699, %v1472
        %v1618 = vsub.f32 %v701, %v1472
        %v1619 = vsub.f32 %v892, %v1472
        %v1620 = vsub.f32 %v894, %v1472
        %v1621 = vsub.f32 %v705, %v1477
        %v1622 = vsub.f32 %v707, %v1477
        %v1623 = vsub.f32 %v898, %v1477
        %v1624 = vsub.f32 %v900, %v1477
        %v1625 = vsub.f32 %v709, %v1482
        %v1626 = vsub.f32 %v711, %v1482
        %v1627 = vsub.f32 %v902, %v1482
        %v1628 = vsub.f32 %v904, %v1482
        %v1629 = vsub.f32 %v715, %v1487
        %v1630 = vsub.f32 %v717, %v1487
        %v1631 = vsub.f32 %v908, %v1487
        %v1632 = vsub.f32 %v910, %v1487
        %v1633 = vsub.f32 %v719, %v1492
        %v1634 = vsub.f32 %v721, %v1492
        %v1635 = vsub.f32 %v912, %v1492
        %v1636 = vsub.f32 %v914, %v1492
        %v1637 = vsub.f32 %v725, %v1497
        %v1638 = vsub.f32 %v727, %v1497
        %v1639 = vsub.f32 %v918, %v1497
        %v1640 = vsub.f32 %v920, %v1497
        %v1641 = vsub.f32 %v729, %v1502
        %v1642 = vsub.f32 %v731, %v1502
        %v1643 = vsub.f32 %v922, %v1502
        %v1644 = vsub.f32 %v924, %v1502
        %v1645 = vsub.f32 %v735, %v1507
        %v1646 = vsub.f32 %v737, %v1507
        %v1647 = vsub.f32 %v928, %v1507
        %v1648 = vsub.f32 %v930, %v1507
        %v1649 = vsub.f32 %v739, %v1512
        %v1650 = vsub.f32 %v741, %v1512
        %v1651 = vsub.f32 %v932, %v1512
        %v1652 = vsub.f32 %v934, %v1512
        %v1653 = vsub.f32 %v745, %v1517
        %v1654 = vsub.f32 %v747, %v1517
        %v1655 = vsub.f32 %v938, %v1517
        %v1656 = vsub.f32 %v940, %v1517
        %v1657 = vsub.f32 %v749, %v1522
        %v1658 = vsub.f32 %v751, %v1522
        %v1659 = vsub.f32 %v942, %v1522
        %v1660 = vsub.f32 %v944, %v1522
        %v1661 = vsub.f32 %v755, %v1527
        %v1662 = vsub.f32 %v757, %v1527
        %v1663 = vsub.f32 %v948, %v1527
        %v1664 = vsub.f32 %v950, %v1527
        %v1665 = vsub.f32 %v759, %v1532
        %v1666 = vsub.f32 %v761, %v1532
        %v1667 = vsub.f32 %v952, %v1532
        %v1668 = vsub.f32 %v954, %v1532
        %v1669 = vsub.f32 %v765, %v1537
        %v1670 = vsub.f32 %v767, %v1537
        %v1671 = vsub.f32 %v958, %v1537
        %v1672 = vsub.f32 %v960, %v1537
        %v1673 = vsub.f32 %v769, %v1542
        %v1674 = vsub.f32 %v771, %v1542
        %v1675 = vsub.f32 %v962, %v1542
        %v1676 = vsub.f32 %v964, %v1542
        %v1677 = vsub.f32 %v775, %v1547
        %v1678 = vsub.f32 %v777, %v1547
        %v1679 = vsub.f32 %v968, %v1547
        %v1680 = vsub.f32 %v970, %v1547
        %v1681 = vsub.f32 %v779, %v1552
        %v1682 = vsub.f32 %v781, %v1552
        %v1683 = vsub.f32 %v972, %v1552
        %v1684 = vsub.f32 %v974, %v1552
        %v1685 = vsub.f32 %v785, %v1557
        %v1686 = vsub.f32 %v787, %v1557
        %v1687 = vsub.f32 %v978, %v1557
        %v1688 = vsub.f32 %v980, %v1557
        %v1689 = vsub.f32 %v789, %v1562
        %v1690 = vsub.f32 %v791, %v1562
        %v1691 = vsub.f32 %v982, %v1562
        %v1692 = vsub.f32 %v984, %v1562
        %v1693 = vsub.f32 %v795, %v1567
        %v1694 = vsub.f32 %v797, %v1567
        %v1695 = vsub.f32 %v988, %v1567
        %v1696 = vsub.f32 %v990, %v1567
        %v1697 = vsub.f32 %v799, %v1572
        %v1698 = vsub.f32 %v801, %v1572
        %v1699 = vsub.f32 %v992, %v1572
        %v1700 = vsub.f32 %v994, %v1572
        %v1701 = vmul.f32 %v1573, 1.442695
        %v1702 = vpow.pop %v1701
        %v1703 = vmul.f32 %v1574, 1.442695
        %v1704 = vpow.pop %v1703
        %v1705 = vmul.f32 %v1575, 1.442695
        %v1706 = vpow.pop %v1705
        %v1707 = vmul.f32 %v1576, 1.442695
        %v1708 = vpow.pop %v1707
        %v1709 = vmul.f32 %v1577, 1.442695
        %v1710 = vpow.pop %v1709
        %v1711 = vmul.f32 %v1578, 1.442695
        %v1712 = vpow.pop %v1711
        %v1713 = vmul.f32 %v1579, 1.442695
        %v1714 = vpow.pop %v1713
        %v1715 = vmul.f32 %v1580, 1.442695
        %v1716 = vpow.pop %v1715
        %v1717 = vmul.f32 %v1581, 1.442695
        %v1718 = vpow.pop %v1717
        %v1719 = vmul.f32 %v1582, 1.442695
        %v1720 = vpow.pop %v1719
        %v1721 = vmul.f32 %v1583, 1.442695
        %v1722 = vpow.pop %v1721
        %v1723 = vmul.f32 %v1584, 1.442695
        %v1724 = vpow.pop %v1723
        %v1725 = vmul.f32 %v1585, 1.442695
        %v1726 = vpow.pop %v1725
        %v1727 = vmul.f32 %v1586, 1.442695
        %v1728 = vpow.pop %v1727
        %v1729 = vmul.f32 %v1587, 1.442695
        %v1730 = vpow.pop %v1729
        %v1731 = vmul.f32 %v1588, 1.442695
        %v1732 = vpow.pop %v1731
        %v1733 = vmul.f32 %v1589, 1.442695
        %v1734 = vpow.pop %v1733
        %v1735 = vmul.f32 %v1590, 1.442695
        %v1736 = vpow.pop %v1735
        %v1737 = vmul.f32 %v1591, 1.442695
        %v1738 = vpow.pop %v1737
        %v1739 = vmul.f32 %v1592, 1.442695
        %v1740 = vpow.pop %v1739
        %v1741 = vmul.f32 %v1593, 1.442695
        %v1742 = vpow.pop %v1741
        %v1743 = vmul.f32 %v1594, 1.442695
        %v1744 = vpow.pop %v1743
        %v1745 = vmul.f32 %v1595, 1.442695
        %v1746 = vpow.pop %v1745
        %v1747 = vmul.f32 %v1596, 1.442695
        %v1748 = vpow.pop %v1747
        %v1749 = vmul.f32 %v1597, 1.442695
        %v1750 = vpow.pop %v1749
        %v1751 = vmul.f32 %v1598, 1.442695
        %v1752 = vpow.pop %v1751
        %v1753 = vmul.f32 %v1599, 1.442695
        %v1754 = vpow.pop %v1753
        %v1755 = vmul.f32 %v1600, 1.442695
        %v1756 = vpow.pop %v1755
        %v1757 = vmul.f32 %v1601, 1.442695
        %v1758 = vpow.pop %v1757
        %v1759 = vmul.f32 %v1602, 1.442695
        %v1760 = vpow.pop %v1759
        %v1761 = vmul.f32 %v1603, 1.442695
        %v1762 = vpow.pop %v1761
        %v1763 = vmul.f32 %v1604, 1.442695
        %v1764 = vpow.pop %v1763
        %v1765 = vmul.f32 %v1605, 1.442695
        %v1766 = vpow.pop %v1765
        %v1767 = vmul.f32 %v1606, 1.442695
        %v1768 = vpow.pop %v1767
        %v1769 = vmul.f32 %v1607, 1.442695
        %v1770 = vpow.pop %v1769
        %v1771 = vmul.f32 %v1608, 1.442695
        %v1772 = vpow.pop %v1771
        %v1773 = vmul.f32 %v1609, 1.442695
        %v1774 = vpow.pop %v1773
        %v1775 = vmul.f32 %v1610, 1.442695
        %v1776 = vpow.pop %v1775
        %v1777 = vmul.f32 %v1611, 1.442695
        %v1778 = vpow.pop %v1777
        %v1779 = vmul.f32 %v1612, 1.442695
        %v1780 = vpow.pop %v1779
        %v1781 = vmul.f32 %v1613, 1.442695
        %v1782 = vpow.pop %v1781
        %v1783 = vmul.f32 %v1614, 1.442695
        %v1784 = vpow.pop %v1783
        %v1785 = vmul.f32 %v1615, 1.442695
        %v1786 = vpow.pop %v1785
        %v1787 = vmul.f32 %v1616, 1.442695
        %v1788 = vpow.pop %v1787
        %v1789 = vmul.f32 %v1617, 1.442695
        %v1790 = vpow.pop %v1789
        %v1791 = vmul.f32 %v1618, 1.442695
        %v1792 = vpow.pop %v1791
        %v1793 = vmul.f32 %v1619, 1.442695
        %v1794 = vpow.pop %v1793
        %v1795 = vmul.f32 %v1620, 1.442695
        %v1796 = vpow.pop %v1795
        %v1797 = vmul.f32 %v1621, 1.442695
        %v1798 = vpow.pop %v1797
        %v1799 = vmul.f32 %v1622, 1.442695
        %v1800 = vpow.pop %v1799
        %v1801 = vmul.f32 %v1623, 1.442695
        %v1802 = vpow.pop %v1801
        %v1803 = vmul.f32 %v1624, 1.442695
        %v1804 = vpow.pop %v1803
        %v1805 = vmul.f32 %v1625, 1.442695
        %v1806 = vpow.pop %v1805
        %v1807 = vmul.f32 %v1626, 1.442695
        %v1808 = vpow.pop %v1807
        %v1809 = vmul.f32 %v1627, 1.442695
        %v1810 = vpow.pop %v1809
        %v1811 = vmul.f32 %v1628, 1.442695
        %v1812 = vpow.pop %v1811
        %v1813 = vmul.f32 %v1629, 1.442695
        %v1814 = vpow.pop %v1813
        %v1815 = vmul.f32 %v1630, 1.442695
        %v1816 = vpow.pop %v1815
        %v1817 = vmul.f32 %v1631, 1.442695
        %v1818 = vpow.pop %v1817
        %v1819 = vmul.f32 %v1632, 1.442695
        %v1820 = vpow.pop %v1819
        %v1821 = vmul.f32 %v1633, 1.442695
        %v1822 = vpow.pop %v1821
        %v1823 = vmul.f32 %v1634, 1.442695
        %v1824 = vpow.pop %v1823
        %v1825 = vmul.f32 %v1635, 1.442695
        %v1826 = vpow.pop %v1825
        %v1827 = vmul.f32 %v1636, 1.442695
        %v1828 = vpow.pop %v1827
        %v1829 = vmul.f32 %v1637, 1.442695
        %v1830 = vpow.pop %v1829
        %v1831 = vmul.f32 %v1638, 1.442695
        %v1832 = vpow.pop %v1831
        %v1833 = vmul.f32 %v1639, 1.442695
        %v1834 = vpow.pop %v1833
        %v1835 = vmul.f32 %v1640, 1.442695
        %v1836 = vpow.pop %v1835
        %v1837 = vmul.f32 %v1641, 1.442695
        %v1838 = vpow.pop %v1837
        %v1839 = vmul.f32 %v1642, 1.442695
        %v1840 = vpow.pop %v1839
        %v1841 = vmul.f32 %v1643, 1.442695
        %v1842 = vpow.pop %v1841
        %v1843 = vmul.f32 %v1644, 1.442695
        %v1844 = vpow.pop %v1843
        %v1845 = vmul.f32 %v1645, 1.442695
        %v1846 = vpow.pop %v1845
        %v1847 = vmul.f32 %v1646, 1.442695
        %v1848 = vpow.pop %v1847
        %v1849 = vmul.f32 %v1647, 1.442695
        %v1850 = vpow.pop %v1849
        %v1851 = vmul.f32 %v1648, 1.442695
        %v1852 = vpow.pop %v1851
        %v1853 = vmul.f32 %v1649, 1.442695
        %v1854 = vpow.pop %v1853
        %v1855 = vmul.f32 %v1650, 1.442695
        %v1856 = vpow.pop %v1855
        %v1857 = vmul.f32 %v1651, 1.442695
        %v1858 = vpow.pop %v1857
        %v1859 = vmul.f32 %v1652, 1.442695
        %v1860 = vpow.pop %v1859
        %v1861 = vmul.f32 %v1653, 1.442695
        %v1862 = vpow.pop %v1861
        %v1863 = vmul.f32 %v1654, 1.442695
        %v1864 = vpow.pop %v1863
        %v1865 = vmul.f32 %v1655, 1.442695
        %v1866 = vpow.pop %v1865
        %v1867 = vmul.f32 %v1656, 1.442695
        %v1868 = vpow.pop %v1867
        %v1869 = vmul.f32 %v1657, 1.442695
        %v1870 = vpow.pop %v1869
        %v1871 = vmul.f32 %v1658, 1.442695
        %v1872 = vpow.pop %v1871
        %v1873 = vmul.f32 %v1659, 1.442695
        %v1874 = vpow.pop %v1873
        %v1875 = vmul.f32 %v1660, 1.442695
        %v1876 = vpow.pop %v1875
        %v1877 = vmul.f32 %v1661, 1.442695
        %v1878 = vpow.pop %v1877
        %v1879 = vmul.f32 %v1662, 1.442695
        %v1880 = vpow.pop %v1879
        %v1881 = vmul.f32 %v1663, 1.442695
        %v1882 = vpow.pop %v1881
        %v1883 = vmul.f32 %v1664, 1.442695
        %v1884 = vpow.pop %v1883
        %v1885 = vmul.f32 %v1665, 1.442695
        %v1886 = vpow.pop %v1885
        %v1887 = vmul.f32 %v1666, 1.442695
        %v1888 = vpow.pop %v1887
        %v1889 = vmul.f32 %v1667, 1.442695
        %v1890 = vpow.pop %v1889
        %v1891 = vmul.f32 %v1668, 1.442695
        %v1892 = vpow.pop %v1891
        %v1893 = vmul.f32 %v1669, 1.442695
        %v1894 = vpow.pop %v1893
        %v1895 = vmul.f32 %v1670, 1.442695
        %v1896 = vpow.pop %v1895
        %v1897 = vmul.f32 %v1671, 1.442695
        %v1898 = vpow.pop %v1897
        %v1899 = vmul.f32 %v1672, 1.442695
        %v1900 = vpow.pop %v1899
        %v1901 = vmul.f32 %v1673, 1.442695
        %v1902 = vpow.pop %v1901
        %v1903 = vmul.f32 %v1674, 1.442695
        %v1904 = vpow.pop %v1903
        %v1905 = vmul.f32 %v1675, 1.442695
        %v1906 = vpow.pop %v1905
        %v1907 = vmul.f32 %v1676, 1.442695
        %v1908 = vpow.pop %v1907
        %v1909 = vmul.f32 %v1677, 1.442695
        %v1910 = vpow.pop %v1909
        %v1911 = vmul.f32 %v1678, 1.442695
        %v1912 = vpow.pop %v1911
        %v1913 = vmul.f32 %v1679, 1.442695
        %v1914 = vpow.pop %v1913
        %v1915 = vmul.f32 %v1680, 1.442695
        %v1916 = vpow.pop %v1915
        %v1917 = vmul.f32 %v1681, 1.442695
        %v1918 = vpow.pop %v1917
        %v1919 = vmul.f32 %v1682, 1.442695
        %v1920 = vpow.pop %v1919
        %v1921 = vmul.f32 %v1683, 1.442695
        %v1922 = vpow.pop %v1921
        %v1923 = vmul.f32 %v1684, 1.442695
        %v1924 = vpow.pop %v1923
        %v1925 = vmul.f32 %v1685, 1.442695
        %v1926 = vpow.pop %v1925
        %v1927 = vmul.f32 %v1686, 1.442695
        %v1928 = vpow.pop %v1927
        %v1929 = vmul.f32 %v1687, 1.442695
        %v1930 = vpow.pop %v1929
        %v1931 = vmul.f32 %v1688, 1.442695
        %v1932 = vpow.pop %v1931
        %v1933 = vmul.f32 %v1689, 1.442695
        %v1934 = vpow.pop %v1933
        %v1935 = vmul.f32 %v1690, 1.442695
        %v1936 = vpow.pop %v1935
        %v1937 = vmul.f32 %v1691, 1.442695
        %v1938 = vpow.pop %v1937
        %v1939 = vmul.f32 %v1692, 1.442695
        %v1940 = vpow.pop %v1939
        %v1941 = vmul.f32 %v1693, 1.442695
        %v1942 = vpow.pop %v1941
        %v1943 = vmul.f32 %v1694, 1.442695
        %v1944 = vpow.pop %v1943
        %v1945 = vmul.f32 %v1695, 1.442695
        %v1946 = vpow.pop %v1945
        %v1947 = vmul.f32 %v1696, 1.442695
        %v1948 = vpow.pop %v1947
        %v1949 = vmul.f32 %v1697, 1.442695
        %v1950 = vpow.pop %v1949
        %v1951 = vmul.f32 %v1698, 1.442695
        %v1952 = vpow.pop %v1951
        %v1953 = vmul.f32 %v1699, 1.442695
        %v1954 = vpow.pop %v1953
        %v1955 = vmul.f32 %v1700, 1.442695
        %v1956 = vpow.pop %v1955
        %vm1957 = vmxor %vm1210, 1
        %vm1958 = vmxor %vm1211, 1
        %vm1959 = vmxor %vm1212, 1
        %vm1960 = vmxor %vm1213, 1
        %vm1961 = vmxor %vm1214, 1
        %vm1962 = vmxor %vm1215, 1
        %vm1963 = vmxor %vm1216, 1
        %vm1964 = vmxor %vm1217, 1
        %vm1965 = vmxor %vm1218, 1
        %vm1966 = vmxor %vm1219, 1
        %vm1967 = vmxor %vm1220, 1
        %vm1968 = vmxor %vm1221, 1
        %vm1969 = vmxor %vm1222, 1
        %vm1970 = vmxor %vm1223, 1
        %vm1971 = vmxor %vm1224, 1
        %vm1972 = vmxor %vm1225, 1
        %vm1973 = vmxor %vm1226, 1
        %vm1974 = vmxor %vm1227, 1
        %vm1975 = vmxor %vm1228, 1
        %vm1976 = vmxor %vm1229, 1
        %vm1977 = vmxor %vm1230, 1
        %vm1978 = vmxor %vm1231, 1
        %vm1979 = vmxor %vm1232, 1
        %vm1980 = vmxor %vm1233, 1
        %vm1981 = vmxor %vm1234, 1
        %vm1982 = vmxor %vm1235, 1
        %vm1983 = vmxor %vm1236, 1
        %vm1984 = vmxor %vm1237, 1
        %vm1985 = vmxor %vm1238, 1
        %vm1986 = vmxor %vm1239, 1
        %vm1987 = vmxor %vm1240, 1
        %vm1988 = vmxor %vm1241, 1
        %vm1989 = vmxor %vm1242, 1
        %vm1990 = vmxor %vm1243, 1
        %vm1991 = vmxor %vm1244, 1
        %vm1992 = vmxor %vm1245, 1
        %vm1993 = vmxor %vm1246, 1
        %vm1994 = vmxor %vm1247, 1
        %vm1995 = vmxor %vm1248, 1
        %vm1996 = vmxor %vm1249, 1
        %vm1997 = vmxor %vm1250, 1
        %vm1998 = vmxor %vm1251, 1
        %vm1999 = vmxor %vm1252, 1
        %vm2000 = vmxor %vm1253, 1
        %vm2001 = vmxor %vm1254, 1
        %vm2002 = vmxor %vm1255, 1
        %vm2003 = vmxor %vm1256, 1
        %vm2004 = vmxor %vm1257, 1
        %vm2005 = vmxor %vm1258, 1
        %vm2006 = vmxor %vm1259, 1
        %vm2007 = vmxor %vm1260, 1
        %vm2008 = vmxor %vm1261, 1
        %vm2009 = vmxor %vm1262, 1
        %vm2010 = vmxor %vm1263, 1
        %vm2011 = vmxor %vm1264, 1
        %vm2012 = vmxor %vm1265, 1
        %vm2013 = vmxor %vm1266, 1
        %vm2014 = vmxor %vm1267, 1
        %vm2015 = vmxor %vm1268, 1
        %vm2016 = vmxor %vm1269, 1
        %vm2017 = vmxor %vm1270, 1
        %vm2018 = vmxor %vm1271, 1
        %vm2019 = vmxor %vm1272, 1
        %vm2020 = vmxor %vm1273, 1
        %vm2021 = vmxor %vm1274, 1
        %vm2022 = vmxor %vm1275, 1
        %vm2023 = vmxor %vm1276, 1
        %vm2024 = vmxor %vm1277, 1
        %vm2025 = vmxor %vm1278, 1
        %vm2026 = vmxor %vm1279, 1
        %vm2027 = vmxor %vm1280, 1
        %vm2028 = vmxor %vm1281, 1
        %vm2029 = vmxor %vm1282, 1
        %vm2030 = vmxor %vm1283, 1
        %vm2031 = vmxor %vm1284, 1
        %vm2032 = vmxor %vm1285, 1
        %vm2033 = vmxor %vm1286, 1
        %vm2034 = vmxor %vm1287, 1
        %vm2035 = vmxor %vm1288, 1
        %vm2036 = vmxor %vm1289, 1
        %vm2037 = vmxor %vm1290, 1
        %vm2038 = vmxor %vm1291, 1
        %vm2039 = vmxor %vm1292, 1
        %vm2040 = vmxor %vm1293, 1
        %vm2041 = vmxor %vm1294, 1
        %vm2042 = vmxor %vm1295, 1
        %vm2043 = vmxor %vm1296, 1
        %vm2044 = vmxor %vm1297, 1
        %vm2045 = vmxor %vm1298, 1
        %vm2046 = vmxor %vm1299, 1
        %vm2047 = vmxor %vm1300, 1
        %vm2048 = vmxor %vm1301, 1
        %vm2049 = vmxor %vm1302, 1
        %vm2050 = vmxor %vm1303, 1
        %vm2051 = vmxor %vm1304, 1
        %vm2052 = vmxor %vm1305, 1
        %vm2053 = vmxor %vm1306, 1
        %vm2054 = vmxor %vm1307, 1
        %vm2055 = vmxor %vm1308, 1
        %vm2056 = vmxor %vm1309, 1
        %vm2057 = vmxor %vm1310, 1
        %vm2058 = vmxor %vm1311, 1
        %vm2059 = vmxor %vm1312, 1
        %vm2060 = vmxor %vm1313, 1
        %vm2061 = vmxor %vm1314, 1
        %vm2062 = vmxor %vm1315, 1
        %vm2063 = vmxor %vm1316, 1
        %vm2064 = vmxor %vm1317, 1
        %vm2065 = vmxor %vm1318, 1
        %vm2066 = vmxor %vm1319, 1
        %vm2067 = vmxor %vm1320, 1
        %vm2068 = vmxor %vm1321, 1
        %vm2069 = vmxor %vm1322, 1
        %vm2070 = vmxor %vm1323, 1
        %vm2071 = vmxor %vm1324, 1
        %vm2072 = vmxor %vm1325, 1
        %vm2073 = vmxor %vm1326, 1
        %vm2074 = vmxor %vm1327, 1
        %vm2075 = vmxor %vm1328, 1
        %vm2076 = vmxor %vm1329, 1
        %vm2077 = vmxor %vm1330, 1
        %vm2078 = vmxor %vm1331, 1
        %vm2079 = vmxor %vm1332, 1
        %vm2080 = vmxor %vm1333, 1
        %vm2081 = vmxor %vm1334, 1
        %vm2082 = vmxor %vm1335, 1
        %vm2083 = vmxor %vm1336, 1
        %vm2084 = vmxor %vm1337, 1
        %v2085 = vsel %vm1409, 1, 0
        %v2086 = vsel %vm1410, 1, 0
        %v2087 = vsel %vm1411, 1, 0
        %v2088 = vsel %vm1412, 1, 0
        %vm2089 = vcmp.eq.s32.totalorder %v2085, 1
        %vm2090 = vcmp.eq.s32.totalorder %v2086, 1
        %vm2091 = vcmp.eq.s32.totalorder %v2087, 1
        %vm2092 = vcmp.eq.s32.totalorder %v2088, 1
        %vm2093 = vmand %vm1957, %vm2089
        %vm2094 = vmand %vm1958, %vm2090
        %vm2095 = vmand %vm1959, %vm2091
        %vm2096 = vmand %vm1960, %vm2092
        %vm2097 = vmand %vm1961, %vm2089
        %vm2098 = vmand %vm1962, %vm2090
        %vm2099 = vmand %vm1963, %vm2091
        %vm2100 = vmand %vm1964, %vm2092
        %vm2101 = vmand %vm1965, %vm2089
        %vm2102 = vmand %vm1966, %vm2090
        %vm2103 = vmand %vm1967, %vm2091
        %vm2104 = vmand %vm1968, %vm2092
        %vm2105 = vmand %vm1969, %vm2089
        %vm2106 = vmand %vm1970, %vm2090
        %vm2107 = vmand %vm1971, %vm2091
        %vm2108 = vmand %vm1972, %vm2092
        %vm2109 = vmand %vm1973, %vm2089
        %vm2110 = vmand %vm1974, %vm2090
        %vm2111 = vmand %vm1975, %vm2091
        %vm2112 = vmand %vm1976, %vm2092
        %vm2113 = vmand %vm1977, %vm2089
        %vm2114 = vmand %vm1978, %vm2090
        %vm2115 = vmand %vm1979, %vm2091
        %vm2116 = vmand %vm1980, %vm2092
        %vm2117 = vmand %vm1981, %vm2089
        %vm2118 = vmand %vm1982, %vm2090
        %vm2119 = vmand %vm1983, %vm2091
        %vm2120 = vmand %vm1984, %vm2092
        %vm2121 = vmand %vm1985, %vm2089
        %vm2122 = vmand %vm1986, %vm2090
        %vm2123 = vmand %vm1987, %vm2091
        %vm2124 = vmand %vm1988, %vm2092
        %vm2125 = vmand %vm1989, %vm2089
        %vm2126 = vmand %vm1990, %vm2090
        %vm2127 = vmand %vm1991, %vm2091
        %vm2128 = vmand %vm1992, %vm2092
        %vm2129 = vmand %vm1993, %vm2089
        %vm2130 = vmand %vm1994, %vm2090
        %vm2131 = vmand %vm1995, %vm2091
        %vm2132 = vmand %vm1996, %vm2092
        %vm2133 = vmand %vm1997, %vm2089
        %vm2134 = vmand %vm1998, %vm2090
        %vm2135 = vmand %vm1999, %vm2091
        %vm2136 = vmand %vm2000, %vm2092
        %vm2137 = vmand %vm2001, %vm2089
        %vm2138 = vmand %vm2002, %vm2090
        %vm2139 = vmand %vm2003, %vm2091
        %vm2140 = vmand %vm2004, %vm2092
        %vm2141 = vmand %vm2005, %vm2089
        %vm2142 = vmand %vm2006, %vm2090
        %vm2143 = vmand %vm2007, %vm2091
        %vm2144 = vmand %vm2008, %vm2092
        %vm2145 = vmand %vm2009, %vm2089
        %vm2146 = vmand %vm2010, %vm2090
        %vm2147 = vmand %vm2011, %vm2091
        %vm2148 = vmand %vm2012, %vm2092
        %vm2149 = vmand %vm2013, %vm2089
        %vm2150 = vmand %vm2014, %vm2090
        %vm2151 = vmand %vm2015, %vm2091
        %vm2152 = vmand %vm2016, %vm2092
        %vm2153 = vmand %vm2017, %vm2089
        %vm2154 = vmand %vm2018, %vm2090
        %vm2155 = vmand %vm2019, %vm2091
        %vm2156 = vmand %vm2020, %vm2092
        %vm2157 = vmand %vm2021, %vm2089
        %vm2158 = vmand %vm2022, %vm2090
        %vm2159 = vmand %vm2023, %vm2091
        %vm2160 = vmand %vm2024, %vm2092
        %vm2161 = vmand %vm2025, %vm2089
        %vm2162 = vmand %vm2026, %vm2090
        %vm2163 = vmand %vm2027, %vm2091
        %vm2164 = vmand %vm2028, %vm2092
        %vm2165 = vmand %vm2029, %vm2089
        %vm2166 = vmand %vm2030, %vm2090
        %vm2167 = vmand %vm2031, %vm2091
        %vm2168 = vmand %vm2032, %vm2092
        %vm2169 = vmand %vm2033, %vm2089
        %vm2170 = vmand %vm2034, %vm2090
        %vm2171 = vmand %vm2035, %vm2091
        %vm2172 = vmand %vm2036, %vm2092
        %vm2173 = vmand %vm2037, %vm2089
        %vm2174 = vmand %vm2038, %vm2090
        %vm2175 = vmand %vm2039, %vm2091
        %vm2176 = vmand %vm2040, %vm2092
        %vm2177 = vmand %vm2041, %vm2089
        %vm2178 = vmand %vm2042, %vm2090
        %vm2179 = vmand %vm2043, %vm2091
        %vm2180 = vmand %vm2044, %vm2092
        %vm2181 = vmand %vm2045, %vm2089
        %vm2182 = vmand %vm2046, %vm2090
        %vm2183 = vmand %vm2047, %vm2091
        %vm2184 = vmand %vm2048, %vm2092
        %vm2185 = vmand %vm2049, %vm2089
        %vm2186 = vmand %vm2050, %vm2090
        %vm2187 = vmand %vm2051, %vm2091
        %vm2188 = vmand %vm2052, %vm2092
        %vm2189 = vmand %vm2053, %vm2089
        %vm2190 = vmand %vm2054, %vm2090
        %vm2191 = vmand %vm2055, %vm2091
        %vm2192 = vmand %vm2056, %vm2092
        %vm2193 = vmand %vm2057, %vm2089
        %vm2194 = vmand %vm2058, %vm2090
        %vm2195 = vmand %vm2059, %vm2091
        %vm2196 = vmand %vm2060, %vm2092
        %vm2197 = vmand %vm2061, %vm2089
        %vm2198 = vmand %vm2062, %vm2090
        %vm2199 = vmand %vm2063, %vm2091
        %vm2200 = vmand %vm2064, %vm2092
        %vm2201 = vmand %vm2065, %vm2089
        %vm2202 = vmand %vm2066, %vm2090
        %vm2203 = vmand %vm2067, %vm2091
        %vm2204 = vmand %vm2068, %vm2092
        %vm2205 = vmand %vm2069, %vm2089
        %vm2206 = vmand %vm2070, %vm2090
        %vm2207 = vmand %vm2071, %vm2091
        %vm2208 = vmand %vm2072, %vm2092
        %vm2209 = vmand %vm2073, %vm2089
        %vm2210 = vmand %vm2074, %vm2090
        %vm2211 = vmand %vm2075, %vm2091
        %vm2212 = vmand %vm2076, %vm2092
        %vm2213 = vmand %vm2077, %vm2089
        %vm2214 = vmand %vm2078, %vm2090
        %vm2215 = vmand %vm2079, %vm2091
        %vm2216 = vmand %vm2080, %vm2092
        %vm2217 = vmand %vm2081, %vm2089
        %vm2218 = vmand %vm2082, %vm2090
        %vm2219 = vmand %vm2083, %vm2091
        %vm2220 = vmand %vm2084, %vm2092
        %v2221 = vsel %vm2093, %v1702, 0.0
        %v2222 = vsel %vm2094, %v1704, 0.0
        %v2223 = vsel %vm2095, %v1706, 0.0
        %v2224 = vsel %vm2096, %v1708, 0.0
        %v2225 = vsel %vm2097, %v1710, 0.0
        %v2226 = vsel %vm2098, %v1712, 0.0
        %v2227 = vsel %vm2099, %v1714, 0.0
        %v2228 = vsel %vm2100, %v1716, 0.0
        %v2229 = vsel %vm2101, %v1718, 0.0
        %v2230 = vsel %vm2102, %v1720, 0.0
        %v2231 = vsel %vm2103, %v1722, 0.0
        %v2232 = vsel %vm2104, %v1724, 0.0
        %v2233 = vsel %vm2105, %v1726, 0.0
        %v2234 = vsel %vm2106, %v1728, 0.0
        %v2235 = vsel %vm2107, %v1730, 0.0
        %v2236 = vsel %vm2108, %v1732, 0.0
        %v2237 = vsel %vm2109, %v1734, 0.0
        %v2238 = vsel %vm2110, %v1736, 0.0
        %v2239 = vsel %vm2111, %v1738, 0.0
        %v2240 = vsel %vm2112, %v1740, 0.0
        %v2241 = vsel %vm2113, %v1742, 0.0
        %v2242 = vsel %vm2114, %v1744, 0.0
        %v2243 = vsel %vm2115, %v1746, 0.0
        %v2244 = vsel %vm2116, %v1748, 0.0
        %v2245 = vsel %vm2117, %v1750, 0.0
        %v2246 = vsel %vm2118, %v1752, 0.0
        %v2247 = vsel %vm2119, %v1754, 0.0
        %v2248 = vsel %vm2120, %v1756, 0.0
        %v2249 = vsel %vm2121, %v1758, 0.0
        %v2250 = vsel %vm2122, %v1760, 0.0
        %v2251 = vsel %vm2123, %v1762, 0.0
        %v2252 = vsel %vm2124, %v1764, 0.0
        %v2253 = vsel %vm2125, %v1766, 0.0
        %v2254 = vsel %vm2126, %v1768, 0.0
        %v2255 = vsel %vm2127, %v1770, 0.0
        %v2256 = vsel %vm2128, %v1772, 0.0
        %v2257 = vsel %vm2129, %v1774, 0.0
        %v2258 = vsel %vm2130, %v1776, 0.0
        %v2259 = vsel %vm2131, %v1778, 0.0
        %v2260 = vsel %vm2132, %v1780, 0.0
        %v2261 = vsel %vm2133, %v1782, 0.0
        %v2262 = vsel %vm2134, %v1784, 0.0
        %v2263 = vsel %vm2135, %v1786, 0.0
        %v2264 = vsel %vm2136, %v1788, 0.0
        %v2265 = vsel %vm2137, %v1790, 0.0
        %v2266 = vsel %vm2138, %v1792, 0.0
        %v2267 = vsel %vm2139, %v1794, 0.0
        %v2268 = vsel %vm2140, %v1796, 0.0
        %v2269 = vsel %vm2141, %v1798, 0.0
        %v2270 = vsel %vm2142, %v1800, 0.0
        %v2271 = vsel %vm2143, %v1802, 0.0
        %v2272 = vsel %vm2144, %v1804, 0.0
        %v2273 = vsel %vm2145, %v1806, 0.0
        %v2274 = vsel %vm2146, %v1808, 0.0
        %v2275 = vsel %vm2147, %v1810, 0.0
        %v2276 = vsel %vm2148, %v1812, 0.0
        %v2277 = vsel %vm2149, %v1814, 0.0
        %v2278 = vsel %vm2150, %v1816, 0.0
        %v2279 = vsel %vm2151, %v1818, 0.0
        %v2280 = vsel %vm2152, %v1820, 0.0
        %v2281 = vsel %vm2153, %v1822, 0.0
        %v2282 = vsel %vm2154, %v1824, 0.0
        %v2283 = vsel %vm2155, %v1826, 0.0
        %v2284 = vsel %vm2156, %v1828, 0.0
        %v2285 = vsel %vm2157, %v1830, 0.0
        %v2286 = vsel %vm2158, %v1832, 0.0
        %v2287 = vsel %vm2159, %v1834, 0.0
        %v2288 = vsel %vm2160, %v1836, 0.0
        %v2289 = vsel %vm2161, %v1838, 0.0
        %v2290 = vsel %vm2162, %v1840, 0.0
        %v2291 = vsel %vm2163, %v1842, 0.0
        %v2292 = vsel %vm2164, %v1844, 0.0
        %v2293 = vsel %vm2165, %v1846, 0.0
        %v2294 = vsel %vm2166, %v1848, 0.0
        %v2295 = vsel %vm2167, %v1850, 0.0
        %v2296 = vsel %vm2168, %v1852, 0.0
        %v2297 = vsel %vm2169, %v1854, 0.0
        %v2298 = vsel %vm2170, %v1856, 0.0
        %v2299 = vsel %vm2171, %v1858, 0.0
        %v2300 = vsel %vm2172, %v1860, 0.0
        %v2301 = vsel %vm2173, %v1862, 0.0
        %v2302 = vsel %vm2174, %v1864, 0.0
        %v2303 = vsel %vm2175, %v1866, 0.0
        %v2304 = vsel %vm2176, %v1868, 0.0
        %v2305 = vsel %vm2177, %v1870, 0.0
        %v2306 = vsel %vm2178, %v1872, 0.0
        %v2307 = vsel %vm2179, %v1874, 0.0
        %v2308 = vsel %vm2180, %v1876, 0.0
        %v2309 = vsel %vm2181, %v1878, 0.0
        %v2310 = vsel %vm2182, %v1880, 0.0
        %v2311 = vsel %vm2183, %v1882, 0.0
        %v2312 = vsel %vm2184, %v1884, 0.0
        %v2313 = vsel %vm2185, %v1886, 0.0
        %v2314 = vsel %vm2186, %v1888, 0.0
        %v2315 = vsel %vm2187, %v1890, 0.0
        %v2316 = vsel %vm2188, %v1892, 0.0
        %v2317 = vsel %vm2189, %v1894, 0.0
        %v2318 = vsel %vm2190, %v1896, 0.0
        %v2319 = vsel %vm2191, %v1898, 0.0
        %v2320 = vsel %vm2192, %v1900, 0.0
        %v2321 = vsel %vm2193, %v1902, 0.0
        %v2322 = vsel %vm2194, %v1904, 0.0
        %v2323 = vsel %vm2195, %v1906, 0.0
        %v2324 = vsel %vm2196, %v1908, 0.0
        %v2325 = vsel %vm2197, %v1910, 0.0
        %v2326 = vsel %vm2198, %v1912, 0.0
        %v2327 = vsel %vm2199, %v1914, 0.0
        %v2328 = vsel %vm2200, %v1916, 0.0
        %v2329 = vsel %vm2201, %v1918, 0.0
        %v2330 = vsel %vm2202, %v1920, 0.0
        %v2331 = vsel %vm2203, %v1922, 0.0
        %v2332 = vsel %vm2204, %v1924, 0.0
        %v2333 = vsel %vm2205, %v1926, 0.0
        %v2334 = vsel %vm2206, %v1928, 0.0
        %v2335 = vsel %vm2207, %v1930, 0.0
        %v2336 = vsel %vm2208, %v1932, 0.0
        %v2337 = vsel %vm2209, %v1934, 0.0
        %v2338 = vsel %vm2210, %v1936, 0.0
        %v2339 = vsel %vm2211, %v1938, 0.0
        %v2340 = vsel %vm2212, %v1940, 0.0
        %v2341 = vsel %vm2213, %v1942, 0.0
        %v2342 = vsel %vm2214, %v1944, 0.0
        %v2343 = vsel %vm2215, %v1946, 0.0
        %v2344 = vsel %vm2216, %v1948, 0.0
        %v2345 = vsel %vm2217, %v1950, 0.0
        %v2346 = vsel %vm2218, %v1952, 0.0
        %v2347 = vsel %vm2219, %v1954, 0.0
        %v2348 = vsel %vm2220, %v1956, 0.0
        %v2349 = vadd.f32 %v2221, %v2222
        %v2350 = vadd.f32 %v2349, %v2223
        %v2351 = vadd.f32 %v2350, %v2224
        %2352 = vadd.xlane.f32.xlu0 %v2351
        %v2353 = vpop.xlane.xlu0 %2352
        %v2354 = vadd.f32 %v2225, %v2226
        %v2355 = vadd.f32 %v2354, %v2227
        %v2356 = vadd.f32 %v2355, %v2228
        %2357 = vadd.xlane.f32.xlu0 %v2356
        %v2358 = vpop.xlane.xlu0 %2357
        %v2359 = vadd.f32 %v2229, %v2230
        %v2360 = vadd.f32 %v2359, %v2231
        %v2361 = vadd.f32 %v2360, %v2232
        %2362 = vadd.xlane.f32.xlu0 %v2361
        %v2363 = vpop.xlane.xlu0 %2362
        %v2364 = vadd.f32 %v2233, %v2234
        %v2365 = vadd.f32 %v2364, %v2235
        %v2366 = vadd.f32 %v2365, %v2236
        %2367 = vadd.xlane.f32.xlu0 %v2366
        %v2368 = vpop.xlane.xlu0 %2367
        %v2369 = vadd.f32 %v2237, %v2238
        %v2370 = vadd.f32 %v2369, %v2239
        %v2371 = vadd.f32 %v2370, %v2240
        %2372 = vadd.xlane.f32.xlu0 %v2371
        %v2373 = vpop.xlane.xlu0 %2372
        %v2374 = vadd.f32 %v2241, %v2242
        %v2375 = vadd.f32 %v2374, %v2243
        %v2376 = vadd.f32 %v2375, %v2244
        %2377 = vadd.xlane.f32.xlu0 %v2376
        %v2378 = vpop.xlane.xlu0 %2377
        %v2379 = vadd.f32 %v2245, %v2246
        %v2380 = vadd.f32 %v2379, %v2247
        %v2381 = vadd.f32 %v2380, %v2248
        %2382 = vadd.xlane.f32.xlu0 %v2381
        %v2383 = vpop.xlane.xlu0 %2382
        %v2384 = vadd.f32 %v2249, %v2250
        %v2385 = vadd.f32 %v2384, %v2251
        %v2386 = vadd.f32 %v2385, %v2252
        %2387 = vadd.xlane.f32.xlu0 %v2386
        %v2388 = vpop.xlane.xlu0 %2387
        %v2389 = vadd.f32 %v2253, %v2254
        %v2390 = vadd.f32 %v2389, %v2255
        %v2391 = vadd.f32 %v2390, %v2256
        %2392 = vadd.xlane.f32.xlu0 %v2391
        %v2393 = vpop.xlane.xlu0 %2392
        %v2394 = vadd.f32 %v2257, %v2258
        %v2395 = vadd.f32 %v2394, %v2259
        %v2396 = vadd.f32 %v2395, %v2260
        %2397 = vadd.xlane.f32.xlu0 %v2396
        %v2398 = vpop.xlane.xlu0 %2397
        %v2399 = vadd.f32 %v2261, %v2262
        %v2400 = vadd.f32 %v2399, %v2263
        %v2401 = vadd.f32 %v2400, %v2264
        %2402 = vadd.xlane.f32.xlu0 %v2401
        %v2403 = vpop.xlane.xlu0 %2402
        %v2404 = vadd.f32 %v2265, %v2266
        %v2405 = vadd.f32 %v2404, %v2267
        %v2406 = vadd.f32 %v2405, %v2268
        %2407 = vadd.xlane.f32.xlu0 %v2406
        %v2408 = vpop.xlane.xlu0 %2407
        %v2409 = vadd.f32 %v2269, %v2270
        %v2410 = vadd.f32 %v2409, %v2271
        %v2411 = vadd.f32 %v2410, %v2272
        %2412 = vadd.xlane.f32.xlu0 %v2411
        %v2413 = vpop.xlane.xlu0 %2412
        %v2414 = vadd.f32 %v2273, %v2274
        %v2415 = vadd.f32 %v2414, %v2275
        %v2416 = vadd.f32 %v2415, %v2276
        %2417 = vadd.xlane.f32.xlu0 %v2416
        %v2418 = vpop.xlane.xlu0 %2417
        %v2419 = vadd.f32 %v2277, %v2278
        %v2420 = vadd.f32 %v2419, %v2279
        %v2421 = vadd.f32 %v2420, %v2280
        %2422 = vadd.xlane.f32.xlu0 %v2421
        %v2423 = vpop.xlane.xlu0 %2422
        %v2424 = vadd.f32 %v2281, %v2282
        %v2425 = vadd.f32 %v2424, %v2283
        %v2426 = vadd.f32 %v2425, %v2284
        %2427 = vadd.xlane.f32.xlu0 %v2426
        %v2428 = vpop.xlane.xlu0 %2427
        %v2429 = vadd.f32 %v2285, %v2286
        %v2430 = vadd.f32 %v2429, %v2287
        %v2431 = vadd.f32 %v2430, %v2288
        %2432 = vadd.xlane.f32.xlu0 %v2431
        %v2433 = vpop.xlane.xlu0 %2432
        %v2434 = vadd.f32 %v2289, %v2290
        %v2435 = vadd.f32 %v2434, %v2291
        %v2436 = vadd.f32 %v2435, %v2292
        %2437 = vadd.xlane.f32.xlu0 %v2436
        %v2438 = vpop.xlane.xlu0 %2437
        %v2439 = vadd.f32 %v2293, %v2294
        %v2440 = vadd.f32 %v2439, %v2295
        %v2441 = vadd.f32 %v2440, %v2296
        %2442 = vadd.xlane.f32.xlu0 %v2441
        %v2443 = vpop.xlane.xlu0 %2442
        %v2444 = vadd.f32 %v2297, %v2298
        %v2445 = vadd.f32 %v2444, %v2299
        %v2446 = vadd.f32 %v2445, %v2300
        %2447 = vadd.xlane.f32.xlu0 %v2446
        %v2448 = vpop.xlane.xlu0 %2447
        %v2449 = vadd.f32 %v2301, %v2302
        %v2450 = vadd.f32 %v2449, %v2303
        %v2451 = vadd.f32 %v2450, %v2304
        %2452 = vadd.xlane.f32.xlu0 %v2451
        %v2453 = vpop.xlane.xlu0 %2452
        %v2454 = vadd.f32 %v2305, %v2306
        %v2455 = vadd.f32 %v2454, %v2307
        %v2456 = vadd.f32 %v2455, %v2308
        %2457 = vadd.xlane.f32.xlu0 %v2456
        %v2458 = vpop.xlane.xlu0 %2457
        %v2459 = vadd.f32 %v2309, %v2310
        %v2460 = vadd.f32 %v2459, %v2311
        %v2461 = vadd.f32 %v2460, %v2312
        %2462 = vadd.xlane.f32.xlu0 %v2461
        %v2463 = vpop.xlane.xlu0 %2462
        %v2464 = vadd.f32 %v2313, %v2314
        %v2465 = vadd.f32 %v2464, %v2315
        %v2466 = vadd.f32 %v2465, %v2316
        %2467 = vadd.xlane.f32.xlu0 %v2466
        %v2468 = vpop.xlane.xlu0 %2467
        %v2469 = vadd.f32 %v2317, %v2318
        %v2470 = vadd.f32 %v2469, %v2319
        %v2471 = vadd.f32 %v2470, %v2320
        %2472 = vadd.xlane.f32.xlu0 %v2471
        %v2473 = vpop.xlane.xlu0 %2472
        %v2474 = vadd.f32 %v2321, %v2322
        %v2475 = vadd.f32 %v2474, %v2323
        %v2476 = vadd.f32 %v2475, %v2324
        %2477 = vadd.xlane.f32.xlu0 %v2476
        %v2478 = vpop.xlane.xlu0 %2477
        %v2479 = vadd.f32 %v2325, %v2326
        %v2480 = vadd.f32 %v2479, %v2327
        %v2481 = vadd.f32 %v2480, %v2328
        %2482 = vadd.xlane.f32.xlu0 %v2481
        %v2483 = vpop.xlane.xlu0 %2482
        %v2484 = vadd.f32 %v2329, %v2330
        %v2485 = vadd.f32 %v2484, %v2331
        %v2486 = vadd.f32 %v2485, %v2332
        %2487 = vadd.xlane.f32.xlu0 %v2486
        %v2488 = vpop.xlane.xlu0 %2487
        %v2489 = vadd.f32 %v2333, %v2334
        %v2490 = vadd.f32 %v2489, %v2335
        %v2491 = vadd.f32 %v2490, %v2336
        %2492 = vadd.xlane.f32.xlu0 %v2491
        %v2493 = vpop.xlane.xlu0 %2492
        %v2494 = vadd.f32 %v2337, %v2338
        %v2495 = vadd.f32 %v2494, %v2339
        %v2496 = vadd.f32 %v2495, %v2340
        %2497 = vadd.xlane.f32.xlu0 %v2496
        %v2498 = vpop.xlane.xlu0 %2497
        %v2499 = vadd.f32 %v2341, %v2342
        %v2500 = vadd.f32 %v2499, %v2343
        %v2501 = vadd.f32 %v2500, %v2344
        %2502 = vadd.xlane.f32.xlu0 %v2501
        %v2503 = vpop.xlane.xlu0 %2502
        %v2504 = vadd.f32 %v2345, %v2346
        %v2505 = vadd.f32 %v2504, %v2347
        %v2506 = vadd.f32 %v2505, %v2348
        %2507 = vadd.xlane.f32.xlu0 %v2506
        %v2508 = vpop.xlane.xlu0 %2507
        %v2509 = vadd.f32 %v1702, %v2353
        %v2510 = vadd.f32 %v1704, %v2353
        %v2511 = vadd.f32 %v1706, %v2353
        %v2512 = vadd.f32 %v1708, %v2353
        %v2513 = vadd.f32 %v1710, %v2358
        %v2514 = vadd.f32 %v1712, %v2358
        %v2515 = vadd.f32 %v1714, %v2358
        %v2516 = vadd.f32 %v1716, %v2358
        %v2517 = vadd.f32 %v1718, %v2363
        %v2518 = vadd.f32 %v1720, %v2363
        %v2519 = vadd.f32 %v1722, %v2363
        %v2520 = vadd.f32 %v1724, %v2363
        %v2521 = vadd.f32 %v1726, %v2368
        %v2522 = vadd.f32 %v1728, %v2368
        %v2523 = vadd.f32 %v1730, %v2368
        %v2524 = vadd.f32 %v1732, %v2368
        %v2525 = vadd.f32 %v1734, %v2373
        %v2526 = vadd.f32 %v1736, %v2373
        %v2527 = vadd.f32 %v1738, %v2373
        %v2528 = vadd.f32 %v1740, %v2373
        %v2529 = vadd.f32 %v1742, %v2378
        %v2530 = vadd.f32 %v1744, %v2378
        %v2531 = vadd.f32 %v1746, %v2378
        %v2532 = vadd.f32 %v1748, %v2378
        %v2533 = vadd.f32 %v1750, %v2383
        %v2534 = vadd.f32 %v1752, %v2383
        %v2535 = vadd.f32 %v1754, %v2383
        %v2536 = vadd.f32 %v1756, %v2383
        %v2537 = vadd.f32 %v1758, %v2388
        %v2538 = vadd.f32 %v1760, %v2388
        %v2539 = vadd.f32 %v1762, %v2388
        %v2540 = vadd.f32 %v1764, %v2388
        %v2541 = vadd.f32 %v1766, %v2393
        %v2542 = vadd.f32 %v1768, %v2393
        %v2543 = vadd.f32 %v1770, %v2393
        %v2544 = vadd.f32 %v1772, %v2393
        %v2545 = vadd.f32 %v1774, %v2398
        %v2546 = vadd.f32 %v1776, %v2398
        %v2547 = vadd.f32 %v1778, %v2398
        %v2548 = vadd.f32 %v1780, %v2398
        %v2549 = vadd.f32 %v1782, %v2403
        %v2550 = vadd.f32 %v1784, %v2403
        %v2551 = vadd.f32 %v1786, %v2403
        %v2552 = vadd.f32 %v1788, %v2403
        %v2553 = vadd.f32 %v1790, %v2408
        %v2554 = vadd.f32 %v1792, %v2408
        %v2555 = vadd.f32 %v1794, %v2408
        %v2556 = vadd.f32 %v1796, %v2408
        %v2557 = vadd.f32 %v1798, %v2413
        %v2558 = vadd.f32 %v1800, %v2413
        %v2559 = vadd.f32 %v1802, %v2413
        %v2560 = vadd.f32 %v1804, %v2413
        %v2561 = vadd.f32 %v1806, %v2418
        %v2562 = vadd.f32 %v1808, %v2418
        %v2563 = vadd.f32 %v1810, %v2418
        %v2564 = vadd.f32 %v1812, %v2418
        %v2565 = vadd.f32 %v1814, %v2423
        %v2566 = vadd.f32 %v1816, %v2423
        %v2567 = vadd.f32 %v1818, %v2423
        %v2568 = vadd.f32 %v1820, %v2423
        %v2569 = vadd.f32 %v1822, %v2428
        %v2570 = vadd.f32 %v1824, %v2428
        %v2571 = vadd.f32 %v1826, %v2428
        %v2572 = vadd.f32 %v1828, %v2428
        %v2573 = vadd.f32 %v1830, %v2433
        %v2574 = vadd.f32 %v1832, %v2433
        %v2575 = vadd.f32 %v1834, %v2433
        %v2576 = vadd.f32 %v1836, %v2433
        %v2577 = vadd.f32 %v1838, %v2438
        %v2578 = vadd.f32 %v1840, %v2438
        %v2579 = vadd.f32 %v1842, %v2438
        %v2580 = vadd.f32 %v1844, %v2438
        %v2581 = vadd.f32 %v1846, %v2443
        %v2582 = vadd.f32 %v1848, %v2443
        %v2583 = vadd.f32 %v1850, %v2443
        %v2584 = vadd.f32 %v1852, %v2443
        %v2585 = vadd.f32 %v1854, %v2448
        %v2586 = vadd.f32 %v1856, %v2448
        %v2587 = vadd.f32 %v1858, %v2448
        %v2588 = vadd.f32 %v1860, %v2448
        %v2589 = vadd.f32 %v1862, %v2453
        %v2590 = vadd.f32 %v1864, %v2453
        %v2591 = vadd.f32 %v1866, %v2453
        %v2592 = vadd.f32 %v1868, %v2453
        %v2593 = vadd.f32 %v1870, %v2458
        %v2594 = vadd.f32 %v1872, %v2458
        %v2595 = vadd.f32 %v1874, %v2458
        %v2596 = vadd.f32 %v1876, %v2458
        %v2597 = vadd.f32 %v1878, %v2463
        %v2598 = vadd.f32 %v1880, %v2463
        %v2599 = vadd.f32 %v1882, %v2463
        %v2600 = vadd.f32 %v1884, %v2463
        %v2601 = vadd.f32 %v1886, %v2468
        %v2602 = vadd.f32 %v1888, %v2468
        %v2603 = vadd.f32 %v1890, %v2468
        %v2604 = vadd.f32 %v1892, %v2468
        %v2605 = vadd.f32 %v1894, %v2473
        %v2606 = vadd.f32 %v1896, %v2473
        %v2607 = vadd.f32 %v1898, %v2473
        %v2608 = vadd.f32 %v1900, %v2473
        %v2609 = vadd.f32 %v1902, %v2478
        %v2610 = vadd.f32 %v1904, %v2478
        %v2611 = vadd.f32 %v1906, %v2478
        %v2612 = vadd.f32 %v1908, %v2478
        %v2613 = vadd.f32 %v1910, %v2483
        %v2614 = vadd.f32 %v1912, %v2483
        %v2615 = vadd.f32 %v1914, %v2483
        %v2616 = vadd.f32 %v1916, %v2483
        %v2617 = vadd.f32 %v1918, %v2488
        %v2618 = vadd.f32 %v1920, %v2488
        %v2619 = vadd.f32 %v1922, %v2488
        %v2620 = vadd.f32 %v1924, %v2488
        %v2621 = vadd.f32 %v1926, %v2493
        %v2622 = vadd.f32 %v1928, %v2493
        %v2623 = vadd.f32 %v1930, %v2493
        %v2624 = vadd.f32 %v1932, %v2493
        %v2625 = vadd.f32 %v1934, %v2498
        %v2626 = vadd.f32 %v1936, %v2498
        %v2627 = vadd.f32 %v1938, %v2498
        %v2628 = vadd.f32 %v1940, %v2498
        %v2629 = vadd.f32 %v1942, %v2503
        %v2630 = vadd.f32 %v1944, %v2503
        %v2631 = vadd.f32 %v1946, %v2503
        %v2632 = vadd.f32 %v1948, %v2503
        %v2633 = vadd.f32 %v1950, %v2508
        %v2634 = vadd.f32 %v1952, %v2508
        %v2635 = vadd.f32 %v1954, %v2508
        %v2636 = vadd.f32 %v1956, %v2508
        %v2637 = vlog2.pop %v2509
        %v2638 = vmul.f32 %v2637, 0.6931472
        %v2639 = vlog2.pop %v2510
        %v2640 = vmul.f32 %v2639, 0.6931472
        %v2641 = vlog2.pop %v2511
        %v2642 = vmul.f32 %v2641, 0.6931472
        %v2643 = vlog2.pop %v2512
        %v2644 = vmul.f32 %v2643, 0.6931472
        %v2645 = vlog2.pop %v2513
        %v2646 = vmul.f32 %v2645, 0.6931472
        %v2647 = vlog2.pop %v2514
        %v2648 = vmul.f32 %v2647, 0.6931472
        %v2649 = vlog2.pop %v2515
        %v2650 = vmul.f32 %v2649, 0.6931472
        %v2651 = vlog2.pop %v2516
        %v2652 = vmul.f32 %v2651, 0.6931472
        %v2653 = vlog2.pop %v2517
        %v2654 = vmul.f32 %v2653, 0.6931472
        %v2655 = vlog2.pop %v2518
        %v2656 = vmul.f32 %v2655, 0.6931472
        %v2657 = vlog2.pop %v2519
        %v2658 = vmul.f32 %v2657, 0.6931472
        %v2659 = vlog2.pop %v2520
        %v2660 = vmul.f32 %v2659, 0.6931472
        %v2661 = vlog2.pop %v2521
        %v2662 = vmul.f32 %v2661, 0.6931472
        %v2663 = vlog2.pop %v2522
        %v2664 = vmul.f32 %v2663, 0.6931472
        %v2665 = vlog2.pop %v2523
        %v2666 = vmul.f32 %v2665, 0.6931472
        %v2667 = vlog2.pop %v2524
        %v2668 = vmul.f32 %v2667, 0.6931472
        %v2669 = vlog2.pop %v2525
        %v2670 = vmul.f32 %v2669, 0.6931472
        %v2671 = vlog2.pop %v2526
        %v2672 = vmul.f32 %v2671, 0.6931472
        %v2673 = vlog2.pop %v2527
        %v2674 = vmul.f32 %v2673, 0.6931472
        %v2675 = vlog2.pop %v2528
        %v2676 = vmul.f32 %v2675, 0.6931472
        %v2677 = vlog2.pop %v2529
        %v2678 = vmul.f32 %v2677, 0.6931472
        %v2679 = vlog2.pop %v2530
        %v2680 = vmul.f32 %v2679, 0.6931472
        %v2681 = vlog2.pop %v2531
        %v2682 = vmul.f32 %v2681, 0.6931472
        %v2683 = vlog2.pop %v2532
        %v2684 = vmul.f32 %v2683, 0.6931472
        %v2685 = vlog2.pop %v2533
        %v2686 = vmul.f32 %v2685, 0.6931472
        %v2687 = vlog2.pop %v2534
        %v2688 = vmul.f32 %v2687, 0.6931472
        %v2689 = vlog2.pop %v2535
        %v2690 = vmul.f32 %v2689, 0.6931472
        %v2691 = vlog2.pop %v2536
        %v2692 = vmul.f32 %v2691, 0.6931472
        %v2693 = vlog2.pop %v2537
        %v2694 = vmul.f32 %v2693, 0.6931472
        %v2695 = vlog2.pop %v2538
        %v2696 = vmul.f32 %v2695, 0.6931472
        %v2697 = vlog2.pop %v2539
        %v2698 = vmul.f32 %v2697, 0.6931472
        %v2699 = vlog2.pop %v2540
        %v2700 = vmul.f32 %v2699, 0.6931472
        %v2701 = vlog2.pop %v2541
        %v2702 = vmul.f32 %v2701, 0.6931472
        %v2703 = vlog2.pop %v2542
        %v2704 = vmul.f32 %v2703, 0.6931472
        %v2705 = vlog2.pop %v2543
        %v2706 = vmul.f32 %v2705, 0.6931472
        %v2707 = vlog2.pop %v2544
        %v2708 = vmul.f32 %v2707, 0.6931472
        %v2709 = vlog2.pop %v2545
        %v2710 = vmul.f32 %v2709, 0.6931472
        %v2711 = vlog2.pop %v2546
        %v2712 = vmul.f32 %v2711, 0.6931472
        %v2713 = vlog2.pop %v2547
        %v2714 = vmul.f32 %v2713, 0.6931472
        %v2715 = vlog2.pop %v2548
        %v2716 = vmul.f32 %v2715, 0.6931472
        %v2717 = vlog2.pop %v2549
        %v2718 = vmul.f32 %v2717, 0.6931472
        %v2719 = vlog2.pop %v2550
        %v2720 = vmul.f32 %v2719, 0.6931472
        %v2721 = vlog2.pop %v2551
        %v2722 = vmul.f32 %v2721, 0.6931472
        %v2723 = vlog2.pop %v2552
        %v2724 = vmul.f32 %v2723, 0.6931472
        %v2725 = vlog2.pop %v2553
        %v2726 = vmul.f32 %v2725, 0.6931472
        %v2727 = vlog2.pop %v2554
        %v2728 = vmul.f32 %v2727, 0.6931472
        %v2729 = vlog2.pop %v2555
        %v2730 = vmul.f32 %v2729, 0.6931472
        %v2731 = vlog2.pop %v2556
        %v2732 = vmul.f32 %v2731, 0.6931472
        %v2733 = vlog2.pop %v2557
        %v2734 = vmul.f32 %v2733, 0.6931472
        %v2735 = vlog2.pop %v2558
        %v2736 = vmul.f32 %v2735, 0.6931472
        %v2737 = vlog2.pop %v2559
        %v2738 = vmul.f32 %v2737, 0.6931472
        %v2739 = vlog2.pop %v2560
        %v2740 = vmul.f32 %v2739, 0.6931472
        %v2741 = vlog2.pop %v2561
        %v2742 = vmul.f32 %v2741, 0.6931472
        %v2743 = vlog2.pop %v2562
        %v2744 = vmul.f32 %v2743, 0.6931472
        %v2745 = vlog2.pop %v2563
        %v2746 = vmul.f32 %v2745, 0.6931472
        %v2747 = vlog2.pop %v2564
        %v2748 = vmul.f32 %v2747, 0.6931472
        %v2749 = vlog2.pop %v2565
        %v2750 = vmul.f32 %v2749, 0.6931472
        %v2751 = vlog2.pop %v2566
        %v2752 = vmul.f32 %v2751, 0.6931472
        %v2753 = vlog2.pop %v2567
        %v2754 = vmul.f32 %v2753, 0.6931472
        %v2755 = vlog2.pop %v2568
        %v2756 = vmul.f32 %v2755, 0.6931472
        %v2757 = vlog2.pop %v2569
        %v2758 = vmul.f32 %v2757, 0.6931472
        %v2759 = vlog2.pop %v2570
        %v2760 = vmul.f32 %v2759, 0.6931472
        %v2761 = vlog2.pop %v2571
        %v2762 = vmul.f32 %v2761, 0.6931472
        %v2763 = vlog2.pop %v2572
        %v2764 = vmul.f32 %v2763, 0.6931472
        %v2765 = vlog2.pop %v2573
        %v2766 = vmul.f32 %v2765, 0.6931472
        %v2767 = vlog2.pop %v2574
        %v2768 = vmul.f32 %v2767, 0.6931472
        %v2769 = vlog2.pop %v2575
        %v2770 = vmul.f32 %v2769, 0.6931472
        %v2771 = vlog2.pop %v2576
        %v2772 = vmul.f32 %v2771, 0.6931472
        %v2773 = vlog2.pop %v2577
        %v2774 = vmul.f32 %v2773, 0.6931472
        %v2775 = vlog2.pop %v2578
        %v2776 = vmul.f32 %v2775, 0.6931472
        %v2777 = vlog2.pop %v2579
        %v2778 = vmul.f32 %v2777, 0.6931472
        %v2779 = vlog2.pop %v2580
        %v2780 = vmul.f32 %v2779, 0.6931472
        %v2781 = vlog2.pop %v2581
        %v2782 = vmul.f32 %v2781, 0.6931472
        %v2783 = vlog2.pop %v2582
        %v2784 = vmul.f32 %v2783, 0.6931472
        %v2785 = vlog2.pop %v2583
        %v2786 = vmul.f32 %v2785, 0.6931472
        %v2787 = vlog2.pop %v2584
        %v2788 = vmul.f32 %v2787, 0.6931472
        %v2789 = vlog2.pop %v2585
        %v2790 = vmul.f32 %v2789, 0.6931472
        %v2791 = vlog2.pop %v2586
        %v2792 = vmul.f32 %v2791, 0.6931472
        %v2793 = vlog2.pop %v2587
        %v2794 = vmul.f32 %v2793, 0.6931472
        %v2795 = vlog2.pop %v2588
        %v2796 = vmul.f32 %v2795, 0.6931472
        %v2797 = vlog2.pop %v2589
        %v2798 = vmul.f32 %v2797, 0.6931472
        %v2799 = vlog2.pop %v2590
        %v2800 = vmul.f32 %v2799, 0.6931472
        %v2801 = vlog2.pop %v2591
        %v2802 = vmul.f32 %v2801, 0.6931472
        %v2803 = vlog2.pop %v2592
        %v2804 = vmul.f32 %v2803, 0.6931472
        %v2805 = vlog2.pop %v2593
        %v2806 = vmul.f32 %v2805, 0.6931472
        %v2807 = vlog2.pop %v2594
        %v2808 = vmul.f32 %v2807, 0.6931472
        %v2809 = vlog2.pop %v2595
        %v2810 = vmul.f32 %v2809, 0.6931472
        %v2811 = vlog2.pop %v2596
        %v2812 = vmul.f32 %v2811, 0.6931472
        %v2813 = vlog2.pop %v2597
        %v2814 = vmul.f32 %v2813, 0.6931472
        %v2815 = vlog2.pop %v2598
        %v2816 = vmul.f32 %v2815, 0.6931472
        %v2817 = vlog2.pop %v2599
        %v2818 = vmul.f32 %v2817, 0.6931472
        %v2819 = vlog2.pop %v2600
        %v2820 = vmul.f32 %v2819, 0.6931472
        %v2821 = vlog2.pop %v2601
        %v2822 = vmul.f32 %v2821, 0.6931472
        %v2823 = vlog2.pop %v2602
        %v2824 = vmul.f32 %v2823, 0.6931472
        %v2825 = vlog2.pop %v2603
        %v2826 = vmul.f32 %v2825, 0.6931472
        %v2827 = vlog2.pop %v2604
        %v2828 = vmul.f32 %v2827, 0.6931472
        %v2829 = vlog2.pop %v2605
        %v2830 = vmul.f32 %v2829, 0.6931472
        %v2831 = vlog2.pop %v2606
        %v2832 = vmul.f32 %v2831, 0.6931472
        %v2833 = vlog2.pop %v2607
        %v2834 = vmul.f32 %v2833, 0.6931472
        %v2835 = vlog2.pop %v2608
        %v2836 = vmul.f32 %v2835, 0.6931472
        %v2837 = vlog2.pop %v2609
        %v2838 = vmul.f32 %v2837, 0.6931472
        %v2839 = vlog2.pop %v2610
        %v2840 = vmul.f32 %v2839, 0.6931472
        %v2841 = vlog2.pop %v2611
        %v2842 = vmul.f32 %v2841, 0.6931472
        %v2843 = vlog2.pop %v2612
        %v2844 = vmul.f32 %v2843, 0.6931472
        %v2845 = vlog2.pop %v2613
        %v2846 = vmul.f32 %v2845, 0.6931472
        %v2847 = vlog2.pop %v2614
        %v2848 = vmul.f32 %v2847, 0.6931472
        %v2849 = vlog2.pop %v2615
        %v2850 = vmul.f32 %v2849, 0.6931472
        %v2851 = vlog2.pop %v2616
        %v2852 = vmul.f32 %v2851, 0.6931472
        %v2853 = vlog2.pop %v2617
        %v2854 = vmul.f32 %v2853, 0.6931472
        %v2855 = vlog2.pop %v2618
        %v2856 = vmul.f32 %v2855, 0.6931472
        %v2857 = vlog2.pop %v2619
        %v2858 = vmul.f32 %v2857, 0.6931472
        %v2859 = vlog2.pop %v2620
        %v2860 = vmul.f32 %v2859, 0.6931472
        %v2861 = vlog2.pop %v2621
        %v2862 = vmul.f32 %v2861, 0.6931472
        %v2863 = vlog2.pop %v2622
        %v2864 = vmul.f32 %v2863, 0.6931472
        %v2865 = vlog2.pop %v2623
        %v2866 = vmul.f32 %v2865, 0.6931472
        %v2867 = vlog2.pop %v2624
        %v2868 = vmul.f32 %v2867, 0.6931472
        %v2869 = vlog2.pop %v2625
        %v2870 = vmul.f32 %v2869, 0.6931472
        %v2871 = vlog2.pop %v2626
        %v2872 = vmul.f32 %v2871, 0.6931472
        %v2873 = vlog2.pop %v2627
        %v2874 = vmul.f32 %v2873, 0.6931472
        %v2875 = vlog2.pop %v2628
        %v2876 = vmul.f32 %v2875, 0.6931472
        %v2877 = vlog2.pop %v2629
        %v2878 = vmul.f32 %v2877, 0.6931472
        %v2879 = vlog2.pop %v2630
        %v2880 = vmul.f32 %v2879, 0.6931472
        %v2881 = vlog2.pop %v2631
        %v2882 = vmul.f32 %v2881, 0.6931472
        %v2883 = vlog2.pop %v2632
        %v2884 = vmul.f32 %v2883, 0.6931472
        %v2885 = vlog2.pop %v2633
        %v2886 = vmul.f32 %v2885, 0.6931472
        %v2887 = vlog2.pop %v2634
        %v2888 = vmul.f32 %v2887, 0.6931472
        %v2889 = vlog2.pop %v2635
        %v2890 = vmul.f32 %v2889, 0.6931472
        %v2891 = vlog2.pop %v2636
        %v2892 = vmul.f32 %v2891, 0.6931472
        %v2893 = vsub.f32 %v1573, %v2638
        %v2894 = vsub.f32 %v1574, %v2640
        %v2895 = vsub.f32 %v1575, %v2642
        %v2896 = vsub.f32 %v1576, %v2644
        %v2897 = vsub.f32 %v1577, %v2646
        %v2898 = vsub.f32 %v1578, %v2648
        %v2899 = vsub.f32 %v1579, %v2650
        %v2900 = vsub.f32 %v1580, %v2652
        %v2901 = vsub.f32 %v1581, %v2654
        %v2902 = vsub.f32 %v1582, %v2656
        %v2903 = vsub.f32 %v1583, %v2658
        %v2904 = vsub.f32 %v1584, %v2660
        %v2905 = vsub.f32 %v1585, %v2662
        %v2906 = vsub.f32 %v1586, %v2664
        %v2907 = vsub.f32 %v1587, %v2666
        %v2908 = vsub.f32 %v1588, %v2668
        %v2909 = vsub.f32 %v1589, %v2670
        %v2910 = vsub.f32 %v1590, %v2672
        %v2911 = vsub.f32 %v1591, %v2674
        %v2912 = vsub.f32 %v1592, %v2676
        %v2913 = vsub.f32 %v1593, %v2678
        %v2914 = vsub.f32 %v1594, %v2680
        %v2915 = vsub.f32 %v1595, %v2682
        %v2916 = vsub.f32 %v1596, %v2684
        %v2917 = vsub.f32 %v1597, %v2686
        %v2918 = vsub.f32 %v1598, %v2688
        %v2919 = vsub.f32 %v1599, %v2690
        %v2920 = vsub.f32 %v1600, %v2692
        %v2921 = vsub.f32 %v1601, %v2694
        %v2922 = vsub.f32 %v1602, %v2696
        %v2923 = vsub.f32 %v1603, %v2698
        %v2924 = vsub.f32 %v1604, %v2700
        %v2925 = vsub.f32 %v1605, %v2702
        %v2926 = vsub.f32 %v1606, %v2704
        %v2927 = vsub.f32 %v1607, %v2706
        %v2928 = vsub.f32 %v1608, %v2708
        %v2929 = vsub.f32 %v1609, %v2710
        %v2930 = vsub.f32 %v1610, %v2712
        %v2931 = vsub.f32 %v1611, %v2714
        %v2932 = vsub.f32 %v1612, %v2716
        %v2933 = vsub.f32 %v1613, %v2718
        %v2934 = vsub.f32 %v1614, %v2720
        %v2935 = vsub.f32 %v1615, %v2722
        %v2936 = vsub.f32 %v1616, %v2724
        %v2937 = vsub.f32 %v1617, %v2726
        %v2938 = vsub.f32 %v1618, %v2728
        %v2939 = vsub.f32 %v1619, %v2730
        %v2940 = vsub.f32 %v1620, %v2732
        %v2941 = vsub.f32 %v1621, %v2734
        %v2942 = vsub.f32 %v1622, %v2736
        %v2943 = vsub.f32 %v1623, %v2738
        %v2944 = vsub.f32 %v1624, %v2740
        %v2945 = vsub.f32 %v1625, %v2742
        %v2946 = vsub.f32 %v1626, %v2744
        %v2947 = vsub.f32 %v1627, %v2746
        %v2948 = vsub.f32 %v1628, %v2748
        %v2949 = vsub.f32 %v1629, %v2750
        %v2950 = vsub.f32 %v1630, %v2752
        %v2951 = vsub.f32 %v1631, %v2754
        %v2952 = vsub.f32 %v1632, %v2756
        %v2953 = vsub.f32 %v1633, %v2758
        %v2954 = vsub.f32 %v1634, %v2760
        %v2955 = vsub.f32 %v1635, %v2762
        %v2956 = vsub.f32 %v1636, %v2764
        %v2957 = vsub.f32 %v1637, %v2766
        %v2958 = vsub.f32 %v1638, %v2768
        %v2959 = vsub.f32 %v1639, %v2770
        %v2960 = vsub.f32 %v1640, %v2772
        %v2961 = vsub.f32 %v1641, %v2774
        %v2962 = vsub.f32 %v1642, %v2776
        %v2963 = vsub.f32 %v1643, %v2778
        %v2964 = vsub.f32 %v1644, %v2780
        %v2965 = vsub.f32 %v1645, %v2782
        %v2966 = vsub.f32 %v1646, %v2784
        %v2967 = vsub.f32 %v1647, %v2786
        %v2968 = vsub.f32 %v1648, %v2788
        %v2969 = vsub.f32 %v1649, %v2790
        %v2970 = vsub.f32 %v1650, %v2792
        %v2971 = vsub.f32 %v1651, %v2794
        %v2972 = vsub.f32 %v1652, %v2796
        %v2973 = vsub.f32 %v1653, %v2798
        %v2974 = vsub.f32 %v1654, %v2800
        %v2975 = vsub.f32 %v1655, %v2802
        %v2976 = vsub.f32 %v1656, %v2804
        %v2977 = vsub.f32 %v1657, %v2806
        %v2978 = vsub.f32 %v1658, %v2808
        %v2979 = vsub.f32 %v1659, %v2810
        %v2980 = vsub.f32 %v1660, %v2812
        %v2981 = vsub.f32 %v1661, %v2814
        %v2982 = vsub.f32 %v1662, %v2816
        %v2983 = vsub.f32 %v1663, %v2818
        %v2984 = vsub.f32 %v1664, %v2820
        %v2985 = vsub.f32 %v1665, %v2822
        %v2986 = vsub.f32 %v1666, %v2824
        %v2987 = vsub.f32 %v1667, %v2826
        %v2988 = vsub.f32 %v1668, %v2828
        %v2989 = vsub.f32 %v1669, %v2830
        %v2990 = vsub.f32 %v1670, %v2832
        %v2991 = vsub.f32 %v1671, %v2834
        %v2992 = vsub.f32 %v1672, %v2836
        %v2993 = vsub.f32 %v1673, %v2838
        %v2994 = vsub.f32 %v1674, %v2840
        %v2995 = vsub.f32 %v1675, %v2842
        %v2996 = vsub.f32 %v1676, %v2844
        %v2997 = vsub.f32 %v1677, %v2846
        %v2998 = vsub.f32 %v1678, %v2848
        %v2999 = vsub.f32 %v1679, %v2850
        %v3000 = vsub.f32 %v1680, %v2852
        %v3001 = vsub.f32 %v1681, %v2854
        %v3002 = vsub.f32 %v1682, %v2856
        %v3003 = vsub.f32 %v1683, %v2858
        %v3004 = vsub.f32 %v1684, %v2860
        %v3005 = vsub.f32 %v1685, %v2862
        %v3006 = vsub.f32 %v1686, %v2864
        %v3007 = vsub.f32 %v1687, %v2866
        %v3008 = vsub.f32 %v1688, %v2868
        %v3009 = vsub.f32 %v1689, %v2870
        %v3010 = vsub.f32 %v1690, %v2872
        %v3011 = vsub.f32 %v1691, %v2874
        %v3012 = vsub.f32 %v1692, %v2876
        %v3013 = vsub.f32 %v1693, %v2878
        %v3014 = vsub.f32 %v1694, %v2880
        %v3015 = vsub.f32 %v1695, %v2882
        %v3016 = vsub.f32 %v1696, %v2884
        %v3017 = vsub.f32 %v1697, %v2886
        %v3018 = vsub.f32 %v1698, %v2888
        %v3019 = vsub.f32 %v1699, %v2890
        %v3020 = vsub.f32 %v1700, %v2892
        %vm3021 = vcmp.ne.s32.totalorder %v1377, %v1339
        %vm3022 = vcmp.ne.s32.totalorder %v1377, %v1340
        %vm3023 = vcmp.ne.s32.totalorder %v1377, %v1341
        %vm3024 = vcmp.ne.s32.totalorder %v1377, %v1342
        %vm3025 = vcmp.ne.s32.totalorder %v1378, %v1339
        %vm3026 = vcmp.ne.s32.totalorder %v1378, %v1340
        %vm3027 = vcmp.ne.s32.totalorder %v1378, %v1341
        %vm3028 = vcmp.ne.s32.totalorder %v1378, %v1342
        %vm3029 = vcmp.ne.s32.totalorder %v1379, %v1339
        %vm3030 = vcmp.ne.s32.totalorder %v1379, %v1340
        %vm3031 = vcmp.ne.s32.totalorder %v1379, %v1341
        %vm3032 = vcmp.ne.s32.totalorder %v1379, %v1342
        %vm3033 = vcmp.ne.s32.totalorder %v1380, %v1339
        %vm3034 = vcmp.ne.s32.totalorder %v1380, %v1340
        %vm3035 = vcmp.ne.s32.totalorder %v1380, %v1341
        %vm3036 = vcmp.ne.s32.totalorder %v1380, %v1342
        %vm3037 = vcmp.ne.s32.totalorder %v1381, %v1339
        %vm3038 = vcmp.ne.s32.totalorder %v1381, %v1340
        %vm3039 = vcmp.ne.s32.totalorder %v1381, %v1341
        %vm3040 = vcmp.ne.s32.totalorder %v1381, %v1342
        %vm3041 = vcmp.ne.s32.totalorder %v1382, %v1339
        %vm3042 = vcmp.ne.s32.totalorder %v1382, %v1340
        %vm3043 = vcmp.ne.s32.totalorder %v1382, %v1341
        %vm3044 = vcmp.ne.s32.totalorder %v1382, %v1342
        %vm3045 = vcmp.ne.s32.totalorder %v1383, %v1339
        %vm3046 = vcmp.ne.s32.totalorder %v1383, %v1340
        %vm3047 = vcmp.ne.s32.totalorder %v1383, %v1341
        %vm3048 = vcmp.ne.s32.totalorder %v1383, %v1342
        %vm3049 = vcmp.ne.s32.totalorder %v1384, %v1339
        %vm3050 = vcmp.ne.s32.totalorder %v1384, %v1340
        %vm3051 = vcmp.ne.s32.totalorder %v1384, %v1341
        %vm3052 = vcmp.ne.s32.totalorder %v1384, %v1342
        %vm3053 = vcmp.ne.s32.totalorder %v1385, %v1339
        %vm3054 = vcmp.ne.s32.totalorder %v1385, %v1340
        %vm3055 = vcmp.ne.s32.totalorder %v1385, %v1341
        %vm3056 = vcmp.ne.s32.totalorder %v1385, %v1342
        %vm3057 = vcmp.ne.s32.totalorder %v1386, %v1339
        %vm3058 = vcmp.ne.s32.totalorder %v1386, %v1340
        %vm3059 = vcmp.ne.s32.totalorder %v1386, %v1341
        %vm3060 = vcmp.ne.s32.totalorder %v1386, %v1342
        %vm3061 = vcmp.ne.s32.totalorder %v1387, %v1339
        %vm3062 = vcmp.ne.s32.totalorder %v1387, %v1340
        %vm3063 = vcmp.ne.s32.totalorder %v1387, %v1341
        %vm3064 = vcmp.ne.s32.totalorder %v1387, %v1342
        %vm3065 = vcmp.ne.s32.totalorder %v1388, %v1339
        %vm3066 = vcmp.ne.s32.totalorder %v1388, %v1340
        %vm3067 = vcmp.ne.s32.totalorder %v1388, %v1341
        %vm3068 = vcmp.ne.s32.totalorder %v1388, %v1342
        %vm3069 = vcmp.ne.s32.totalorder %v1389, %v1339
        %vm3070 = vcmp.ne.s32.totalorder %v1389, %v1340
        %vm3071 = vcmp.ne.s32.totalorder %v1389, %v1341
        %vm3072 = vcmp.ne.s32.totalorder %v1389, %v1342
        %vm3073 = vcmp.ne.s32.totalorder %v1390, %v1339
        %vm3074 = vcmp.ne.s32.totalorder %v1390, %v1340
        %vm3075 = vcmp.ne.s32.totalorder %v1390, %v1341
        %vm3076 = vcmp.ne.s32.totalorder %v1390, %v1342
        %vm3077 = vcmp.ne.s32.totalorder %v1391, %v1339
        %vm3078 = vcmp.ne.s32.totalorder %v1391, %v1340
        %vm3079 = vcmp.ne.s32.totalorder %v1391, %v1341
        %vm3080 = vcmp.ne.s32.totalorder %v1391, %v1342
        %vm3081 = vcmp.ne.s32.totalorder %v1392, %v1339
        %vm3082 = vcmp.ne.s32.totalorder %v1392, %v1340
        %vm3083 = vcmp.ne.s32.totalorder %v1392, %v1341
        %vm3084 = vcmp.ne.s32.totalorder %v1392, %v1342
        %vm3085 = vcmp.ne.s32.totalorder %v1393, %v1339
        %vm3086 = vcmp.ne.s32.totalorder %v1393, %v1340
        %vm3087 = vcmp.ne.s32.totalorder %v1393, %v1341
        %vm3088 = vcmp.ne.s32.totalorder %v1393, %v1342
        %vm3089 = vcmp.ne.s32.totalorder %v1394, %v1339
        %vm3090 = vcmp.ne.s32.totalorder %v1394, %v1340
        %vm3091 = vcmp.ne.s32.totalorder %v1394, %v1341
        %vm3092 = vcmp.ne.s32.totalorder %v1394, %v1342
        %vm3093 = vcmp.ne.s32.totalorder %v1395, %v1339
        %vm3094 = vcmp.ne.s32.totalorder %v1395, %v1340
        %vm3095 = vcmp.ne.s32.totalorder %v1395, %v1341
        %vm3096 = vcmp.ne.s32.totalorder %v1395, %v1342
        %vm3097 = vcmp.ne.s32.totalorder %v1396, %v1339
        %vm3098 = vcmp.ne.s32.totalorder %v1396, %v1340
        %vm3099 = vcmp.ne.s32.totalorder %v1396, %v1341
        %vm3100 = vcmp.ne.s32.totalorder %v1396, %v1342
        %vm3101 = vcmp.ne.s32.totalorder %v1397, %v1339
        %vm3102 = vcmp.ne.s32.totalorder %v1397, %v1340
        %vm3103 = vcmp.ne.s32.totalorder %v1397, %v1341
        %vm3104 = vcmp.ne.s32.totalorder %v1397, %v1342
        %vm3105 = vcmp.ne.s32.totalorder %v1398, %v1339
        %vm3106 = vcmp.ne.s32.totalorder %v1398, %v1340
        %vm3107 = vcmp.ne.s32.totalorder %v1398, %v1341
        %vm3108 = vcmp.ne.s32.totalorder %v1398, %v1342
        %vm3109 = vcmp.ne.s32.totalorder %v1399, %v1339
        %vm3110 = vcmp.ne.s32.totalorder %v1399, %v1340
        %vm3111 = vcmp.ne.s32.totalorder %v1399, %v1341
        %vm3112 = vcmp.ne.s32.totalorder %v1399, %v1342
        %vm3113 = vcmp.ne.s32.totalorder %v1400, %v1339
        %vm3114 = vcmp.ne.s32.totalorder %v1400, %v1340
        %vm3115 = vcmp.ne.s32.totalorder %v1400, %v1341
        %vm3116 = vcmp.ne.s32.totalorder %v1400, %v1342
        %vm3117 = vcmp.ne.s32.totalorder %v1401, %v1339
        %vm3118 = vcmp.ne.s32.totalorder %v1401, %v1340
        %vm3119 = vcmp.ne.s32.totalorder %v1401, %v1341
        %vm3120 = vcmp.ne.s32.totalorder %v1401, %v1342
        %vm3121 = vcmp.ne.s32.totalorder %v1402, %v1339
        %vm3122 = vcmp.ne.s32.totalorder %v1402, %v1340
        %vm3123 = vcmp.ne.s32.totalorder %v1402, %v1341
        %vm3124 = vcmp.ne.s32.totalorder %v1402, %v1342
        %vm3125 = vcmp.ne.s32.totalorder %v1403, %v1339
        %vm3126 = vcmp.ne.s32.totalorder %v1403, %v1340
        %vm3127 = vcmp.ne.s32.totalorder %v1403, %v1341
        %vm3128 = vcmp.ne.s32.totalorder %v1403, %v1342
        %vm3129 = vcmp.ne.s32.totalorder %v1404, %v1339
        %vm3130 = vcmp.ne.s32.totalorder %v1404, %v1340
        %vm3131 = vcmp.ne.s32.totalorder %v1404, %v1341
        %vm3132 = vcmp.ne.s32.totalorder %v1404, %v1342
        %vm3133 = vcmp.ne.s32.totalorder %v1405, %v1339
        %vm3134 = vcmp.ne.s32.totalorder %v1405, %v1340
        %vm3135 = vcmp.ne.s32.totalorder %v1405, %v1341
        %vm3136 = vcmp.ne.s32.totalorder %v1405, %v1342
        %vm3137 = vcmp.ne.s32.totalorder %v1406, %v1339
        %vm3138 = vcmp.ne.s32.totalorder %v1406, %v1340
        %vm3139 = vcmp.ne.s32.totalorder %v1406, %v1341
        %vm3140 = vcmp.ne.s32.totalorder %v1406, %v1342
        %vm3141 = vcmp.ne.s32.totalorder %v1407, %v1339
        %vm3142 = vcmp.ne.s32.totalorder %v1407, %v1340
        %vm3143 = vcmp.ne.s32.totalorder %v1407, %v1341
        %vm3144 = vcmp.ne.s32.totalorder %v1407, %v1342
        %vm3145 = vcmp.ne.s32.totalorder %v1408, %v1339
        %vm3146 = vcmp.ne.s32.totalorder %v1408, %v1340
        %vm3147 = vcmp.ne.s32.totalorder %v1408, %v1341
        %vm3148 = vcmp.ne.s32.totalorder %v1408, %v1342
        %vm3149 = vmand %vm1210, %vm3021
        %vm3150 = vmand %vm1211, %vm3022
        %vm3151 = vmand %vm1212, %vm3023
        %vm3152 = vmand %vm1213, %vm3024
        %vm3153 = vmand %vm1214, %vm3025
        %vm3154 = vmand %vm1215, %vm3026
        %vm3155 = vmand %vm1216, %vm3027
        %vm3156 = vmand %vm1217, %vm3028
        %vm3157 = vmand %vm1218, %vm3029
        %vm3158 = vmand %vm1219, %vm3030
        %vm3159 = vmand %vm1220, %vm3031
        %vm3160 = vmand %vm1221, %vm3032
        %vm3161 = vmand %vm1222, %vm3033
        %vm3162 = vmand %vm1223, %vm3034
        %vm3163 = vmand %vm1224, %vm3035
        %vm3164 = vmand %vm1225, %vm3036
        %vm3165 = vmand %vm1226, %vm3037
        %vm3166 = vmand %vm1227, %vm3038
        %vm3167 = vmand %vm1228, %vm3039
        %vm3168 = vmand %vm1229, %vm3040
        %vm3169 = vmand %vm1230, %vm3041
        %vm3170 = vmand %vm1231, %vm3042
        %vm3171 = vmand %vm1232, %vm3043
        %vm3172 = vmand %vm1233, %vm3044
        %vm3173 = vmand %vm1234, %vm3045
        %vm3174 = vmand %vm1235, %vm3046
        %vm3175 = vmand %vm1236, %vm3047
        %vm3176 = vmand %vm1237, %vm3048
        %vm3177 = vmand %vm1238, %vm3049
        %vm3178 = vmand %vm1239, %vm3050
        %vm3179 = vmand %vm1240, %vm3051
        %vm3180 = vmand %vm1241, %vm3052
        %vm3181 = vmand %vm1242, %vm3053
        %vm3182 = vmand %vm1243, %vm3054
        %vm3183 = vmand %vm1244, %vm3055
        %vm3184 = vmand %vm1245, %vm3056
        %vm3185 = vmand %vm1246, %vm3057
        %vm3186 = vmand %vm1247, %vm3058
        %vm3187 = vmand %vm1248, %vm3059
        %vm3188 = vmand %vm1249, %vm3060
        %vm3189 = vmand %vm1250, %vm3061
        %vm3190 = vmand %vm1251, %vm3062
        %vm3191 = vmand %vm1252, %vm3063
        %vm3192 = vmand %vm1253, %vm3064
        %vm3193 = vmand %vm1254, %vm3065
        %vm3194 = vmand %vm1255, %vm3066
        %vm3195 = vmand %vm1256, %vm3067
        %vm3196 = vmand %vm1257, %vm3068
        %vm3197 = vmand %vm1258, %vm3069
        %vm3198 = vmand %vm1259, %vm3070
        %vm3199 = vmand %vm1260, %vm3071
        %vm3200 = vmand %vm1261, %vm3072
        %vm3201 = vmand %vm1262, %vm3073
        %vm3202 = vmand %vm1263, %vm3074
        %vm3203 = vmand %vm1264, %vm3075
        %vm3204 = vmand %vm1265, %vm3076
        %vm3205 = vmand %vm1266, %vm3077
        %vm3206 = vmand %vm1267, %vm3078
        %vm3207 = vmand %vm1268, %vm3079
        %vm3208 = vmand %vm1269, %vm3080
        %vm3209 = vmand %vm1270, %vm3081
        %vm3210 = vmand %vm1271, %vm3082
        %vm3211 = vmand %vm1272, %vm3083
        %vm3212 = vmand %vm1273, %vm3084
        %vm3213 = vmand %vm1274, %vm3085
        %vm3214 = vmand %vm1275, %vm3086
        %vm3215 = vmand %vm1276, %vm3087
        %vm3216 = vmand %vm1277, %vm3088
        %vm3217 = vmand %vm1278, %vm3089
        %vm3218 = vmand %vm1279, %vm3090
        %vm3219 = vmand %vm1280, %vm3091
        %vm3220 = vmand %vm1281, %vm3092
        %vm3221 = vmand %vm1282, %vm3093
        %vm3222 = vmand %vm1283, %vm3094
        %vm3223 = vmand %vm1284, %vm3095
        %vm3224 = vmand %vm1285, %vm3096
        %vm3225 = vmand %vm1286, %vm3097
        %vm3226 = vmand %vm1287, %vm3098
        %vm3227 = vmand %vm1288, %vm3099
        %vm3228 = vmand %vm1289, %vm3100
        %vm3229 = vmand %vm1290, %vm3101
        %vm3230 = vmand %vm1291, %vm3102
        %vm3231 = vmand %vm1292, %vm3103
        %vm3232 = vmand %vm1293, %vm3104
        %vm3233 = vmand %vm1294, %vm3105
        %vm3234 = vmand %vm1295, %vm3106
        %vm3235 = vmand %vm1296, %vm3107
        %vm3236 = vmand %vm1297, %vm3108
        %vm3237 = vmand %vm1298, %vm3109
        %vm3238 = vmand %vm1299, %vm3110
        %vm3239 = vmand %vm1300, %vm3111
        %vm3240 = vmand %vm1301, %vm3112
        %vm3241 = vmand %vm1302, %vm3113
        %vm3242 = vmand %vm1303, %vm3114
        %vm3243 = vmand %vm1304, %vm3115
        %vm3244 = vmand %vm1305, %vm3116
        %vm3245 = vmand %vm1306, %vm3117
        %vm3246 = vmand %vm1307, %vm3118
        %vm3247 = vmand %vm1308, %vm3119
        %vm3248 = vmand %vm1309, %vm3120
        %vm3249 = vmand %vm1310, %vm3121
        %vm3250 = vmand %vm1311, %vm3122
        %vm3251 = vmand %vm1312, %vm3123
        %vm3252 = vmand %vm1313, %vm3124
        %vm3253 = vmand %vm1314, %vm3125
        %vm3254 = vmand %vm1315, %vm3126
        %vm3255 = vmand %vm1316, %vm3127
        %vm3256 = vmand %vm1317, %vm3128
        %vm3257 = vmand %vm1318, %vm3129
        %vm3258 = vmand %vm1319, %vm3130
        %vm3259 = vmand %vm1320, %vm3131
        %vm3260 = vmand %vm1321, %vm3132
        %vm3261 = vmand %vm1322, %vm3133
        %vm3262 = vmand %vm1323, %vm3134
        %vm3263 = vmand %vm1324, %vm3135
        %vm3264 = vmand %vm1325, %vm3136
        %vm3265 = vmand %vm1326, %vm3137
        %vm3266 = vmand %vm1327, %vm3138
        %vm3267 = vmand %vm1328, %vm3139
        %vm3268 = vmand %vm1329, %vm3140
        %vm3269 = vmand %vm1330, %vm3141
        %vm3270 = vmand %vm1331, %vm3142
        %vm3271 = vmand %vm1332, %vm3143
        %vm3272 = vmand %vm1333, %vm3144
        %vm3273 = vmand %vm1334, %vm3145
        %vm3274 = vmand %vm1335, %vm3146
        %vm3275 = vmand %vm1336, %vm3147
        %vm3276 = vmand %vm1337, %vm3148
        %v3277 = vsel %vm3149, %v2893, 0.0
        %v3278 = vsel %vm3150, %v2894, 0.0
        %v3279 = vsel %vm3151, %v2895, 0.0
        %v3280 = vsel %vm3152, %v2896, 0.0
        %v3281 = vsel %vm3153, %v2897, 0.0
        %v3282 = vsel %vm3154, %v2898, 0.0
        %v3283 = vsel %vm3155, %v2899, 0.0
        %v3284 = vsel %vm3156, %v2900, 0.0
        %v3285 = vsel %vm3157, %v2901, 0.0
        %v3286 = vsel %vm3158, %v2902, 0.0
        %v3287 = vsel %vm3159, %v2903, 0.0
        %v3288 = vsel %vm3160, %v2904, 0.0
        %v3289 = vsel %vm3161, %v2905, 0.0
        %v3290 = vsel %vm3162, %v2906, 0.0
        %v3291 = vsel %vm3163, %v2907, 0.0
        %v3292 = vsel %vm3164, %v2908, 0.0
        %v3293 = vsel %vm3165, %v2909, 0.0
        %v3294 = vsel %vm3166, %v2910, 0.0
        %v3295 = vsel %vm3167, %v2911, 0.0
        %v3296 = vsel %vm3168, %v2912, 0.0
        %v3297 = vsel %vm3169, %v2913, 0.0
        %v3298 = vsel %vm3170, %v2914, 0.0
        %v3299 = vsel %vm3171, %v2915, 0.0
        %v3300 = vsel %vm3172, %v2916, 0.0
        %v3301 = vsel %vm3173, %v2917, 0.0
        %v3302 = vsel %vm3174, %v2918, 0.0
        %v3303 = vsel %vm3175, %v2919, 0.0
        %v3304 = vsel %vm3176, %v2920, 0.0
        %v3305 = vsel %vm3177, %v2921, 0.0
        %v3306 = vsel %vm3178, %v2922, 0.0
        %v3307 = vsel %vm3179, %v2923, 0.0
        %v3308 = vsel %vm3180, %v2924, 0.0
        %v3309 = vsel %vm3181, %v2925, 0.0
        %v3310 = vsel %vm3182, %v2926, 0.0
        %v3311 = vsel %vm3183, %v2927, 0.0
        %v3312 = vsel %vm3184, %v2928, 0.0
        %v3313 = vsel %vm3185, %v2929, 0.0
        %v3314 = vsel %vm3186, %v2930, 0.0
        %v3315 = vsel %vm3187, %v2931, 0.0
        %v3316 = vsel %vm3188, %v2932, 0.0
        %v3317 = vsel %vm3189, %v2933, 0.0
        %v3318 = vsel %vm3190, %v2934, 0.0
        %v3319 = vsel %vm3191, %v2935, 0.0
        %v3320 = vsel %vm3192, %v2936, 0.0
        %v3321 = vsel %vm3193, %v2937, 0.0
        %v3322 = vsel %vm3194, %v2938, 0.0
        %v3323 = vsel %vm3195, %v2939, 0.0
        %v3324 = vsel %vm3196, %v2940, 0.0
        %v3325 = vsel %vm3197, %v2941, 0.0
        %v3326 = vsel %vm3198, %v2942, 0.0
        %v3327 = vsel %vm3199, %v2943, 0.0
        %v3328 = vsel %vm3200, %v2944, 0.0
        %v3329 = vsel %vm3201, %v2945, 0.0
        %v3330 = vsel %vm3202, %v2946, 0.0
        %v3331 = vsel %vm3203, %v2947, 0.0
        %v3332 = vsel %vm3204, %v2948, 0.0
        %v3333 = vsel %vm3205, %v2949, 0.0
        %v3334 = vsel %vm3206, %v2950, 0.0
        %v3335 = vsel %vm3207, %v2951, 0.0
        %v3336 = vsel %vm3208, %v2952, 0.0
        %v3337 = vsel %vm3209, %v2953, 0.0
        %v3338 = vsel %vm3210, %v2954, 0.0
        %v3339 = vsel %vm3211, %v2955, 0.0
        %v3340 = vsel %vm3212, %v2956, 0.0
        %v3341 = vsel %vm3213, %v2957, 0.0
        %v3342 = vsel %vm3214, %v2958, 0.0
        %v3343 = vsel %vm3215, %v2959, 0.0
        %v3344 = vsel %vm3216, %v2960, 0.0
        %v3345 = vsel %vm3217, %v2961, 0.0
        %v3346 = vsel %vm3218, %v2962, 0.0
        %v3347 = vsel %vm3219, %v2963, 0.0
        %v3348 = vsel %vm3220, %v2964, 0.0
        %v3349 = vsel %vm3221, %v2965, 0.0
        %v3350 = vsel %vm3222, %v2966, 0.0
        %v3351 = vsel %vm3223, %v2967, 0.0
        %v3352 = vsel %vm3224, %v2968, 0.0
        %v3353 = vsel %vm3225, %v2969, 0.0
        %v3354 = vsel %vm3226, %v2970, 0.0
        %v3355 = vsel %vm3227, %v2971, 0.0
        %v3356 = vsel %vm3228, %v2972, 0.0
        %v3357 = vsel %vm3229, %v2973, 0.0
        %v3358 = vsel %vm3230, %v2974, 0.0
        %v3359 = vsel %vm3231, %v2975, 0.0
        %v3360 = vsel %vm3232, %v2976, 0.0
        %v3361 = vsel %vm3233, %v2977, 0.0
        %v3362 = vsel %vm3234, %v2978, 0.0
        %v3363 = vsel %vm3235, %v2979, 0.0
        %v3364 = vsel %vm3236, %v2980, 0.0
        %v3365 = vsel %vm3237, %v2981, 0.0
        %v3366 = vsel %vm3238, %v2982, 0.0
        %v3367 = vsel %vm3239, %v2983, 0.0
        %v3368 = vsel %vm3240, %v2984, 0.0
        %v3369 = vsel %vm3241, %v2985, 0.0
        %v3370 = vsel %vm3242, %v2986, 0.0
        %v3371 = vsel %vm3243, %v2987, 0.0
        %v3372 = vsel %vm3244, %v2988, 0.0
        %v3373 = vsel %vm3245, %v2989, 0.0
        %v3374 = vsel %vm3246, %v2990, 0.0
        %v3375 = vsel %vm3247, %v2991, 0.0
        %v3376 = vsel %vm3248, %v2992, 0.0
        %v3377 = vsel %vm3249, %v2993, 0.0
        %v3378 = vsel %vm3250, %v2994, 0.0
        %v3379 = vsel %vm3251, %v2995, 0.0
        %v3380 = vsel %vm3252, %v2996, 0.0
        %v3381 = vsel %vm3253, %v2997, 0.0
        %v3382 = vsel %vm3254, %v2998, 0.0
        %v3383 = vsel %vm3255, %v2999, 0.0
        %v3384 = vsel %vm3256, %v3000, 0.0
        %v3385 = vsel %vm3257, %v3001, 0.0
        %v3386 = vsel %vm3258, %v3002, 0.0
        %v3387 = vsel %vm3259, %v3003, 0.0
        %v3388 = vsel %vm3260, %v3004, 0.0
        %v3389 = vsel %vm3261, %v3005, 0.0
        %v3390 = vsel %vm3262, %v3006, 0.0
        %v3391 = vsel %vm3263, %v3007, 0.0
        %v3392 = vsel %vm3264, %v3008, 0.0
        %v3393 = vsel %vm3265, %v3009, 0.0
        %v3394 = vsel %vm3266, %v3010, 0.0
        %v3395 = vsel %vm3267, %v3011, 0.0
        %v3396 = vsel %vm3268, %v3012, 0.0
        %v3397 = vsel %vm3269, %v3013, 0.0
        %v3398 = vsel %vm3270, %v3014, 0.0
        %v3399 = vsel %vm3271, %v3015, 0.0
        %v3400 = vsel %vm3272, %v3016, 0.0
        %v3401 = vsel %vm3273, %v3017, 0.0
        %v3402 = vsel %vm3274, %v3018, 0.0
        %v3403 = vsel %vm3275, %v3019, 0.0
        %v3404 = vsel %vm3276, %v3020, 0.0
        %v3405 = vadd.f32 %v3277, %v3278
        %v3406 = vadd.f32 %v3405, %v3279
        %v3407 = vadd.f32 %v3406, %v3280
        %3408 = vadd.xlane.f32.xlu0 %v3407
        %v3409 = vpop.xlane.xlu0 %3408
        %v3410 = vadd.f32 %v3281, %v3282
        %v3411 = vadd.f32 %v3410, %v3283
        %v3412 = vadd.f32 %v3411, %v3284
        %3413 = vadd.xlane.f32.xlu0 %v3412
        %v3414 = vpop.xlane.xlu0 %3413
        %v3415 = vadd.f32 %v3285, %v3286
        %v3416 = vadd.f32 %v3415, %v3287
        %v3417 = vadd.f32 %v3416, %v3288
        %3418 = vadd.xlane.f32.xlu0 %v3417
        %v3419 = vpop.xlane.xlu0 %3418
        %v3420 = vadd.f32 %v3289, %v3290
        %v3421 = vadd.f32 %v3420, %v3291
        %v3422 = vadd.f32 %v3421, %v3292
        %3423 = vadd.xlane.f32.xlu0 %v3422
        %v3424 = vpop.xlane.xlu0 %3423
        %v3425 = vadd.f32 %v3293, %v3294
        %v3426 = vadd.f32 %v3425, %v3295
        %v3427 = vadd.f32 %v3426, %v3296
        %3428 = vadd.xlane.f32.xlu0 %v3427
        %v3429 = vpop.xlane.xlu0 %3428
        %v3430 = vadd.f32 %v3297, %v3298
        %v3431 = vadd.f32 %v3430, %v3299
        %v3432 = vadd.f32 %v3431, %v3300
        %3433 = vadd.xlane.f32.xlu0 %v3432
        %v3434 = vpop.xlane.xlu0 %3433
        %v3435 = vadd.f32 %v3301, %v3302
        %v3436 = vadd.f32 %v3435, %v3303
        %v3437 = vadd.f32 %v3436, %v3304
        %3438 = vadd.xlane.f32.xlu0 %v3437
        %v3439 = vpop.xlane.xlu0 %3438
        %v3440 = vadd.f32 %v3305, %v3306
        %v3441 = vadd.f32 %v3440, %v3307
        %v3442 = vadd.f32 %v3441, %v3308
        %3443 = vadd.xlane.f32.xlu0 %v3442
        %v3444 = vpop.xlane.xlu0 %3443
        %v3445 = vadd.f32 %v3309, %v3310
        %v3446 = vadd.f32 %v3445, %v3311
        %v3447 = vadd.f32 %v3446, %v3312
        %3448 = vadd.xlane.f32.xlu0 %v3447
        %v3449 = vpop.xlane.xlu0 %3448
        %v3450 = vadd.f32 %v3313, %v3314
        %v3451 = vadd.f32 %v3450, %v3315
        %v3452 = vadd.f32 %v3451, %v3316
        %3453 = vadd.xlane.f32.xlu0 %v3452
        %v3454 = vpop.xlane.xlu0 %3453
        %v3455 = vadd.f32 %v3317, %v3318
        %v3456 = vadd.f32 %v3455, %v3319
        %v3457 = vadd.f32 %v3456, %v3320
        %3458 = vadd.xlane.f32.xlu0 %v3457
        %v3459 = vpop.xlane.xlu0 %3458
        %v3460 = vadd.f32 %v3321, %v3322
        %v3461 = vadd.f32 %v3460, %v3323
        %v3462 = vadd.f32 %v3461, %v3324
        %3463 = vadd.xlane.f32.xlu0 %v3462
        %v3464 = vpop.xlane.xlu0 %3463
        %v3465 = vadd.f32 %v3325, %v3326
        %v3466 = vadd.f32 %v3465, %v3327
        %v3467 = vadd.f32 %v3466, %v3328
        %3468 = vadd.xlane.f32.xlu0 %v3467
        %v3469 = vpop.xlane.xlu0 %3468
        %v3470 = vadd.f32 %v3329, %v3330
        %v3471 = vadd.f32 %v3470, %v3331
        %v3472 = vadd.f32 %v3471, %v3332
        %3473 = vadd.xlane.f32.xlu0 %v3472
        %v3474 = vpop.xlane.xlu0 %3473
        %v3475 = vadd.f32 %v3333, %v3334
        %v3476 = vadd.f32 %v3475, %v3335
        %v3477 = vadd.f32 %v3476, %v3336
        %3478 = vadd.xlane.f32.xlu0 %v3477
        %v3479 = vpop.xlane.xlu0 %3478
        %v3480 = vadd.f32 %v3337, %v3338
        %v3481 = vadd.f32 %v3480, %v3339
        %v3482 = vadd.f32 %v3481, %v3340
        %3483 = vadd.xlane.f32.xlu0 %v3482
        %v3484 = vpop.xlane.xlu0 %3483
        %v3485 = vadd.f32 %v3341, %v3342
        %v3486 = vadd.f32 %v3485, %v3343
        %v3487 = vadd.f32 %v3486, %v3344
        %3488 = vadd.xlane.f32.xlu0 %v3487
        %v3489 = vpop.xlane.xlu0 %3488
        %v3490 = vadd.f32 %v3345, %v3346
        %v3491 = vadd.f32 %v3490, %v3347
        %v3492 = vadd.f32 %v3491, %v3348
        %3493 = vadd.xlane.f32.xlu0 %v3492
        %v3494 = vpop.xlane.xlu0 %3493
        %v3495 = vadd.f32 %v3349, %v3350
        %v3496 = vadd.f32 %v3495, %v3351
        %v3497 = vadd.f32 %v3496, %v3352
        %3498 = vadd.xlane.f32.xlu0 %v3497
        %v3499 = vpop.xlane.xlu0 %3498
        %v3500 = vadd.f32 %v3353, %v3354
        %v3501 = vadd.f32 %v3500, %v3355
        %v3502 = vadd.f32 %v3501, %v3356
        %3503 = vadd.xlane.f32.xlu0 %v3502
        %v3504 = vpop.xlane.xlu0 %3503
        %v3505 = vadd.f32 %v3357, %v3358
        %v3506 = vadd.f32 %v3505, %v3359
        %v3507 = vadd.f32 %v3506, %v3360
        %3508 = vadd.xlane.f32.xlu0 %v3507
        %v3509 = vpop.xlane.xlu0 %3508
        %v3510 = vadd.f32 %v3361, %v3362
        %v3511 = vadd.f32 %v3510, %v3363
        %v3512 = vadd.f32 %v3511, %v3364
        %3513 = vadd.xlane.f32.xlu0 %v3512
        %v3514 = vpop.xlane.xlu0 %3513
        %v3515 = vadd.f32 %v3365, %v3366
        %v3516 = vadd.f32 %v3515, %v3367
        %v3517 = vadd.f32 %v3516, %v3368
        %3518 = vadd.xlane.f32.xlu0 %v3517
        %v3519 = vpop.xlane.xlu0 %3518
        %v3520 = vadd.f32 %v3369, %v3370
        %v3521 = vadd.f32 %v3520, %v3371
        %v3522 = vadd.f32 %v3521, %v3372
        %3523 = vadd.xlane.f32.xlu0 %v3522
        %v3524 = vpop.xlane.xlu0 %3523
        %v3525 = vadd.f32 %v3373, %v3374
        %v3526 = vadd.f32 %v3525, %v3375
        %v3527 = vadd.f32 %v3526, %v3376
        %3528 = vadd.xlane.f32.xlu0 %v3527
        %v3529 = vpop.xlane.xlu0 %3528
        %v3530 = vadd.f32 %v3377, %v3378
        %v3531 = vadd.f32 %v3530, %v3379
        %v3532 = vadd.f32 %v3531, %v3380
        %3533 = vadd.xlane.f32.xlu0 %v3532
        %v3534 = vpop.xlane.xlu0 %3533
        %v3535 = vadd.f32 %v3381, %v3382
        %v3536 = vadd.f32 %v3535, %v3383
        %v3537 = vadd.f32 %v3536, %v3384
        %3538 = vadd.xlane.f32.xlu0 %v3537
        %v3539 = vpop.xlane.xlu0 %3538
        %v3540 = vadd.f32 %v3385, %v3386
        %v3541 = vadd.f32 %v3540, %v3387
        %v3542 = vadd.f32 %v3541, %v3388
        %3543 = vadd.xlane.f32.xlu0 %v3542
        %v3544 = vpop.xlane.xlu0 %3543
        %v3545 = vadd.f32 %v3389, %v3390
        %v3546 = vadd.f32 %v3545, %v3391
        %v3547 = vadd.f32 %v3546, %v3392
        %3548 = vadd.xlane.f32.xlu0 %v3547
        %v3549 = vpop.xlane.xlu0 %3548
        %v3550 = vadd.f32 %v3393, %v3394
        %v3551 = vadd.f32 %v3550, %v3395
        %v3552 = vadd.f32 %v3551, %v3396
        %3553 = vadd.xlane.f32.xlu0 %v3552
        %v3554 = vpop.xlane.xlu0 %3553
        %v3555 = vadd.f32 %v3397, %v3398
        %v3556 = vadd.f32 %v3555, %v3399
        %v3557 = vadd.f32 %v3556, %v3400
        %3558 = vadd.xlane.f32.xlu0 %v3557
        %v3559 = vpop.xlane.xlu0 %3558
        %v3560 = vadd.f32 %v3401, %v3402
        %v3561 = vadd.f32 %v3560, %v3403
        %v3562 = vadd.f32 %v3561, %v3404
        %3563 = vadd.xlane.f32.xlu0 %v3562
        %v3564 = vpop.xlane.xlu0 %3563
        %v3565 = vld [vmem:[%s218] sm:$0xff]
        %v3566 = vld [vmem:[%s218 + $0x8] sm:$0xff]
        %v3567 = vld [vmem:[%s218 + $0x10] sm:$0xff]
        %v3568 = vld [vmem:[%s218 + $0x18] sm:$0xff]
        %v3569 = vld [vmem:[%s218 + $0x20] sm:$0xff]
        %v3570 = vld [vmem:[%s218 + $0x28] sm:$0xff]
        %v3571 = vld [vmem:[%s218 + $0x30] sm:$0xff]
        %v3572 = vld [vmem:[%s218 + $0x38] sm:$0xff]
        %v3573 = vld [vmem:[%s218 + $0x40] sm:$0xff]
        %v3574 = vld [vmem:[%s218 + $0x48] sm:$0xff]
        %v3575 = vld [vmem:[%s218 + $0x50] sm:$0xff]
        %v3576 = vld [vmem:[%s218 + $0x58] sm:$0xff]
        %v3577 = vld [vmem:[%s218 + $0x60] sm:$0xff]
        %v3578 = vld [vmem:[%s218 + $0x68] sm:$0xff]
        %v3579 = vld [vmem:[%s218 + $0x70] sm:$0xff]
        %v3580 = vld [vmem:[%s218 + $0x78] sm:$0xff]
        %v3581 = vld [vmem:[%s218 + $0x80] sm:$0xff]
        %v3582 = vld [vmem:[%s218 + $0x88] sm:$0xff]
        %v3583 = vld [vmem:[%s218 + $0x90] sm:$0xff]
        %v3584 = vld [vmem:[%s218 + $0x98] sm:$0xff]
        %v3585 = vld [vmem:[%s218 + $0xa0] sm:$0xff]
        %v3586 = vld [vmem:[%s218 + $0xa8] sm:$0xff]
        %v3587 = vld [vmem:[%s218 + $0xb0] sm:$0xff]
        %v3588 = vld [vmem:[%s218 + $0xb8] sm:$0xff]
        %v3589 = vld [vmem:[%s218 + $0xc0] sm:$0xff]
        %v3590 = vld [vmem:[%s218 + $0xc8] sm:$0xff]
        %v3591 = vld [vmem:[%s218 + $0xd0] sm:$0xff]
        %v3592 = vld [vmem:[%s218 + $0xd8] sm:$0xff]
        %v3593 = vld [vmem:[%s218 + $0xe0] sm:$0xff]
        %v3594 = vld [vmem:[%s218 + $0xe8] sm:$0xff]
        %v3595 = vld [vmem:[%s218 + $0xf0] sm:$0xff]
        %v3596 = vld [vmem:[%s218 + $0xf8] sm:$0xff]
        %v3597 = vmul.f32 %v3409, %v3565
        %v3598 = vmul.f32 %v3414, %v3566
        %v3599 = vmul.f32 %v3419, %v3567
        %v3600 = vmul.f32 %v3424, %v3568
        %v3601 = vmul.f32 %v3429, %v3569
        %v3602 = vmul.f32 %v3434, %v3570
        %v3603 = vmul.f32 %v3439, %v3571
        %v3604 = vmul.f32 %v3444, %v3572
        %v3605 = vmul.f32 %v3449, %v3573
        %v3606 = vmul.f32 %v3454, %v3574
        %v3607 = vmul.f32 %v3459, %v3575
        %v3608 = vmul.f32 %v3464, %v3576
        %v3609 = vmul.f32 %v3469, %v3577
        %v3610 = vmul.f32 %v3474, %v3578
        %v3611 = vmul.f32 %v3479, %v3579
        %v3612 = vmul.f32 %v3484, %v3580
        %v3613 = vmul.f32 %v3489, %v3581
        %v3614 = vmul.f32 %v3494, %v3582
        %v3615 = vmul.f32 %v3499, %v3583
        %v3616 = vmul.f32 %v3504, %v3584
        %v3617 = vmul.f32 %v3509, %v3585
        %v3618 = vmul.f32 %v3514, %v3586
        %v3619 = vmul.f32 %v3519, %v3587
        %v3620 = vmul.f32 %v3524, %v3588
        %v3621 = vmul.f32 %v3529, %v3589
        %v3622 = vmul.f32 %v3534, %v3590
        %v3623 = vmul.f32 %v3539, %v3591
        %v3624 = vmul.f32 %v3544, %v3592
        %v3625 = vmul.f32 %v3549, %v3593
        %v3626 = vmul.f32 %v3554, %v3594
        %v3627 = vmul.f32 %v3559, %v3595
        %v3628 = vmul.f32 %v3564, %v3596
        %vm3629 = vcmask 7168
        %v3630 = vsel %vm3629, %v3597, 0.0
        %v3631 = vsel %vm3629, %v3598, 0.0
        %v3632 = vadd.f32 %v3630, %v3631
        %v3633 = vsel %vm3629, %v3599, 0.0
        %v3634 = vadd.f32 %v3632, %v3633
        %v3635 = vsel %vm3629, %v3600, 0.0
        %v3636 = vadd.f32 %v3634, %v3635
        %v3637 = vsel %vm3629, %v3601, 0.0
        %v3638 = vadd.f32 %v3636, %v3637
        %v3639 = vsel %vm3629, %v3602, 0.0
        %v3640 = vadd.f32 %v3638, %v3639
        %v3641 = vsel %vm3629, %v3603, 0.0
        %v3642 = vadd.f32 %v3640, %v3641
        %v3643 = vsel %vm3629, %v3604, 0.0
        %v3644 = vadd.f32 %v3642, %v3643
        %v3645 = vsel %vm3629, %v3605, 0.0
        %v3646 = vadd.f32 %v3644, %v3645
        %v3647 = vsel %vm3629, %v3606, 0.0
        %v3648 = vadd.f32 %v3646, %v3647
        %v3649 = vsel %vm3629, %v3607, 0.0
        %v3650 = vadd.f32 %v3648, %v3649
        %v3651 = vsel %vm3629, %v3608, 0.0
        %v3652 = vadd.f32 %v3650, %v3651
        %v3653 = vsel %vm3629, %v3609, 0.0
        %v3654 = vadd.f32 %v3652, %v3653
        %v3655 = vsel %vm3629, %v3610, 0.0
        %v3656 = vadd.f32 %v3654, %v3655
        %v3657 = vsel %vm3629, %v3611, 0.0
        %v3658 = vadd.f32 %v3656, %v3657
        %v3659 = vsel %vm3629, %v3612, 0.0
        %v3660 = vadd.f32 %v3658, %v3659
        %v3661 = vsel %vm3629, %v3613, 0.0
        %v3662 = vadd.f32 %v3660, %v3661
        %v3663 = vsel %vm3629, %v3614, 0.0
        %v3664 = vadd.f32 %v3662, %v3663
        %v3665 = vsel %vm3629, %v3615, 0.0
        %v3666 = vadd.f32 %v3664, %v3665
        %v3667 = vsel %vm3629, %v3616, 0.0
        %v3668 = vadd.f32 %v3666, %v3667
        %v3669 = vsel %vm3629, %v3617, 0.0
        %v3670 = vadd.f32 %v3668, %v3669
        %v3671 = vsel %vm3629, %v3618, 0.0
        %v3672 = vadd.f32 %v3670, %v3671
        %v3673 = vsel %vm3629, %v3619, 0.0
        %v3674 = vadd.f32 %v3672, %v3673
        %v3675 = vsel %vm3629, %v3620, 0.0
        %v3676 = vadd.f32 %v3674, %v3675
        %v3677 = vsel %vm3629, %v3621, 0.0
        %v3678 = vadd.f32 %v3676, %v3677
        %v3679 = vsel %vm3629, %v3622, 0.0
        %v3680 = vadd.f32 %v3678, %v3679
        %v3681 = vsel %vm3629, %v3623, 0.0
        %v3682 = vadd.f32 %v3680, %v3681
        %v3683 = vsel %vm3629, %v3624, 0.0
        %v3684 = vadd.f32 %v3682, %v3683
        %v3685 = vsel %vm3629, %v3625, 0.0
        %v3686 = vadd.f32 %v3684, %v3685
        %v3687 = vsel %vm3629, %v3626, 0.0
        %v3688 = vadd.f32 %v3686, %v3687
        %v3689 = vsel %vm3629, %v3627, 0.0
        %v3690 = vadd.f32 %v3688, %v3689
        %v3691 = vsel %vm3629, %v3628, 0.0
        %v3692 = vadd.f32 %v3690, %v3691
        %3693 = vadd.xlane.f32.xlu0 %v3692
        %v3694 = vpop.xlane.xlu0 %3693
        %v3695 = vrot.slane %v3694, 4
        %v3696 = vadd.f32 %v3694, %v3695
        %v3697 = vrot.slane %v3696, 2
        %v3698 = vadd.f32 %v3696, %v3697
        %v3699 = vrot.slane %v3698, 1
        %v3700 = vadd.f32 %v3698, %v3699
        %s3701 = vtos %v3700
        %v3702 = vstv %s3701
        %3703 = vst [vmem:[%s207] sm:$0xff] %v3702
        %s3704 = sand.u32 %s120, 1
        %s3705 = scalar_lea.sflag [#allocation3], %s3704
        %s3706 = sand.u32 %s120, 1
        %s3707 = smul.addr %s3706, 8
        %s3708 = scalar_lea.vmem [#allocation2], %s3707
        // Predicated region
        $region37: #{tpu_custom_call.1} parent=35 // pred_check
          %p3709 = pneg %p130
        $region38: #{tpu_custom_call.1} parent=35 // pred_check_branch
          %3711 = sbr.rel (%p3709) target = $region40
        $region39: #{tpu_custom_call.1} parent=35 // pred_region
          %s3713 = ssub.s32 128, 128
          %3714 = vsyncadd %s3705, %s3713
          %s3715 = smul.addr %s18, 128
          %s3716 = scalar_lea.hbm %s4, %s3715
          %s3718 = sshll.u32 %s3708, 4
          %s3719 = int_to_ptr.vmem [resolvable:$true] %s3718
          %3721 = dma.vmem_to_hbm [thread:$0]  %s3719, 128, %s3716, %s3705
        $region40: #{tpu_custom_call.1} parent=35 // pred_fallthru
          _
      $region36: #{tpu_custom_call.1} parent=5 // pred_fallthru
        _
      %p3722 = scmp.le.s32.totalorder 2, %s13
      // Predicated region
      $region41: #{tpu_custom_call.1} parent=5 // pred_check
        %p3723 = pneg %p3722
      $region42: #{tpu_custom_call.1} parent=5 // pred_check_branch
        %3725 = sbr.rel (%p3723) target = $region44
      $region43: #{tpu_custom_call.1} parent=5 // pred_region
        %s3726 = ssub.s32 %s13, 2
        // Predicated region
        $region45: #{tpu_custom_call.1} parent=43 // pred_check
          %p3727 = pneg %p136
        $region46: #{tpu_custom_call.1} parent=43 // pred_check_branch
          %3729 = sbr.rel (%p3727) target = $region48
        $region47: #{tpu_custom_call.1} parent=43 // pred_region
          %s3730 = sand.u32 %s121, 1
          %s3731 = scalar_lea.sflag [#allocation3], %s3730
          %s3732 = sand.u32 %s121, 1
          %s3733 = smul.addr %s3732, 8
          %s3734 = scalar_lea.vmem [#allocation2], %s3733
          %3735 = dma.done %s3731, 128
        $region48: #{tpu_custom_call.1} parent=43 // pred_fallthru
          _
      $region44: #{tpu_custom_call.1} parent=5 // pred_fallthru
        _
    $region6: #{tpu_custom_call.1} parent=1 // loop_footer
      %s17 = sadd.s32 1, %s13
    $region7: #{tpu_custom_call.1} parent=1 // loop_footer_branch
      %12 = sbr.rel target = $region3
    $region8: #{tpu_custom_call.1} parent=1 // loop_exit
      _
    %3736 = vsyncpa [#allocation3], 1
    %s3737 = scalar_lea.sflag [#allocation3], 1
    %3738 = vsyncpa %s3737, 1

</llo_original>
